<compile_context>
chip_gen: v7x
topology: tpu7x:2x2x1
jax: 0.10.0
libtpu: 0.0.40
codegen_flags: <defaults>
</compile_context>

<pallas_src>
import functools

import jax
import jax.numpy as jnp
from jax import lax
from jax.experimental import pallas as pl
from jax.experimental.pallas import tpu as pltpu


_NSUB = 8  # images per register-resident inner tile (= one f32 sublane tile)


def _basic_block_kernel(x_ref, w1_ref, b1_ref, w2_ref, b2_ref, mask_ref,
                        out_ref, *, W):
    # x_ref:    (Cin, gb, NSUB, HW)   channel-major image slab (VMEM)
    # w*_ref:   (Cout*9*Cin,) f32     BN-folded tap weights in SMEM,
    #                                 flat index = (co*9 + k)*Cin + ci
    # b*_ref:   (Cout,) f32           BN-folded per-channel biases in SMEM
    # mask_ref: (9, HW) f32           per-tap zero-padding masks (1 / 0)
    # out_ref:  (Cout, gb, NSUB, HW)
    Cin, gb, nsub, HW = x_ref.shape
    Cout = out_ref.shape[0]

    masks = mask_ref[...]                     # (9, HW), stays vreg-resident

    def conv3x3(chans, w_ref, b_ref, cin):
        # chans: list of `cin` (nsub, HW) f32 arrays.
        # Returns Cout arrays (nsub, HW) = conv3x3(x)*bn_scale + bn_bias.
        acc = [jnp.full((nsub, HW), b_ref[co], jnp.float32)
               for co in range(Cout)]
        for k in range(9):                    # static 3x3 tap loop
            dy, dx = k // 3 - 1, k % 3 - 1
            delta = dy * W + dx
            if delta == 0:
                taps = chans                  # center tap: no shift, no mask
            else:
                shift = (-delta) % HW
                m = masks[k:k + 1, :]         # (1, HW), bcast over sublanes
                taps = [pltpu.roll(c, shift, axis=1) * m for c in chans]
            for ci in range(cin):
                t = taps[ci]
                for co in range(Cout):        # scalar-splat FMAs on the VPU
                    acc[co] = acc[co] + w_ref[(co * 9 + k) * cin + ci] * t
        return acc

    def body(j, carry):
        x = [x_ref[c, j].astype(jnp.float32) for c in range(Cin)]  # (nsub,HW)
        h1 = [jnp.maximum(a, 0.0) for a in conv3x3(x, w1_ref, b1_ref, Cin)]
        h2 = conv3x3(h1, w2_ref, b2_ref, Cout)
        for co in range(Cout):
            out_ref[co, j] = jnp.maximum(h2[co] + x[co],
                                         0.0).astype(out_ref.dtype)
        return carry

    lax.fori_loop(0, gb, body, 0)


def basic_block_forward(x_nchw, w1, g1, be1, m1, v1, w2, g2, be2, m2, v2,
                        eps=1e-5, images_per_block=256):
    """x_nchw: (N, C, H, W); w*: (Cout, Cin, 3, 3); BN params: (Cout,)."""
    N, Cin, H, W = x_nchw.shape
    Cout = w1.shape[0]
    assert Cin == Cout, "identity residual path requires inplanes == planes"
    HW = H * W

    # Fold BatchNorm (eval, running stats): bn(conv(x, w)) == conv(x, w*s) + b.
    s1 = (g1 / jnp.sqrt(v1 + eps)).astype(jnp.float32)
    s2 = (g2 / jnp.sqrt(v2 + eps)).astype(jnp.float32)
    b1 = (be1 - m1 * s1).astype(jnp.float32)
    b2 = (be2 - m2 * s2).astype(jnp.float32)
    w1f = (w1 * s1[:, None, None, None]).astype(jnp.float32)
    w2f = (w2 * s2[:, None, None, None]).astype(jnp.float32)
    # (Cout, Cin, 3, 3) -> flat (Cout*9*Cin,) with index (co*9 + k)*Cin + ci.
    w1v = jnp.transpose(w1f, (0, 2, 3, 1)).reshape(-1)
    w2v = jnp.transpose(w2f, (0, 2, 3, 1)).reshape(-1)

    # Per-tap zero-padding masks over the flattened H*W lane axis.
    yy, xx = jnp.meshgrid(jnp.arange(H), jnp.arange(W), indexing="ij")
    yy = yy.reshape(1, HW)
    xx = xx.reshape(1, HW)
    rows = []
    for k in range(9):
        dy, dx = k // 3 - 1, k % 3 - 1
        valid = ((yy + dy >= 0) & (yy + dy < H) &
                 (xx + dx >= 0) & (xx + dx < W))
        rows.append(valid.astype(jnp.float32))
    masks = jnp.concatenate(rows, axis=0)                          # (9, HW)

    # Grid sizing: ~images_per_block images per step (amortize per-step
    # overhead), >= 2 steps when N >= 2 (v7x megacore), image count padded up
    # instead of shrinking the block for awkward N.
    n_groups = pl.cdiv(N, _NSUB)
    gbt = max(1, images_per_block // _NSUB)
    steps = 1 if N <= 1 else max(2, pl.cdiv(n_groups, gbt))
    gb = pl.cdiv(n_groups, steps)
    G = steps * gb
    n_pad = G * _NSUB

    # Channel-major, image-padded layout (Cin, G, NSUB, HW).
    x_cmaj = jnp.transpose(x_nchw.reshape(N, Cin, HW), (1, 0, 2))
    if n_pad != N:
        x_cmaj = jnp.pad(x_cmaj, ((0, 0), (0, n_pad - N), (0, 0)))
    x_cmaj = x_cmaj.reshape(Cin, G, _NSUB, HW)

    kernel = functools.partial(_basic_block_kernel, W=W)
    smem = pl.BlockSpec(memory_space=pltpu.MemorySpace.SMEM)
    out_cmaj = pl.pallas_call(
        kernel,
        out_shape=jax.ShapeDtypeStruct((Cout, G, _NSUB, HW), x_nchw.dtype),
        grid=(steps,),
        in_specs=[
            pl.BlockSpec((Cin, gb, _NSUB, HW), lambda i: (0, i, 0, 0)),
            smem, smem, smem, smem,
            pl.BlockSpec((9, HW), lambda i: (0, 0)),   # grid-invariant masks
        ],
        out_specs=pl.BlockSpec((Cout, gb, _NSUB, HW), lambda i: (0, i, 0, 0)),
        compiler_params=pltpu.CompilerParams(
            dimension_semantics=("parallel",),
            vmem_limit_bytes=32 * 1024 * 1024),
    )(x_cmaj, w1v, b1, w2v, b2, masks)

    out = out_cmaj.reshape(Cout, n_pad, HW)[:, :N, :]
    return jnp.transpose(out, (1, 0, 2)).reshape(N, Cout, H, W)


# ----------------------- pure-JAX reference (for checking) ------------------
def _ref_forward(x, w1, g1, be1, m1, v1, w2, g2, be2, m2, v2, eps=1e-5):
    def conv3x3(x, w):
        return lax.conv_general_dilated(
            x, w, window_strides=(1, 1), padding=((1, 1), (1, 1)),
            dimension_numbers=("NCHW", "OIHW", "NCHW"))

    def bn(x, g, b, m, v):
        inv = g / jnp.sqrt(v + eps)
        return x * inv[None, :, None, None] + (b - m * inv)[None, :, None, None]

    out = jax.nn.relu(bn(conv3x3(x, w1), g1, be1, m1, v1))
    out = bn(conv3x3(out, w2), g2, be2, m2, v2)
    return jax.nn.relu(out + x)


if __name__ == "__main__":
    N, C, H, W = 2, 4, 16, 16  # inplanes = planes = 4, stride = 1
    key = jax.random.PRNGKey(0)
    ks = jax.random.split(key, 9)

    x = jax.random.normal(ks[0], (N, C, H, W), jnp.float32)
    w1 = jax.random.normal(ks[1], (C, C, 3, 3), jnp.float32) * 0.2
    w2 = jax.random.normal(ks[2], (C, C, 3, 3), jnp.float32) * 0.2
    g1 = 1.0 + 0.1 * jax.random.normal(ks[3], (C,), jnp.float32)
    be1 = 0.1 * jax.random.normal(ks[4], (C,), jnp.float32)
    m1 = 0.1 * jax.random.normal(ks[5], (C,), jnp.float32)
    v1 = jnp.abs(jax.random.normal(ks[6], (C,), jnp.float32)) + 0.5
    g2 = 1.0 + 0.1 * jax.random.normal(ks[7], (C,), jnp.float32)
    be2 = 0.1 * jax.random.normal(ks[8], (C,), jnp.float32)
    m2 = jnp.zeros((C,), jnp.float32)
    v2 = jnp.ones((C,), jnp.float32)

    fwd = jax.jit(basic_block_forward)
    out = jax.block_until_ready(
        fwd(x, w1, g1, be1, m1, v1, w2, g2, be2, m2, v2))

    ref = _ref_forward(x, w1, g1, be1, m1, v1, w2, g2, be2, m2, v2)
    assert out.shape == (N, C, H, W)
    assert jnp.allclose(out, ref, rtol=1e-4, atol=1e-4), "mismatch vs reference"

    print("KERNEL_OK")
</pallas_src>

<mosaic_0001>
module attributes {stable_mosaic.version = 11 : i64} {
  func.func @_basic_block_kernel(%arg0: i32, %arg1: memref<4x1x8x256xf32, #tpu.memory_space<vmem>>, %arg2: memref<144xf32, #tpu.memory_space<smem>>, %arg3: memref<4xf32, #tpu.memory_space<smem>>, %arg4: memref<144xf32, #tpu.memory_space<smem>>, %arg5: memref<4xf32, #tpu.memory_space<smem>>, %arg6: memref<9x256xf32, #tpu.memory_space<vmem>>, %arg7: memref<4x1x8x256xf32, #tpu.memory_space<vmem>>) attributes {dimension_semantics = [#tpu.dimension_semantics<parallel>], iteration_bounds = array<i64: 2>, scalar_prefetch = 0 : i64, scratch_operands = 0 : i64, tpu.core_type = #tpu.core_type<tc>, window_params = [{transform_indices = @transform_0, window_bounds = array<i64: 4, 1, 8, 256>}, {transform_indices = @transform_1, window_bounds = array<i64: 144>}, {transform_indices = @transform_2, window_bounds = array<i64: 4>}, {transform_indices = @transform_3, window_bounds = array<i64: 144>}, {transform_indices = @transform_4, window_bounds = array<i64: 4>}, {pipeline_mode = #tpu.pipeline_mode<synchronous>, transform_indices = @transform_5, window_bounds = array<i64: 9, 256>}, {transform_indices = @transform_6, window_bounds = array<i64: 4, 1, 8, 256>}]} {
    %c0 = arith.constant 0 : index
    %c0_0 = arith.constant 0 : index
    %0 = vector.load %arg6[%c0, %c0_0] : memref<9x256xf32, #tpu.memory_space<vmem>>, vector<9x256xf32>
    %c0_i32 = arith.constant 0 : i32
    %c0_1 = arith.constant 0 : index
    %1 = arith.index_cast %c0_i32 : i32 to index
    %c0_2 = arith.constant 0 : index
    %c0_3 = arith.constant 0 : index
    %2 = vector.load %arg1[%c0_1, %1, %c0_2, %c0_3] : memref<4x1x8x256xf32, #tpu.memory_space<vmem>>, vector<1x1x8x256xf32>
    %3 = vector.shape_cast %2 : vector<1x1x8x256xf32> to vector<8x256xf32>
    %c1 = arith.constant 1 : index
    %4 = arith.index_cast %c0_i32 : i32 to index
    %c0_4 = arith.constant 0 : index
    %c0_5 = arith.constant 0 : index
    %5 = vector.load %arg1[%c1, %4, %c0_4, %c0_5] : memref<4x1x8x256xf32, #tpu.memory_space<vmem>>, vector<1x1x8x256xf32>
    %6 = vector.shape_cast %5 : vector<1x1x8x256xf32> to vector<8x256xf32>
    %c2 = arith.constant 2 : index
    %7 = arith.index_cast %c0_i32 : i32 to index
    %c0_6 = arith.constant 0 : index
    %c0_7 = arith.constant 0 : index
    %8 = vector.load %arg1[%c2, %7, %c0_6, %c0_7] : memref<4x1x8x256xf32, #tpu.memory_space<vmem>>, vector<1x1x8x256xf32>
    %9 = vector.shape_cast %8 : vector<1x1x8x256xf32> to vector<8x256xf32>
    %c3 = arith.constant 3 : index
    %10 = arith.index_cast %c0_i32 : i32 to index
    %c0_8 = arith.constant 0 : index
    %c0_9 = arith.constant 0 : index
    %11 = vector.load %arg1[%c3, %10, %c0_8, %c0_9] : memref<4x1x8x256xf32, #tpu.memory_space<vmem>>, vector<1x1x8x256xf32>
    %12 = vector.shape_cast %11 : vector<1x1x8x256xf32> to vector<8x256xf32>
    %c0_10 = arith.constant 0 : index
    %13 = memref.load %arg3[%c0_10] : memref<4xf32, #tpu.memory_space<smem>>
    %14 = vector.broadcast %13 : f32 to vector<8x256xf32>
    %c1_11 = arith.constant 1 : index
    %15 = memref.load %arg3[%c1_11] : memref<4xf32, #tpu.memory_space<smem>>
    %16 = vector.broadcast %15 : f32 to vector<8x256xf32>
    %c2_12 = arith.constant 2 : index
    %17 = memref.load %arg3[%c2_12] : memref<4xf32, #tpu.memory_space<smem>>
    %18 = vector.broadcast %17 : f32 to vector<8x256xf32>
    %c3_13 = arith.constant 3 : index
    %19 = memref.load %arg3[%c3_13] : memref<4xf32, #tpu.memory_space<smem>>
    %20 = vector.broadcast %19 : f32 to vector<8x256xf32>
    %21 = vector.extract_strided_slice %0 {offsets = [0, 0], sizes = [1, 256], strides = [1, 1]} : vector<9x256xf32> to vector<1x256xf32>
    %c17_i32 = arith.constant 17 : i32
    %22 = tpu.dynamic_rotate %3 by %c17_i32 dim 1 : vector<8x256xf32>, i32 -> vector<8x256xf32>
    %23 = vector.broadcast %21 : vector<1x256xf32> to vector<8x256xf32>
    %24 = arith.mulf %22, %23 : vector<8x256xf32>
    %c17_i32_14 = arith.constant 17 : i32
    %25 = tpu.dynamic_rotate %6 by %c17_i32_14 dim 1 : vector<8x256xf32>, i32 -> vector<8x256xf32>
    %26 = vector.broadcast %21 : vector<1x256xf32> to vector<8x256xf32>
    %27 = arith.mulf %25, %26 : vector<8x256xf32>
    %c17_i32_15 = arith.constant 17 : i32
    %28 = tpu.dynamic_rotate %9 by %c17_i32_15 dim 1 : vector<8x256xf32>, i32 -> vector<8x256xf32>
    %29 = vector.broadcast %21 : vector<1x256xf32> to vector<8x256xf32>
    %30 = arith.mulf %28, %29 : vector<8x256xf32>
    %c17_i32_16 = arith.constant 17 : i32
    %31 = tpu.dynamic_rotate %12 by %c17_i32_16 dim 1 : vector<8x256xf32>, i32 -> vector<8x256xf32>
    %32 = vector.broadcast %21 : vector<1x256xf32> to vector<8x256xf32>
    %33 = arith.mulf %31, %32 : vector<8x256xf32>
    %c0_17 = arith.constant 0 : index
    %34 = memref.load %arg2[%c0_17] : memref<144xf32, #tpu.memory_space<smem>>
    %35 = vector.broadcast %34 : f32 to vector<8x256xf32>
    %36 = arith.mulf %35, %24 : vector<8x256xf32>
    %37 = arith.addf %14, %36 : vector<8x256xf32>
    %c36 = arith.constant 36 : index
    %38 = memref.load %arg2[%c36] : memref<144xf32, #tpu.memory_space<smem>>
    %39 = vector.broadcast %38 : f32 to vector<8x256xf32>
    %40 = arith.mulf %39, %24 : vector<8x256xf32>
    %41 = arith.addf %16, %40 : vector<8x256xf32>
    %c72 = arith.constant 72 : index
    %42 = memref.load %arg2[%c72] : memref<144xf32, #tpu.memory_space<smem>>
    %43 = vector.broadcast %42 : f32 to vector<8x256xf32>
    %44 = arith.mulf %43, %24 : vector<8x256xf32>
    %45 = arith.addf %18, %44 : vector<8x256xf32>
    %c108 = arith.constant 108 : index
    %46 = memref.load %arg2[%c108] : memref<144xf32, #tpu.memory_space<smem>>
    %47 = vector.broadcast %46 : f32 to vector<8x256xf32>
    %48 = arith.mulf %47, %24 : vector<8x256xf32>
    %49 = arith.addf %20, %48 : vector<8x256xf32>
    %c1_18 = arith.constant 1 : index
    %50 = memref.load %arg2[%c1_18] : memref<144xf32, #tpu.memory_space<smem>>
    %51 = vector.broadcast %50 : f32 to vector<8x256xf32>
    %52 = arith.mulf %51, %27 : vector<8x256xf32>
    %53 = arith.addf %37, %52 : vector<8x256xf32>
    %c37 = arith.constant 37 : index
    %54 = memref.load %arg2[%c37] : memref<144xf32, #tpu.memory_space<smem>>
    %55 = vector.broadcast %54 : f32 to vector<8x256xf32>
    %56 = arith.mulf %55, %27 : vector<8x256xf32>
    %57 = arith.addf %41, %56 : vector<8x256xf32>
    %c73 = arith.constant 73 : index
    %58 = memref.load %arg2[%c73] : memref<144xf32, #tpu.memory_space<smem>>
    %59 = vector.broadcast %58 : f32 to vector<8x256xf32>
    %60 = arith.mulf %59, %27 : vector<8x256xf32>
    %61 = arith.addf %45, %60 : vector<8x256xf32>
    %c109 = arith.constant 109 : index
    %62 = memref.load %arg2[%c109] : memref<144xf32, #tpu.memory_space<smem>>
    %63 = vector.broadcast %62 : f32 to vector<8x256xf32>
    %64 = arith.mulf %63, %27 : vector<8x256xf32>
    %65 = arith.addf %49, %64 : vector<8x256xf32>
    %c2_19 = arith.constant 2 : index
    %66 = memref.load %arg2[%c2_19] : memref<144xf32, #tpu.memory_space<smem>>
    %67 = vector.broadcast %66 : f32 to vector<8x256xf32>
    %68 = arith.mulf %67, %30 : vector<8x256xf32>
    %69 = arith.addf %53, %68 : vector<8x256xf32>
    %c38 = arith.constant 38 : index
    %70 = memref.load %arg2[%c38] : memref<144xf32, #tpu.memory_space<smem>>
    %71 = vector.broadcast %70 : f32 to vector<8x256xf32>
    %72 = arith.mulf %71, %30 : vector<8x256xf32>
    %73 = arith.addf %57, %72 : vector<8x256xf32>
    %c74 = arith.constant 74 : index
    %74 = memref.load %arg2[%c74] : memref<144xf32, #tpu.memory_space<smem>>
    %75 = vector.broadcast %74 : f32 to vector<8x256xf32>
    %76 = arith.mulf %75, %30 : vector<8x256xf32>
    %77 = arith.addf %61, %76 : vector<8x256xf32>
    %c110 = arith.constant 110 : index
    %78 = memref.load %arg2[%c110] : memref<144xf32, #tpu.memory_space<smem>>
    %79 = vector.broadcast %78 : f32 to vector<8x256xf32>
    %80 = arith.mulf %79, %30 : vector<8x256xf32>
    %81 = arith.addf %65, %80 : vector<8x256xf32>
    %c3_20 = arith.constant 3 : index
    %82 = memref.load %arg2[%c3_20] : memref<144xf32, #tpu.memory_space<smem>>
    %83 = vector.broadcast %82 : f32 to vector<8x256xf32>
    %84 = arith.mulf %83, %33 : vector<8x256xf32>
    %85 = arith.addf %69, %84 : vector<8x256xf32>
    %c39 = arith.constant 39 : index
    %86 = memref.load %arg2[%c39] : memref<144xf32, #tpu.memory_space<smem>>
    %87 = vector.broadcast %86 : f32 to vector<8x256xf32>
    %88 = arith.mulf %87, %33 : vector<8x256xf32>
    %89 = arith.addf %73, %88 : vector<8x256xf32>
    %c75 = arith.constant 75 : index
    %90 = memref.load %arg2[%c75] : memref<144xf32, #tpu.memory_space<smem>>
    %91 = vector.broadcast %90 : f32 to vector<8x256xf32>
    %92 = arith.mulf %91, %33 : vector<8x256xf32>
    %93 = arith.addf %77, %92 : vector<8x256xf32>
    %c111 = arith.constant 111 : index
    %94 = memref.load %arg2[%c111] : memref<144xf32, #tpu.memory_space<smem>>
    %95 = vector.broadcast %94 : f32 to vector<8x256xf32>
    %96 = arith.mulf %95, %33 : vector<8x256xf32>
    %97 = arith.addf %81, %96 : vector<8x256xf32>
    %98 = vector.extract_strided_slice %0 {offsets = [1, 0], sizes = [1, 256], strides = [1, 1]} : vector<9x256xf32> to vector<1x256xf32>
    %c16_i32 = arith.constant 16 : i32
    %99 = tpu.dynamic_rotate %3 by %c16_i32 dim 1 : vector<8x256xf32>, i32 -> vector<8x256xf32>
    %100 = vector.broadcast %98 : vector<1x256xf32> to vector<8x256xf32>
    %101 = arith.mulf %99, %100 : vector<8x256xf32>
    %c16_i32_21 = arith.constant 16 : i32
    %102 = tpu.dynamic_rotate %6 by %c16_i32_21 dim 1 : vector<8x256xf32>, i32 -> vector<8x256xf32>
    %103 = vector.broadcast %98 : vector<1x256xf32> to vector<8x256xf32>
    %104 = arith.mulf %102, %103 : vector<8x256xf32>
    %c16_i32_22 = arith.constant 16 : i32
    %105 = tpu.dynamic_rotate %9 by %c16_i32_22 dim 1 : vector<8x256xf32>, i32 -> vector<8x256xf32>
    %106 = vector.broadcast %98 : vector<1x256xf32> to vector<8x256xf32>
    %107 = arith.mulf %105, %106 : vector<8x256xf32>
    %c16_i32_23 = arith.constant 16 : i32
    %108 = tpu.dynamic_rotate %12 by %c16_i32_23 dim 1 : vector<8x256xf32>, i32 -> vector<8x256xf32>
    %109 = vector.broadcast %98 : vector<1x256xf32> to vector<8x256xf32>
    %110 = arith.mulf %108, %109 : vector<8x256xf32>
    %c4 = arith.constant 4 : index
    %111 = memref.load %arg2[%c4] : memref<144xf32, #tpu.memory_space<smem>>
    %112 = vector.broadcast %111 : f32 to vector<8x256xf32>
    %113 = arith.mulf %112, %101 : vector<8x256xf32>
    %114 = arith.addf %85, %113 : vector<8x256xf32>
    %c40 = arith.constant 40 : index
    %115 = memref.load %arg2[%c40] : memref<144xf32, #tpu.memory_space<smem>>
    %116 = vector.broadcast %115 : f32 to vector<8x256xf32>
    %117 = arith.mulf %116, %101 : vector<8x256xf32>
    %118 = arith.addf %89, %117 : vector<8x256xf32>
    %c76 = arith.constant 76 : index
    %119 = memref.load %arg2[%c76] : memref<144xf32, #tpu.memory_space<smem>>
    %120 = vector.broadcast %119 : f32 to vector<8x256xf32>
    %121 = arith.mulf %120, %101 : vector<8x256xf32>
    %122 = arith.addf %93, %121 : vector<8x256xf32>
    %c112 = arith.constant 112 : index
    %123 = memref.load %arg2[%c112] : memref<144xf32, #tpu.memory_space<smem>>
    %124 = vector.broadcast %123 : f32 to vector<8x256xf32>
    %125 = arith.mulf %124, %101 : vector<8x256xf32>
    %126 = arith.addf %97, %125 : vector<8x256xf32>
    %c5 = arith.constant 5 : index
    %127 = memref.load %arg2[%c5] : memref<144xf32, #tpu.memory_space<smem>>
    %128 = vector.broadcast %127 : f32 to vector<8x256xf32>
    %129 = arith.mulf %128, %104 : vector<8x256xf32>
    %130 = arith.addf %114, %129 : vector<8x256xf32>
    %c41 = arith.constant 41 : index
    %131 = memref.load %arg2[%c41] : memref<144xf32, #tpu.memory_space<smem>>
    %132 = vector.broadcast %131 : f32 to vector<8x256xf32>
    %133 = arith.mulf %132, %104 : vector<8x256xf32>
    %134 = arith.addf %118, %133 : vector<8x256xf32>
    %c77 = arith.constant 77 : index
    %135 = memref.load %arg2[%c77] : memref<144xf32, #tpu.memory_space<smem>>
    %136 = vector.broadcast %135 : f32 to vector<8x256xf32>
    %137 = arith.mulf %136, %104 : vector<8x256xf32>
    %138 = arith.addf %122, %137 : vector<8x256xf32>
    %c113 = arith.constant 113 : index
    %139 = memref.load %arg2[%c113] : memref<144xf32, #tpu.memory_space<smem>>
    %140 = vector.broadcast %139 : f32 to vector<8x256xf32>
    %141 = arith.mulf %140, %104 : vector<8x256xf32>
    %142 = arith.addf %126, %141 : vector<8x256xf32>
    %c6 = arith.constant 6 : index
    %143 = memref.load %arg2[%c6] : memref<144xf32, #tpu.memory_space<smem>>
    %144 = vector.broadcast %143 : f32 to vector<8x256xf32>
    %145 = arith.mulf %144, %107 : vector<8x256xf32>
    %146 = arith.addf %130, %145 : vector<8x256xf32>
    %c42 = arith.constant 42 : index
    %147 = memref.load %arg2[%c42] : memref<144xf32, #tpu.memory_space<smem>>
    %148 = vector.broadcast %147 : f32 to vector<8x256xf32>
    %149 = arith.mulf %148, %107 : vector<8x256xf32>
    %150 = arith.addf %134, %149 : vector<8x256xf32>
    %c78 = arith.constant 78 : index
    %151 = memref.load %arg2[%c78] : memref<144xf32, #tpu.memory_space<smem>>
    %152 = vector.broadcast %151 : f32 to vector<8x256xf32>
    %153 = arith.mulf %152, %107 : vector<8x256xf32>
    %154 = arith.addf %138, %153 : vector<8x256xf32>
    %c114 = arith.constant 114 : index
    %155 = memref.load %arg2[%c114] : memref<144xf32, #tpu.memory_space<smem>>
    %156 = vector.broadcast %155 : f32 to vector<8x256xf32>
    %157 = arith.mulf %156, %107 : vector<8x256xf32>
    %158 = arith.addf %142, %157 : vector<8x256xf32>
    %c7 = arith.constant 7 : index
    %159 = memref.load %arg2[%c7] : memref<144xf32, #tpu.memory_space<smem>>
    %160 = vector.broadcast %159 : f32 to vector<8x256xf32>
    %161 = arith.mulf %160, %110 : vector<8x256xf32>
    %162 = arith.addf %146, %161 : vector<8x256xf32>
    %c43 = arith.constant 43 : index
    %163 = memref.load %arg2[%c43] : memref<144xf32, #tpu.memory_space<smem>>
    %164 = vector.broadcast %163 : f32 to vector<8x256xf32>
    %165 = arith.mulf %164, %110 : vector<8x256xf32>
    %166 = arith.addf %150, %165 : vector<8x256xf32>
    %c79 = arith.constant 79 : index
    %167 = memref.load %arg2[%c79] : memref<144xf32, #tpu.memory_space<smem>>
    %168 = vector.broadcast %167 : f32 to vector<8x256xf32>
    %169 = arith.mulf %168, %110 : vector<8x256xf32>
    %170 = arith.addf %154, %169 : vector<8x256xf32>
    %c115 = arith.constant 115 : index
    %171 = memref.load %arg2[%c115] : memref<144xf32, #tpu.memory_space<smem>>
    %172 = vector.broadcast %171 : f32 to vector<8x256xf32>
    %173 = arith.mulf %172, %110 : vector<8x256xf32>
    %174 = arith.addf %158, %173 : vector<8x256xf32>
    %175 = vector.extract_strided_slice %0 {offsets = [2, 0], sizes = [1, 256], strides = [1, 1]} : vector<9x256xf32> to vector<1x256xf32>
    %c15_i32 = arith.constant 15 : i32
    %176 = tpu.dynamic_rotate %3 by %c15_i32 dim 1 : vector<8x256xf32>, i32 -> vector<8x256xf32>
    %177 = vector.broadcast %175 : vector<1x256xf32> to vector<8x256xf32>
    %178 = arith.mulf %176, %177 : vector<8x256xf32>
    %c15_i32_24 = arith.constant 15 : i32
    %179 = tpu.dynamic_rotate %6 by %c15_i32_24 dim 1 : vector<8x256xf32>, i32 -> vector<8x256xf32>
    %180 = vector.broadcast %175 : vector<1x256xf32> to vector<8x256xf32>
    %181 = arith.mulf %179, %180 : vector<8x256xf32>
    %c15_i32_25 = arith.constant 15 : i32
    %182 = tpu.dynamic_rotate %9 by %c15_i32_25 dim 1 : vector<8x256xf32>, i32 -> vector<8x256xf32>
    %183 = vector.broadcast %175 : vector<1x256xf32> to vector<8x256xf32>
    %184 = arith.mulf %182, %183 : vector<8x256xf32>
    %c15_i32_26 = arith.constant 15 : i32
    %185 = tpu.dynamic_rotate %12 by %c15_i32_26 dim 1 : vector<8x256xf32>, i32 -> vector<8x256xf32>
    %186 = vector.broadcast %175 : vector<1x256xf32> to vector<8x256xf32>
    %187 = arith.mulf %185, %186 : vector<8x256xf32>
    %c8 = arith.constant 8 : index
    %188 = memref.load %arg2[%c8] : memref<144xf32, #tpu.memory_space<smem>>
    %189 = vector.broadcast %188 : f32 to vector<8x256xf32>
    %190 = arith.mulf %189, %178 : vector<8x256xf32>
    %191 = arith.addf %162, %190 : vector<8x256xf32>
    %c44 = arith.constant 44 : index
    %192 = memref.load %arg2[%c44] : memref<144xf32, #tpu.memory_space<smem>>
    %193 = vector.broadcast %192 : f32 to vector<8x256xf32>
    %194 = arith.mulf %193, %178 : vector<8x256xf32>
    %195 = arith.addf %166, %194 : vector<8x256xf32>
    %c80 = arith.constant 80 : index
    %196 = memref.load %arg2[%c80] : memref<144xf32, #tpu.memory_space<smem>>
    %197 = vector.broadcast %196 : f32 to vector<8x256xf32>
    %198 = arith.mulf %197, %178 : vector<8x256xf32>
    %199 = arith.addf %170, %198 : vector<8x256xf32>
    %c116 = arith.constant 116 : index
    %200 = memref.load %arg2[%c116] : memref<144xf32, #tpu.memory_space<smem>>
    %201 = vector.broadcast %200 : f32 to vector<8x256xf32>
    %202 = arith.mulf %201, %178 : vector<8x256xf32>
    %203 = arith.addf %174, %202 : vector<8x256xf32>
    %c9 = arith.constant 9 : index
    %204 = memref.load %arg2[%c9] : memref<144xf32, #tpu.memory_space<smem>>
    %205 = vector.broadcast %204 : f32 to vector<8x256xf32>
    %206 = arith.mulf %205, %181 : vector<8x256xf32>
    %207 = arith.addf %191, %206 : vector<8x256xf32>
    %c45 = arith.constant 45 : index
    %208 = memref.load %arg2[%c45] : memref<144xf32, #tpu.memory_space<smem>>
    %209 = vector.broadcast %208 : f32 to vector<8x256xf32>
    %210 = arith.mulf %209, %181 : vector<8x256xf32>
    %211 = arith.addf %195, %210 : vector<8x256xf32>
    %c81 = arith.constant 81 : index
    %212 = memref.load %arg2[%c81] : memref<144xf32, #tpu.memory_space<smem>>
    %213 = vector.broadcast %212 : f32 to vector<8x256xf32>
    %214 = arith.mulf %213, %181 : vector<8x256xf32>
    %215 = arith.addf %199, %214 : vector<8x256xf32>
    %c117 = arith.constant 117 : index
    %216 = memref.load %arg2[%c117] : memref<144xf32, #tpu.memory_space<smem>>
    %217 = vector.broadcast %216 : f32 to vector<8x256xf32>
    %218 = arith.mulf %217, %181 : vector<8x256xf32>
    %219 = arith.addf %203, %218 : vector<8x256xf32>
    %c10 = arith.constant 10 : index
    %220 = memref.load %arg2[%c10] : memref<144xf32, #tpu.memory_space<smem>>
    %221 = vector.broadcast %220 : f32 to vector<8x256xf32>
    %222 = arith.mulf %221, %184 : vector<8x256xf32>
    %223 = arith.addf %207, %222 : vector<8x256xf32>
    %c46 = arith.constant 46 : index
    %224 = memref.load %arg2[%c46] : memref<144xf32, #tpu.memory_space<smem>>
    %225 = vector.broadcast %224 : f32 to vector<8x256xf32>
    %226 = arith.mulf %225, %184 : vector<8x256xf32>
    %227 = arith.addf %211, %226 : vector<8x256xf32>
    %c82 = arith.constant 82 : index
    %228 = memref.load %arg2[%c82] : memref<144xf32, #tpu.memory_space<smem>>
    %229 = vector.broadcast %228 : f32 to vector<8x256xf32>
    %230 = arith.mulf %229, %184 : vector<8x256xf32>
    %231 = arith.addf %215, %230 : vector<8x256xf32>
    %c118 = arith.constant 118 : index
    %232 = memref.load %arg2[%c118] : memref<144xf32, #tpu.memory_space<smem>>
    %233 = vector.broadcast %232 : f32 to vector<8x256xf32>
    %234 = arith.mulf %233, %184 : vector<8x256xf32>
    %235 = arith.addf %219, %234 : vector<8x256xf32>
    %c11 = arith.constant 11 : index
    %236 = memref.load %arg2[%c11] : memref<144xf32, #tpu.memory_space<smem>>
    %237 = vector.broadcast %236 : f32 to vector<8x256xf32>
    %238 = arith.mulf %237, %187 : vector<8x256xf32>
    %239 = arith.addf %223, %238 : vector<8x256xf32>
    %c47 = arith.constant 47 : index
    %240 = memref.load %arg2[%c47] : memref<144xf32, #tpu.memory_space<smem>>
    %241 = vector.broadcast %240 : f32 to vector<8x256xf32>
    %242 = arith.mulf %241, %187 : vector<8x256xf32>
    %243 = arith.addf %227, %242 : vector<8x256xf32>
    %c83 = arith.constant 83 : index
    %244 = memref.load %arg2[%c83] : memref<144xf32, #tpu.memory_space<smem>>
    %245 = vector.broadcast %244 : f32 to vector<8x256xf32>
    %246 = arith.mulf %245, %187 : vector<8x256xf32>
    %247 = arith.addf %231, %246 : vector<8x256xf32>
    %c119 = arith.constant 119 : index
    %248 = memref.load %arg2[%c119] : memref<144xf32, #tpu.memory_space<smem>>
    %249 = vector.broadcast %248 : f32 to vector<8x256xf32>
    %250 = arith.mulf %249, %187 : vector<8x256xf32>
    %251 = arith.addf %235, %250 : vector<8x256xf32>
    %252 = vector.extract_strided_slice %0 {offsets = [3, 0], sizes = [1, 256], strides = [1, 1]} : vector<9x256xf32> to vector<1x256xf32>
    %c1_i32 = arith.constant 1 : i32
    %253 = tpu.dynamic_rotate %3 by %c1_i32 dim 1 : vector<8x256xf32>, i32 -> vector<8x256xf32>
    %254 = vector.broadcast %252 : vector<1x256xf32> to vector<8x256xf32>
    %255 = arith.mulf %253, %254 : vector<8x256xf32>
    %c1_i32_27 = arith.constant 1 : i32
    %256 = tpu.dynamic_rotate %6 by %c1_i32_27 dim 1 : vector<8x256xf32>, i32 -> vector<8x256xf32>
    %257 = vector.broadcast %252 : vector<1x256xf32> to vector<8x256xf32>
    %258 = arith.mulf %256, %257 : vector<8x256xf32>
    %c1_i32_28 = arith.constant 1 : i32
    %259 = tpu.dynamic_rotate %9 by %c1_i32_28 dim 1 : vector<8x256xf32>, i32 -> vector<8x256xf32>
    %260 = vector.broadcast %252 : vector<1x256xf32> to vector<8x256xf32>
    %261 = arith.mulf %259, %260 : vector<8x256xf32>
    %c1_i32_29 = arith.constant 1 : i32
    %262 = tpu.dynamic_rotate %12 by %c1_i32_29 dim 1 : vector<8x256xf32>, i32 -> vector<8x256xf32>
    %263 = vector.broadcast %252 : vector<1x256xf32> to vector<8x256xf32>
    %264 = arith.mulf %262, %263 : vector<8x256xf32>
    %c12 = arith.constant 12 : index
    %265 = memref.load %arg2[%c12] : memref<144xf32, #tpu.memory_space<smem>>
    %266 = vector.broadcast %265 : f32 to vector<8x256xf32>
    %267 = arith.mulf %266, %255 : vector<8x256xf32>
    %268 = arith.addf %239, %267 : vector<8x256xf32>
    %c48 = arith.constant 48 : index
    %269 = memref.load %arg2[%c48] : memref<144xf32, #tpu.memory_space<smem>>
    %270 = vector.broadcast %269 : f32 to vector<8x256xf32>
    %271 = arith.mulf %270, %255 : vector<8x256xf32>
    %272 = arith.addf %243, %271 : vector<8x256xf32>
    %c84 = arith.constant 84 : index
    %273 = memref.load %arg2[%c84] : memref<144xf32, #tpu.memory_space<smem>>
    %274 = vector.broadcast %273 : f32 to vector<8x256xf32>
    %275 = arith.mulf %274, %255 : vector<8x256xf32>
    %276 = arith.addf %247, %275 : vector<8x256xf32>
    %c120 = arith.constant 120 : index
    %277 = memref.load %arg2[%c120] : memref<144xf32, #tpu.memory_space<smem>>
    %278 = vector.broadcast %277 : f32 to vector<8x256xf32>
    %279 = arith.mulf %278, %255 : vector<8x256xf32>
    %280 = arith.addf %251, %279 : vector<8x256xf32>
    %c13 = arith.constant 13 : index
    %281 = memref.load %arg2[%c13] : memref<144xf32, #tpu.memory_space<smem>>
    %282 = vector.broadcast %281 : f32 to vector<8x256xf32>
    %283 = arith.mulf %282, %258 : vector<8x256xf32>
    %284 = arith.addf %268, %283 : vector<8x256xf32>
    %c49 = arith.constant 49 : index
    %285 = memref.load %arg2[%c49] : memref<144xf32, #tpu.memory_space<smem>>
    %286 = vector.broadcast %285 : f32 to vector<8x256xf32>
    %287 = arith.mulf %286, %258 : vector<8x256xf32>
    %288 = arith.addf %272, %287 : vector<8x256xf32>
    %c85 = arith.constant 85 : index
    %289 = memref.load %arg2[%c85] : memref<144xf32, #tpu.memory_space<smem>>
    %290 = vector.broadcast %289 : f32 to vector<8x256xf32>
    %291 = arith.mulf %290, %258 : vector<8x256xf32>
    %292 = arith.addf %276, %291 : vector<8x256xf32>
    %c121 = arith.constant 121 : index
    %293 = memref.load %arg2[%c121] : memref<144xf32, #tpu.memory_space<smem>>
    %294 = vector.broadcast %293 : f32 to vector<8x256xf32>
    %295 = arith.mulf %294, %258 : vector<8x256xf32>
    %296 = arith.addf %280, %295 : vector<8x256xf32>
    %c14 = arith.constant 14 : index
    %297 = memref.load %arg2[%c14] : memref<144xf32, #tpu.memory_space<smem>>
    %298 = vector.broadcast %297 : f32 to vector<8x256xf32>
    %299 = arith.mulf %298, %261 : vector<8x256xf32>
    %300 = arith.addf %284, %299 : vector<8x256xf32>
    %c50 = arith.constant 50 : index
    %301 = memref.load %arg2[%c50] : memref<144xf32, #tpu.memory_space<smem>>
    %302 = vector.broadcast %301 : f32 to vector<8x256xf32>
    %303 = arith.mulf %302, %261 : vector<8x256xf32>
    %304 = arith.addf %288, %303 : vector<8x256xf32>
    %c86 = arith.constant 86 : index
    %305 = memref.load %arg2[%c86] : memref<144xf32, #tpu.memory_space<smem>>
    %306 = vector.broadcast %305 : f32 to vector<8x256xf32>
    %307 = arith.mulf %306, %261 : vector<8x256xf32>
    %308 = arith.addf %292, %307 : vector<8x256xf32>
    %c122 = arith.constant 122 : index
    %309 = memref.load %arg2[%c122] : memref<144xf32, #tpu.memory_space<smem>>
    %310 = vector.broadcast %309 : f32 to vector<8x256xf32>
    %311 = arith.mulf %310, %261 : vector<8x256xf32>
    %312 = arith.addf %296, %311 : vector<8x256xf32>
    %c15 = arith.constant 15 : index
    %313 = memref.load %arg2[%c15] : memref<144xf32, #tpu.memory_space<smem>>
    %314 = vector.broadcast %313 : f32 to vector<8x256xf32>
    %315 = arith.mulf %314, %264 : vector<8x256xf32>
    %316 = arith.addf %300, %315 : vector<8x256xf32>
    %c51 = arith.constant 51 : index
    %317 = memref.load %arg2[%c51] : memref<144xf32, #tpu.memory_space<smem>>
    %318 = vector.broadcast %317 : f32 to vector<8x256xf32>
    %319 = arith.mulf %318, %264 : vector<8x256xf32>
    %320 = arith.addf %304, %319 : vector<8x256xf32>
    %c87 = arith.constant 87 : index
    %321 = memref.load %arg2[%c87] : memref<144xf32, #tpu.memory_space<smem>>
    %322 = vector.broadcast %321 : f32 to vector<8x256xf32>
    %323 = arith.mulf %322, %264 : vector<8x256xf32>
    %324 = arith.addf %308, %323 : vector<8x256xf32>
    %c123 = arith.constant 123 : index
    %325 = memref.load %arg2[%c123] : memref<144xf32, #tpu.memory_space<smem>>
    %326 = vector.broadcast %325 : f32 to vector<8x256xf32>
    %327 = arith.mulf %326, %264 : vector<8x256xf32>
    %328 = arith.addf %312, %327 : vector<8x256xf32>
    %c16 = arith.constant 16 : index
    %329 = memref.load %arg2[%c16] : memref<144xf32, #tpu.memory_space<smem>>
    %330 = vector.broadcast %329 : f32 to vector<8x256xf32>
    %331 = arith.mulf %330, %3 : vector<8x256xf32>
    %332 = arith.addf %316, %331 : vector<8x256xf32>
    %c52 = arith.constant 52 : index
    %333 = memref.load %arg2[%c52] : memref<144xf32, #tpu.memory_space<smem>>
    %334 = vector.broadcast %333 : f32 to vector<8x256xf32>
    %335 = arith.mulf %334, %3 : vector<8x256xf32>
    %336 = arith.addf %320, %335 : vector<8x256xf32>
    %c88 = arith.constant 88 : index
    %337 = memref.load %arg2[%c88] : memref<144xf32, #tpu.memory_space<smem>>
    %338 = vector.broadcast %337 : f32 to vector<8x256xf32>
    %339 = arith.mulf %338, %3 : vector<8x256xf32>
    %340 = arith.addf %324, %339 : vector<8x256xf32>
    %c124 = arith.constant 124 : index
    %341 = memref.load %arg2[%c124] : memref<144xf32, #tpu.memory_space<smem>>
    %342 = vector.broadcast %341 : f32 to vector<8x256xf32>
    %343 = arith.mulf %342, %3 : vector<8x256xf32>
    %344 = arith.addf %328, %343 : vector<8x256xf32>
    %c17 = arith.constant 17 : index
    %345 = memref.load %arg2[%c17] : memref<144xf32, #tpu.memory_space<smem>>
    %346 = vector.broadcast %345 : f32 to vector<8x256xf32>
    %347 = arith.mulf %346, %6 : vector<8x256xf32>
    %348 = arith.addf %332, %347 : vector<8x256xf32>
    %c53 = arith.constant 53 : index
    %349 = memref.load %arg2[%c53] : memref<144xf32, #tpu.memory_space<smem>>
    %350 = vector.broadcast %349 : f32 to vector<8x256xf32>
    %351 = arith.mulf %350, %6 : vector<8x256xf32>
    %352 = arith.addf %336, %351 : vector<8x256xf32>
    %c89 = arith.constant 89 : index
    %353 = memref.load %arg2[%c89] : memref<144xf32, #tpu.memory_space<smem>>
    %354 = vector.broadcast %353 : f32 to vector<8x256xf32>
    %355 = arith.mulf %354, %6 : vector<8x256xf32>
    %356 = arith.addf %340, %355 : vector<8x256xf32>
    %c125 = arith.constant 125 : index
    %357 = memref.load %arg2[%c125] : memref<144xf32, #tpu.memory_space<smem>>
    %358 = vector.broadcast %357 : f32 to vector<8x256xf32>
    %359 = arith.mulf %358, %6 : vector<8x256xf32>
    %360 = arith.addf %344, %359 : vector<8x256xf32>
    %c18 = arith.constant 18 : index
    %361 = memref.load %arg2[%c18] : memref<144xf32, #tpu.memory_space<smem>>
    %362 = vector.broadcast %361 : f32 to vector<8x256xf32>
    %363 = arith.mulf %362, %9 : vector<8x256xf32>
    %364 = arith.addf %348, %363 : vector<8x256xf32>
    %c54 = arith.constant 54 : index
    %365 = memref.load %arg2[%c54] : memref<144xf32, #tpu.memory_space<smem>>
    %366 = vector.broadcast %365 : f32 to vector<8x256xf32>
    %367 = arith.mulf %366, %9 : vector<8x256xf32>
    %368 = arith.addf %352, %367 : vector<8x256xf32>
    %c90 = arith.constant 90 : index
    %369 = memref.load %arg2[%c90] : memref<144xf32, #tpu.memory_space<smem>>
    %370 = vector.broadcast %369 : f32 to vector<8x256xf32>
    %371 = arith.mulf %370, %9 : vector<8x256xf32>
    %372 = arith.addf %356, %371 : vector<8x256xf32>
    %c126 = arith.constant 126 : index
    %373 = memref.load %arg2[%c126] : memref<144xf32, #tpu.memory_space<smem>>
    %374 = vector.broadcast %373 : f32 to vector<8x256xf32>
    %375 = arith.mulf %374, %9 : vector<8x256xf32>
    %376 = arith.addf %360, %375 : vector<8x256xf32>
    %c19 = arith.constant 19 : index
    %377 = memref.load %arg2[%c19] : memref<144xf32, #tpu.memory_space<smem>>
    %378 = vector.broadcast %377 : f32 to vector<8x256xf32>
    %379 = arith.mulf %378, %12 : vector<8x256xf32>
    %380 = arith.addf %364, %379 : vector<8x256xf32>
    %c55 = arith.constant 55 : index
    %381 = memref.load %arg2[%c55] : memref<144xf32, #tpu.memory_space<smem>>
    %382 = vector.broadcast %381 : f32 to vector<8x256xf32>
    %383 = arith.mulf %382, %12 : vector<8x256xf32>
    %384 = arith.addf %368, %383 : vector<8x256xf32>
    %c91 = arith.constant 91 : index
    %385 = memref.load %arg2[%c91] : memref<144xf32, #tpu.memory_space<smem>>
    %386 = vector.broadcast %385 : f32 to vector<8x256xf32>
    %387 = arith.mulf %386, %12 : vector<8x256xf32>
    %388 = arith.addf %372, %387 : vector<8x256xf32>
    %c127 = arith.constant 127 : index
    %389 = memref.load %arg2[%c127] : memref<144xf32, #tpu.memory_space<smem>>
    %390 = vector.broadcast %389 : f32 to vector<8x256xf32>
    %391 = arith.mulf %390, %12 : vector<8x256xf32>
    %392 = arith.addf %376, %391 : vector<8x256xf32>
    %393 = vector.extract_strided_slice %0 {offsets = [5, 0], sizes = [1, 256], strides = [1, 1]} : vector<9x256xf32> to vector<1x256xf32>
    %c255_i32 = arith.constant 255 : i32
    %394 = tpu.dynamic_rotate %3 by %c255_i32 dim 1 : vector<8x256xf32>, i32 -> vector<8x256xf32>
    %395 = vector.broadcast %393 : vector<1x256xf32> to vector<8x256xf32>
    %396 = arith.mulf %394, %395 : vector<8x256xf32>
    %c255_i32_30 = arith.constant 255 : i32
    %397 = tpu.dynamic_rotate %6 by %c255_i32_30 dim 1 : vector<8x256xf32>, i32 -> vector<8x256xf32>
    %398 = vector.broadcast %393 : vector<1x256xf32> to vector<8x256xf32>
    %399 = arith.mulf %397, %398 : vector<8x256xf32>
    %c255_i32_31 = arith.constant 255 : i32
    %400 = tpu.dynamic_rotate %9 by %c255_i32_31 dim 1 : vector<8x256xf32>, i32 -> vector<8x256xf32>
    %401 = vector.broadcast %393 : vector<1x256xf32> to vector<8x256xf32>
    %402 = arith.mulf %400, %401 : vector<8x256xf32>
    %c255_i32_32 = arith.constant 255 : i32
    %403 = tpu.dynamic_rotate %12 by %c255_i32_32 dim 1 : vector<8x256xf32>, i32 -> vector<8x256xf32>
    %404 = vector.broadcast %393 : vector<1x256xf32> to vector<8x256xf32>
    %405 = arith.mulf %403, %404 : vector<8x256xf32>
    %c20 = arith.constant 20 : index
    %406 = memref.load %arg2[%c20] : memref<144xf32, #tpu.memory_space<smem>>
    %407 = vector.broadcast %406 : f32 to vector<8x256xf32>
    %408 = arith.mulf %407, %396 : vector<8x256xf32>
    %409 = arith.addf %380, %408 : vector<8x256xf32>
    %c56 = arith.constant 56 : index
    %410 = memref.load %arg2[%c56] : memref<144xf32, #tpu.memory_space<smem>>
    %411 = vector.broadcast %410 : f32 to vector<8x256xf32>
    %412 = arith.mulf %411, %396 : vector<8x256xf32>
    %413 = arith.addf %384, %412 : vector<8x256xf32>
    %c92 = arith.constant 92 : index
    %414 = memref.load %arg2[%c92] : memref<144xf32, #tpu.memory_space<smem>>
    %415 = vector.broadcast %414 : f32 to vector<8x256xf32>
    %416 = arith.mulf %415, %396 : vector<8x256xf32>
    %417 = arith.addf %388, %416 : vector<8x256xf32>
    %c128 = arith.constant 128 : index
    %418 = memref.load %arg2[%c128] : memref<144xf32, #tpu.memory_space<smem>>
    %419 = vector.broadcast %418 : f32 to vector<8x256xf32>
    %420 = arith.mulf %419, %396 : vector<8x256xf32>
    %421 = arith.addf %392, %420 : vector<8x256xf32>
    %c21 = arith.constant 21 : index
    %422 = memref.load %arg2[%c21] : memref<144xf32, #tpu.memory_space<smem>>
    %423 = vector.broadcast %422 : f32 to vector<8x256xf32>
    %424 = arith.mulf %423, %399 : vector<8x256xf32>
    %425 = arith.addf %409, %424 : vector<8x256xf32>
    %c57 = arith.constant 57 : index
    %426 = memref.load %arg2[%c57] : memref<144xf32, #tpu.memory_space<smem>>
    %427 = vector.broadcast %426 : f32 to vector<8x256xf32>
    %428 = arith.mulf %427, %399 : vector<8x256xf32>
    %429 = arith.addf %413, %428 : vector<8x256xf32>
    %c93 = arith.constant 93 : index
    %430 = memref.load %arg2[%c93] : memref<144xf32, #tpu.memory_space<smem>>
    %431 = vector.broadcast %430 : f32 to vector<8x256xf32>
    %432 = arith.mulf %431, %399 : vector<8x256xf32>
    %433 = arith.addf %417, %432 : vector<8x256xf32>
    %c129 = arith.constant 129 : index
    %434 = memref.load %arg2[%c129] : memref<144xf32, #tpu.memory_space<smem>>
    %435 = vector.broadcast %434 : f32 to vector<8x256xf32>
    %436 = arith.mulf %435, %399 : vector<8x256xf32>
    %437 = arith.addf %421, %436 : vector<8x256xf32>
    %c22 = arith.constant 22 : index
    %438 = memref.load %arg2[%c22] : memref<144xf32, #tpu.memory_space<smem>>
    %439 = vector.broadcast %438 : f32 to vector<8x256xf32>
    %440 = arith.mulf %439, %402 : vector<8x256xf32>
    %441 = arith.addf %425, %440 : vector<8x256xf32>
    %c58 = arith.constant 58 : index
    %442 = memref.load %arg2[%c58] : memref<144xf32, #tpu.memory_space<smem>>
    %443 = vector.broadcast %442 : f32 to vector<8x256xf32>
    %444 = arith.mulf %443, %402 : vector<8x256xf32>
    %445 = arith.addf %429, %444 : vector<8x256xf32>
    %c94 = arith.constant 94 : index
    %446 = memref.load %arg2[%c94] : memref<144xf32, #tpu.memory_space<smem>>
    %447 = vector.broadcast %446 : f32 to vector<8x256xf32>
    %448 = arith.mulf %447, %402 : vector<8x256xf32>
    %449 = arith.addf %433, %448 : vector<8x256xf32>
    %c130 = arith.constant 130 : index
    %450 = memref.load %arg2[%c130] : memref<144xf32, #tpu.memory_space<smem>>
    %451 = vector.broadcast %450 : f32 to vector<8x256xf32>
    %452 = arith.mulf %451, %402 : vector<8x256xf32>
    %453 = arith.addf %437, %452 : vector<8x256xf32>
    %c23 = arith.constant 23 : index
    %454 = memref.load %arg2[%c23] : memref<144xf32, #tpu.memory_space<smem>>
    %455 = vector.broadcast %454 : f32 to vector<8x256xf32>
    %456 = arith.mulf %455, %405 : vector<8x256xf32>
    %457 = arith.addf %441, %456 : vector<8x256xf32>
    %c59 = arith.constant 59 : index
    %458 = memref.load %arg2[%c59] : memref<144xf32, #tpu.memory_space<smem>>
    %459 = vector.broadcast %458 : f32 to vector<8x256xf32>
    %460 = arith.mulf %459, %405 : vector<8x256xf32>
    %461 = arith.addf %445, %460 : vector<8x256xf32>
    %c95 = arith.constant 95 : index
    %462 = memref.load %arg2[%c95] : memref<144xf32, #tpu.memory_space<smem>>
    %463 = vector.broadcast %462 : f32 to vector<8x256xf32>
    %464 = arith.mulf %463, %405 : vector<8x256xf32>
    %465 = arith.addf %449, %464 : vector<8x256xf32>
    %c131 = arith.constant 131 : index
    %466 = memref.load %arg2[%c131] : memref<144xf32, #tpu.memory_space<smem>>
    %467 = vector.broadcast %466 : f32 to vector<8x256xf32>
    %468 = arith.mulf %467, %405 : vector<8x256xf32>
    %469 = arith.addf %453, %468 : vector<8x256xf32>
    %470 = vector.extract_strided_slice %0 {offsets = [6, 0], sizes = [1, 256], strides = [1, 1]} : vector<9x256xf32> to vector<1x256xf32>
    %c241_i32 = arith.constant 241 : i32
    %471 = tpu.dynamic_rotate %3 by %c241_i32 dim 1 : vector<8x256xf32>, i32 -> vector<8x256xf32>
    %472 = vector.broadcast %470 : vector<1x256xf32> to vector<8x256xf32>
    %473 = arith.mulf %471, %472 : vector<8x256xf32>
    %c241_i32_33 = arith.constant 241 : i32
    %474 = tpu.dynamic_rotate %6 by %c241_i32_33 dim 1 : vector<8x256xf32>, i32 -> vector<8x256xf32>
    %475 = vector.broadcast %470 : vector<1x256xf32> to vector<8x256xf32>
    %476 = arith.mulf %474, %475 : vector<8x256xf32>
    %c241_i32_34 = arith.constant 241 : i32
    %477 = tpu.dynamic_rotate %9 by %c241_i32_34 dim 1 : vector<8x256xf32>, i32 -> vector<8x256xf32>
    %478 = vector.broadcast %470 : vector<1x256xf32> to vector<8x256xf32>
    %479 = arith.mulf %477, %478 : vector<8x256xf32>
    %c241_i32_35 = arith.constant 241 : i32
    %480 = tpu.dynamic_rotate %12 by %c241_i32_35 dim 1 : vector<8x256xf32>, i32 -> vector<8x256xf32>
    %481 = vector.broadcast %470 : vector<1x256xf32> to vector<8x256xf32>
    %482 = arith.mulf %480, %481 : vector<8x256xf32>
    %c24 = arith.constant 24 : index
    %483 = memref.load %arg2[%c24] : memref<144xf32, #tpu.memory_space<smem>>
    %484 = vector.broadcast %483 : f32 to vector<8x256xf32>
    %485 = arith.mulf %484, %473 : vector<8x256xf32>
    %486 = arith.addf %457, %485 : vector<8x256xf32>
    %c60 = arith.constant 60 : index
    %487 = memref.load %arg2[%c60] : memref<144xf32, #tpu.memory_space<smem>>
    %488 = vector.broadcast %487 : f32 to vector<8x256xf32>
    %489 = arith.mulf %488, %473 : vector<8x256xf32>
    %490 = arith.addf %461, %489 : vector<8x256xf32>
    %c96 = arith.constant 96 : index
    %491 = memref.load %arg2[%c96] : memref<144xf32, #tpu.memory_space<smem>>
    %492 = vector.broadcast %491 : f32 to vector<8x256xf32>
    %493 = arith.mulf %492, %473 : vector<8x256xf32>
    %494 = arith.addf %465, %493 : vector<8x256xf32>
    %c132 = arith.constant 132 : index
    %495 = memref.load %arg2[%c132] : memref<144xf32, #tpu.memory_space<smem>>
    %496 = vector.broadcast %495 : f32 to vector<8x256xf32>
    %497 = arith.mulf %496, %473 : vector<8x256xf32>
    %498 = arith.addf %469, %497 : vector<8x256xf32>
    %c25 = arith.constant 25 : index
    %499 = memref.load %arg2[%c25] : memref<144xf32, #tpu.memory_space<smem>>
    %500 = vector.broadcast %499 : f32 to vector<8x256xf32>
    %501 = arith.mulf %500, %476 : vector<8x256xf32>
    %502 = arith.addf %486, %501 : vector<8x256xf32>
    %c61 = arith.constant 61 : index
    %503 = memref.load %arg2[%c61] : memref<144xf32, #tpu.memory_space<smem>>
    %504 = vector.broadcast %503 : f32 to vector<8x256xf32>
    %505 = arith.mulf %504, %476 : vector<8x256xf32>
    %506 = arith.addf %490, %505 : vector<8x256xf32>
    %c97 = arith.constant 97 : index
    %507 = memref.load %arg2[%c97] : memref<144xf32, #tpu.memory_space<smem>>
    %508 = vector.broadcast %507 : f32 to vector<8x256xf32>
    %509 = arith.mulf %508, %476 : vector<8x256xf32>
    %510 = arith.addf %494, %509 : vector<8x256xf32>
    %c133 = arith.constant 133 : index
    %511 = memref.load %arg2[%c133] : memref<144xf32, #tpu.memory_space<smem>>
    %512 = vector.broadcast %511 : f32 to vector<8x256xf32>
    %513 = arith.mulf %512, %476 : vector<8x256xf32>
    %514 = arith.addf %498, %513 : vector<8x256xf32>
    %c26 = arith.constant 26 : index
    %515 = memref.load %arg2[%c26] : memref<144xf32, #tpu.memory_space<smem>>
    %516 = vector.broadcast %515 : f32 to vector<8x256xf32>
    %517 = arith.mulf %516, %479 : vector<8x256xf32>
    %518 = arith.addf %502, %517 : vector<8x256xf32>
    %c62 = arith.constant 62 : index
    %519 = memref.load %arg2[%c62] : memref<144xf32, #tpu.memory_space<smem>>
    %520 = vector.broadcast %519 : f32 to vector<8x256xf32>
    %521 = arith.mulf %520, %479 : vector<8x256xf32>
    %522 = arith.addf %506, %521 : vector<8x256xf32>
    %c98 = arith.constant 98 : index
    %523 = memref.load %arg2[%c98] : memref<144xf32, #tpu.memory_space<smem>>
    %524 = vector.broadcast %523 : f32 to vector<8x256xf32>
    %525 = arith.mulf %524, %479 : vector<8x256xf32>
    %526 = arith.addf %510, %525 : vector<8x256xf32>
    %c134 = arith.constant 134 : index
    %527 = memref.load %arg2[%c134] : memref<144xf32, #tpu.memory_space<smem>>
    %528 = vector.broadcast %527 : f32 to vector<8x256xf32>
    %529 = arith.mulf %528, %479 : vector<8x256xf32>
    %530 = arith.addf %514, %529 : vector<8x256xf32>
    %c27 = arith.constant 27 : index
    %531 = memref.load %arg2[%c27] : memref<144xf32, #tpu.memory_space<smem>>
    %532 = vector.broadcast %531 : f32 to vector<8x256xf32>
    %533 = arith.mulf %532, %482 : vector<8x256xf32>
    %534 = arith.addf %518, %533 : vector<8x256xf32>
    %c63 = arith.constant 63 : index
    %535 = memref.load %arg2[%c63] : memref<144xf32, #tpu.memory_space<smem>>
    %536 = vector.broadcast %535 : f32 to vector<8x256xf32>
    %537 = arith.mulf %536, %482 : vector<8x256xf32>
    %538 = arith.addf %522, %537 : vector<8x256xf32>
    %c99 = arith.constant 99 : index
    %539 = memref.load %arg2[%c99] : memref<144xf32, #tpu.memory_space<smem>>
    %540 = vector.broadcast %539 : f32 to vector<8x256xf32>
    %541 = arith.mulf %540, %482 : vector<8x256xf32>
    %542 = arith.addf %526, %541 : vector<8x256xf32>
    %c135 = arith.constant 135 : index
    %543 = memref.load %arg2[%c135] : memref<144xf32, #tpu.memory_space<smem>>
    %544 = vector.broadcast %543 : f32 to vector<8x256xf32>
    %545 = arith.mulf %544, %482 : vector<8x256xf32>
    %546 = arith.addf %530, %545 : vector<8x256xf32>
    %547 = vector.extract_strided_slice %0 {offsets = [7, 0], sizes = [1, 256], strides = [1, 1]} : vector<9x256xf32> to vector<1x256xf32>
    %c240_i32 = arith.constant 240 : i32
    %548 = tpu.dynamic_rotate %3 by %c240_i32 dim 1 : vector<8x256xf32>, i32 -> vector<8x256xf32>
    %549 = vector.broadcast %547 : vector<1x256xf32> to vector<8x256xf32>
    %550 = arith.mulf %548, %549 : vector<8x256xf32>
    %c240_i32_36 = arith.constant 240 : i32
    %551 = tpu.dynamic_rotate %6 by %c240_i32_36 dim 1 : vector<8x256xf32>, i32 -> vector<8x256xf32>
    %552 = vector.broadcast %547 : vector<1x256xf32> to vector<8x256xf32>
    %553 = arith.mulf %551, %552 : vector<8x256xf32>
    %c240_i32_37 = arith.constant 240 : i32
    %554 = tpu.dynamic_rotate %9 by %c240_i32_37 dim 1 : vector<8x256xf32>, i32 -> vector<8x256xf32>
    %555 = vector.broadcast %547 : vector<1x256xf32> to vector<8x256xf32>
    %556 = arith.mulf %554, %555 : vector<8x256xf32>
    %c240_i32_38 = arith.constant 240 : i32
    %557 = tpu.dynamic_rotate %12 by %c240_i32_38 dim 1 : vector<8x256xf32>, i32 -> vector<8x256xf32>
    %558 = vector.broadcast %547 : vector<1x256xf32> to vector<8x256xf32>
    %559 = arith.mulf %557, %558 : vector<8x256xf32>
    %c28 = arith.constant 28 : index
    %560 = memref.load %arg2[%c28] : memref<144xf32, #tpu.memory_space<smem>>
    %561 = vector.broadcast %560 : f32 to vector<8x256xf32>
    %562 = arith.mulf %561, %550 : vector<8x256xf32>
    %563 = arith.addf %534, %562 : vector<8x256xf32>
    %c64 = arith.constant 64 : index
    %564 = memref.load %arg2[%c64] : memref<144xf32, #tpu.memory_space<smem>>
    %565 = vector.broadcast %564 : f32 to vector<8x256xf32>
    %566 = arith.mulf %565, %550 : vector<8x256xf32>
    %567 = arith.addf %538, %566 : vector<8x256xf32>
    %c100 = arith.constant 100 : index
    %568 = memref.load %arg2[%c100] : memref<144xf32, #tpu.memory_space<smem>>
    %569 = vector.broadcast %568 : f32 to vector<8x256xf32>
    %570 = arith.mulf %569, %550 : vector<8x256xf32>
    %571 = arith.addf %542, %570 : vector<8x256xf32>
    %c136 = arith.constant 136 : index
    %572 = memref.load %arg2[%c136] : memref<144xf32, #tpu.memory_space<smem>>
    %573 = vector.broadcast %572 : f32 to vector<8x256xf32>
    %574 = arith.mulf %573, %550 : vector<8x256xf32>
    %575 = arith.addf %546, %574 : vector<8x256xf32>
    %c29 = arith.constant 29 : index
    %576 = memref.load %arg2[%c29] : memref<144xf32, #tpu.memory_space<smem>>
    %577 = vector.broadcast %576 : f32 to vector<8x256xf32>
    %578 = arith.mulf %577, %553 : vector<8x256xf32>
    %579 = arith.addf %563, %578 : vector<8x256xf32>
    %c65 = arith.constant 65 : index
    %580 = memref.load %arg2[%c65] : memref<144xf32, #tpu.memory_space<smem>>
    %581 = vector.broadcast %580 : f32 to vector<8x256xf32>
    %582 = arith.mulf %581, %553 : vector<8x256xf32>
    %583 = arith.addf %567, %582 : vector<8x256xf32>
    %c101 = arith.constant 101 : index
    %584 = memref.load %arg2[%c101] : memref<144xf32, #tpu.memory_space<smem>>
    %585 = vector.broadcast %584 : f32 to vector<8x256xf32>
    %586 = arith.mulf %585, %553 : vector<8x256xf32>
    %587 = arith.addf %571, %586 : vector<8x256xf32>
    %c137 = arith.constant 137 : index
    %588 = memref.load %arg2[%c137] : memref<144xf32, #tpu.memory_space<smem>>
    %589 = vector.broadcast %588 : f32 to vector<8x256xf32>
    %590 = arith.mulf %589, %553 : vector<8x256xf32>
    %591 = arith.addf %575, %590 : vector<8x256xf32>
    %c30 = arith.constant 30 : index
    %592 = memref.load %arg2[%c30] : memref<144xf32, #tpu.memory_space<smem>>
    %593 = vector.broadcast %592 : f32 to vector<8x256xf32>
    %594 = arith.mulf %593, %556 : vector<8x256xf32>
    %595 = arith.addf %579, %594 : vector<8x256xf32>
    %c66 = arith.constant 66 : index
    %596 = memref.load %arg2[%c66] : memref<144xf32, #tpu.memory_space<smem>>
    %597 = vector.broadcast %596 : f32 to vector<8x256xf32>
    %598 = arith.mulf %597, %556 : vector<8x256xf32>
    %599 = arith.addf %583, %598 : vector<8x256xf32>
    %c102 = arith.constant 102 : index
    %600 = memref.load %arg2[%c102] : memref<144xf32, #tpu.memory_space<smem>>
    %601 = vector.broadcast %600 : f32 to vector<8x256xf32>
    %602 = arith.mulf %601, %556 : vector<8x256xf32>
    %603 = arith.addf %587, %602 : vector<8x256xf32>
    %c138 = arith.constant 138 : index
    %604 = memref.load %arg2[%c138] : memref<144xf32, #tpu.memory_space<smem>>
    %605 = vector.broadcast %604 : f32 to vector<8x256xf32>
    %606 = arith.mulf %605, %556 : vector<8x256xf32>
    %607 = arith.addf %591, %606 : vector<8x256xf32>
    %c31 = arith.constant 31 : index
    %608 = memref.load %arg2[%c31] : memref<144xf32, #tpu.memory_space<smem>>
    %609 = vector.broadcast %608 : f32 to vector<8x256xf32>
    %610 = arith.mulf %609, %559 : vector<8x256xf32>
    %611 = arith.addf %595, %610 : vector<8x256xf32>
    %c67 = arith.constant 67 : index
    %612 = memref.load %arg2[%c67] : memref<144xf32, #tpu.memory_space<smem>>
    %613 = vector.broadcast %612 : f32 to vector<8x256xf32>
    %614 = arith.mulf %613, %559 : vector<8x256xf32>
    %615 = arith.addf %599, %614 : vector<8x256xf32>
    %c103 = arith.constant 103 : index
    %616 = memref.load %arg2[%c103] : memref<144xf32, #tpu.memory_space<smem>>
    %617 = vector.broadcast %616 : f32 to vector<8x256xf32>
    %618 = arith.mulf %617, %559 : vector<8x256xf32>
    %619 = arith.addf %603, %618 : vector<8x256xf32>
    %c139 = arith.constant 139 : index
    %620 = memref.load %arg2[%c139] : memref<144xf32, #tpu.memory_space<smem>>
    %621 = vector.broadcast %620 : f32 to vector<8x256xf32>
    %622 = arith.mulf %621, %559 : vector<8x256xf32>
    %623 = arith.addf %607, %622 : vector<8x256xf32>
    %624 = vector.extract_strided_slice %0 {offsets = [8, 0], sizes = [1, 256], strides = [1, 1]} : vector<9x256xf32> to vector<1x256xf32>
    %c239_i32 = arith.constant 239 : i32
    %625 = tpu.dynamic_rotate %3 by %c239_i32 dim 1 : vector<8x256xf32>, i32 -> vector<8x256xf32>
    %626 = vector.broadcast %624 : vector<1x256xf32> to vector<8x256xf32>
    %627 = arith.mulf %625, %626 : vector<8x256xf32>
    %c239_i32_39 = arith.constant 239 : i32
    %628 = tpu.dynamic_rotate %6 by %c239_i32_39 dim 1 : vector<8x256xf32>, i32 -> vector<8x256xf32>
    %629 = vector.broadcast %624 : vector<1x256xf32> to vector<8x256xf32>
    %630 = arith.mulf %628, %629 : vector<8x256xf32>
    %c239_i32_40 = arith.constant 239 : i32
    %631 = tpu.dynamic_rotate %9 by %c239_i32_40 dim 1 : vector<8x256xf32>, i32 -> vector<8x256xf32>
    %632 = vector.broadcast %624 : vector<1x256xf32> to vector<8x256xf32>
    %633 = arith.mulf %631, %632 : vector<8x256xf32>
    %c239_i32_41 = arith.constant 239 : i32
    %634 = tpu.dynamic_rotate %12 by %c239_i32_41 dim 1 : vector<8x256xf32>, i32 -> vector<8x256xf32>
    %635 = vector.broadcast %624 : vector<1x256xf32> to vector<8x256xf32>
    %636 = arith.mulf %634, %635 : vector<8x256xf32>
    %c32 = arith.constant 32 : index
    %637 = memref.load %arg2[%c32] : memref<144xf32, #tpu.memory_space<smem>>
    %638 = vector.broadcast %637 : f32 to vector<8x256xf32>
    %639 = arith.mulf %638, %627 : vector<8x256xf32>
    %640 = arith.addf %611, %639 : vector<8x256xf32>
    %c68 = arith.constant 68 : index
    %641 = memref.load %arg2[%c68] : memref<144xf32, #tpu.memory_space<smem>>
    %642 = vector.broadcast %641 : f32 to vector<8x256xf32>
    %643 = arith.mulf %642, %627 : vector<8x256xf32>
    %644 = arith.addf %615, %643 : vector<8x256xf32>
    %c104 = arith.constant 104 : index
    %645 = memref.load %arg2[%c104] : memref<144xf32, #tpu.memory_space<smem>>
    %646 = vector.broadcast %645 : f32 to vector<8x256xf32>
    %647 = arith.mulf %646, %627 : vector<8x256xf32>
    %648 = arith.addf %619, %647 : vector<8x256xf32>
    %c140 = arith.constant 140 : index
    %649 = memref.load %arg2[%c140] : memref<144xf32, #tpu.memory_space<smem>>
    %650 = vector.broadcast %649 : f32 to vector<8x256xf32>
    %651 = arith.mulf %650, %627 : vector<8x256xf32>
    %652 = arith.addf %623, %651 : vector<8x256xf32>
    %c33 = arith.constant 33 : index
    %653 = memref.load %arg2[%c33] : memref<144xf32, #tpu.memory_space<smem>>
    %654 = vector.broadcast %653 : f32 to vector<8x256xf32>
    %655 = arith.mulf %654, %630 : vector<8x256xf32>
    %656 = arith.addf %640, %655 : vector<8x256xf32>
    %c69 = arith.constant 69 : index
    %657 = memref.load %arg2[%c69] : memref<144xf32, #tpu.memory_space<smem>>
    %658 = vector.broadcast %657 : f32 to vector<8x256xf32>
    %659 = arith.mulf %658, %630 : vector<8x256xf32>
    %660 = arith.addf %644, %659 : vector<8x256xf32>
    %c105 = arith.constant 105 : index
    %661 = memref.load %arg2[%c105] : memref<144xf32, #tpu.memory_space<smem>>
    %662 = vector.broadcast %661 : f32 to vector<8x256xf32>
    %663 = arith.mulf %662, %630 : vector<8x256xf32>
    %664 = arith.addf %648, %663 : vector<8x256xf32>
    %c141 = arith.constant 141 : index
    %665 = memref.load %arg2[%c141] : memref<144xf32, #tpu.memory_space<smem>>
    %666 = vector.broadcast %665 : f32 to vector<8x256xf32>
    %667 = arith.mulf %666, %630 : vector<8x256xf32>
    %668 = arith.addf %652, %667 : vector<8x256xf32>
    %c34 = arith.constant 34 : index
    %669 = memref.load %arg2[%c34] : memref<144xf32, #tpu.memory_space<smem>>
    %670 = vector.broadcast %669 : f32 to vector<8x256xf32>
    %671 = arith.mulf %670, %633 : vector<8x256xf32>
    %672 = arith.addf %656, %671 : vector<8x256xf32>
    %c70 = arith.constant 70 : index
    %673 = memref.load %arg2[%c70] : memref<144xf32, #tpu.memory_space<smem>>
    %674 = vector.broadcast %673 : f32 to vector<8x256xf32>
    %675 = arith.mulf %674, %633 : vector<8x256xf32>
    %676 = arith.addf %660, %675 : vector<8x256xf32>
    %c106 = arith.constant 106 : index
    %677 = memref.load %arg2[%c106] : memref<144xf32, #tpu.memory_space<smem>>
    %678 = vector.broadcast %677 : f32 to vector<8x256xf32>
    %679 = arith.mulf %678, %633 : vector<8x256xf32>
    %680 = arith.addf %664, %679 : vector<8x256xf32>
    %c142 = arith.constant 142 : index
    %681 = memref.load %arg2[%c142] : memref<144xf32, #tpu.memory_space<smem>>
    %682 = vector.broadcast %681 : f32 to vector<8x256xf32>
    %683 = arith.mulf %682, %633 : vector<8x256xf32>
    %684 = arith.addf %668, %683 : vector<8x256xf32>
    %c35 = arith.constant 35 : index
    %685 = memref.load %arg2[%c35] : memref<144xf32, #tpu.memory_space<smem>>
    %686 = vector.broadcast %685 : f32 to vector<8x256xf32>
    %687 = arith.mulf %686, %636 : vector<8x256xf32>
    %688 = arith.addf %672, %687 : vector<8x256xf32>
    %c71 = arith.constant 71 : index
    %689 = memref.load %arg2[%c71] : memref<144xf32, #tpu.memory_space<smem>>
    %690 = vector.broadcast %689 : f32 to vector<8x256xf32>
    %691 = arith.mulf %690, %636 : vector<8x256xf32>
    %692 = arith.addf %676, %691 : vector<8x256xf32>
    %c107 = arith.constant 107 : index
    %693 = memref.load %arg2[%c107] : memref<144xf32, #tpu.memory_space<smem>>
    %694 = vector.broadcast %693 : f32 to vector<8x256xf32>
    %695 = arith.mulf %694, %636 : vector<8x256xf32>
    %696 = arith.addf %680, %695 : vector<8x256xf32>
    %c143 = arith.constant 143 : index
    %697 = memref.load %arg2[%c143] : memref<144xf32, #tpu.memory_space<smem>>
    %698 = vector.broadcast %697 : f32 to vector<8x256xf32>
    %699 = arith.mulf %698, %636 : vector<8x256xf32>
    %700 = arith.addf %684, %699 : vector<8x256xf32>
    %cst = arith.constant 0.000000e+00 : f32
    %701 = vector.broadcast %cst : f32 to vector<8x256xf32>
    %702 = arith.maximumf %688, %701 : vector<8x256xf32>
    %cst_42 = arith.constant 0.000000e+00 : f32
    %703 = vector.broadcast %cst_42 : f32 to vector<8x256xf32>
    %704 = arith.maximumf %692, %703 : vector<8x256xf32>
    %cst_43 = arith.constant 0.000000e+00 : f32
    %705 = vector.broadcast %cst_43 : f32 to vector<8x256xf32>
    %706 = arith.maximumf %696, %705 : vector<8x256xf32>
    %cst_44 = arith.constant 0.000000e+00 : f32
    %707 = vector.broadcast %cst_44 : f32 to vector<8x256xf32>
    %708 = arith.maximumf %700, %707 : vector<8x256xf32>
    %c0_45 = arith.constant 0 : index
    %709 = memref.load %arg5[%c0_45] : memref<4xf32, #tpu.memory_space<smem>>
    %710 = vector.broadcast %709 : f32 to vector<8x256xf32>
    %c1_46 = arith.constant 1 : index
    %711 = memref.load %arg5[%c1_46] : memref<4xf32, #tpu.memory_space<smem>>
    %712 = vector.broadcast %711 : f32 to vector<8x256xf32>
    %c2_47 = arith.constant 2 : index
    %713 = memref.load %arg5[%c2_47] : memref<4xf32, #tpu.memory_space<smem>>
    %714 = vector.broadcast %713 : f32 to vector<8x256xf32>
    %c3_48 = arith.constant 3 : index
    %715 = memref.load %arg5[%c3_48] : memref<4xf32, #tpu.memory_space<smem>>
    %716 = vector.broadcast %715 : f32 to vector<8x256xf32>
    %717 = vector.extract_strided_slice %0 {offsets = [0, 0], sizes = [1, 256], strides = [1, 1]} : vector<9x256xf32> to vector<1x256xf32>
    %c17_i32_49 = arith.constant 17 : i32
    %718 = tpu.dynamic_rotate %702 by %c17_i32_49 dim 1 : vector<8x256xf32>, i32 -> vector<8x256xf32>
    %719 = vector.broadcast %717 : vector<1x256xf32> to vector<8x256xf32>
    %720 = arith.mulf %718, %719 : vector<8x256xf32>
    %c17_i32_50 = arith.constant 17 : i32
    %721 = tpu.dynamic_rotate %704 by %c17_i32_50 dim 1 : vector<8x256xf32>, i32 -> vector<8x256xf32>
    %722 = vector.broadcast %717 : vector<1x256xf32> to vector<8x256xf32>
    %723 = arith.mulf %721, %722 : vector<8x256xf32>
    %c17_i32_51 = arith.constant 17 : i32
    %724 = tpu.dynamic_rotate %706 by %c17_i32_51 dim 1 : vector<8x256xf32>, i32 -> vector<8x256xf32>
    %725 = vector.broadcast %717 : vector<1x256xf32> to vector<8x256xf32>
    %726 = arith.mulf %724, %725 : vector<8x256xf32>
    %c17_i32_52 = arith.constant 17 : i32
    %727 = tpu.dynamic_rotate %708 by %c17_i32_52 dim 1 : vector<8x256xf32>, i32 -> vector<8x256xf32>
    %728 = vector.broadcast %717 : vector<1x256xf32> to vector<8x256xf32>
    %729 = arith.mulf %727, %728 : vector<8x256xf32>
    %c0_53 = arith.constant 0 : index
    %730 = memref.load %arg4[%c0_53] : memref<144xf32, #tpu.memory_space<smem>>
    %731 = vector.broadcast %730 : f32 to vector<8x256xf32>
    %732 = arith.mulf %731, %720 : vector<8x256xf32>
    %733 = arith.addf %710, %732 : vector<8x256xf32>
    %c36_54 = arith.constant 36 : index
    %734 = memref.load %arg4[%c36_54] : memref<144xf32, #tpu.memory_space<smem>>
    %735 = vector.broadcast %734 : f32 to vector<8x256xf32>
    %736 = arith.mulf %735, %720 : vector<8x256xf32>
    %737 = arith.addf %712, %736 : vector<8x256xf32>
    %c72_55 = arith.constant 72 : index
    %738 = memref.load %arg4[%c72_55] : memref<144xf32, #tpu.memory_space<smem>>
    %739 = vector.broadcast %738 : f32 to vector<8x256xf32>
    %740 = arith.mulf %739, %720 : vector<8x256xf32>
    %741 = arith.addf %714, %740 : vector<8x256xf32>
    %c108_56 = arith.constant 108 : index
    %742 = memref.load %arg4[%c108_56] : memref<144xf32, #tpu.memory_space<smem>>
    %743 = vector.broadcast %742 : f32 to vector<8x256xf32>
    %744 = arith.mulf %743, %720 : vector<8x256xf32>
    %745 = arith.addf %716, %744 : vector<8x256xf32>
    %c1_57 = arith.constant 1 : index
    %746 = memref.load %arg4[%c1_57] : memref<144xf32, #tpu.memory_space<smem>>
    %747 = vector.broadcast %746 : f32 to vector<8x256xf32>
    %748 = arith.mulf %747, %723 : vector<8x256xf32>
    %749 = arith.addf %733, %748 : vector<8x256xf32>
    %c37_58 = arith.constant 37 : index
    %750 = memref.load %arg4[%c37_58] : memref<144xf32, #tpu.memory_space<smem>>
    %751 = vector.broadcast %750 : f32 to vector<8x256xf32>
    %752 = arith.mulf %751, %723 : vector<8x256xf32>
    %753 = arith.addf %737, %752 : vector<8x256xf32>
    %c73_59 = arith.constant 73 : index
    %754 = memref.load %arg4[%c73_59] : memref<144xf32, #tpu.memory_space<smem>>
    %755 = vector.broadcast %754 : f32 to vector<8x256xf32>
    %756 = arith.mulf %755, %723 : vector<8x256xf32>
    %757 = arith.addf %741, %756 : vector<8x256xf32>
    %c109_60 = arith.constant 109 : index
    %758 = memref.load %arg4[%c109_60] : memref<144xf32, #tpu.memory_space<smem>>
    %759 = vector.broadcast %758 : f32 to vector<8x256xf32>
    %760 = arith.mulf %759, %723 : vector<8x256xf32>
    %761 = arith.addf %745, %760 : vector<8x256xf32>
    %c2_61 = arith.constant 2 : index
    %762 = memref.load %arg4[%c2_61] : memref<144xf32, #tpu.memory_space<smem>>
    %763 = vector.broadcast %762 : f32 to vector<8x256xf32>
    %764 = arith.mulf %763, %726 : vector<8x256xf32>
    %765 = arith.addf %749, %764 : vector<8x256xf32>
    %c38_62 = arith.constant 38 : index
    %766 = memref.load %arg4[%c38_62] : memref<144xf32, #tpu.memory_space<smem>>
    %767 = vector.broadcast %766 : f32 to vector<8x256xf32>
    %768 = arith.mulf %767, %726 : vector<8x256xf32>
    %769 = arith.addf %753, %768 : vector<8x256xf32>
    %c74_63 = arith.constant 74 : index
    %770 = memref.load %arg4[%c74_63] : memref<144xf32, #tpu.memory_space<smem>>
    %771 = vector.broadcast %770 : f32 to vector<8x256xf32>
    %772 = arith.mulf %771, %726 : vector<8x256xf32>
    %773 = arith.addf %757, %772 : vector<8x256xf32>
    %c110_64 = arith.constant 110 : index
    %774 = memref.load %arg4[%c110_64] : memref<144xf32, #tpu.memory_space<smem>>
    %775 = vector.broadcast %774 : f32 to vector<8x256xf32>
    %776 = arith.mulf %775, %726 : vector<8x256xf32>
    %777 = arith.addf %761, %776 : vector<8x256xf32>
    %c3_65 = arith.constant 3 : index
    %778 = memref.load %arg4[%c3_65] : memref<144xf32, #tpu.memory_space<smem>>
    %779 = vector.broadcast %778 : f32 to vector<8x256xf32>
    %780 = arith.mulf %779, %729 : vector<8x256xf32>
    %781 = arith.addf %765, %780 : vector<8x256xf32>
    %c39_66 = arith.constant 39 : index
    %782 = memref.load %arg4[%c39_66] : memref<144xf32, #tpu.memory_space<smem>>
    %783 = vector.broadcast %782 : f32 to vector<8x256xf32>
    %784 = arith.mulf %783, %729 : vector<8x256xf32>
    %785 = arith.addf %769, %784 : vector<8x256xf32>
    %c75_67 = arith.constant 75 : index
    %786 = memref.load %arg4[%c75_67] : memref<144xf32, #tpu.memory_space<smem>>
    %787 = vector.broadcast %786 : f32 to vector<8x256xf32>
    %788 = arith.mulf %787, %729 : vector<8x256xf32>
    %789 = arith.addf %773, %788 : vector<8x256xf32>
    %c111_68 = arith.constant 111 : index
    %790 = memref.load %arg4[%c111_68] : memref<144xf32, #tpu.memory_space<smem>>
    %791 = vector.broadcast %790 : f32 to vector<8x256xf32>
    %792 = arith.mulf %791, %729 : vector<8x256xf32>
    %793 = arith.addf %777, %792 : vector<8x256xf32>
    %794 = vector.extract_strided_slice %0 {offsets = [1, 0], sizes = [1, 256], strides = [1, 1]} : vector<9x256xf32> to vector<1x256xf32>
    %c16_i32_69 = arith.constant 16 : i32
    %795 = tpu.dynamic_rotate %702 by %c16_i32_69 dim 1 : vector<8x256xf32>, i32 -> vector<8x256xf32>
    %796 = vector.broadcast %794 : vector<1x256xf32> to vector<8x256xf32>
    %797 = arith.mulf %795, %796 : vector<8x256xf32>
    %c16_i32_70 = arith.constant 16 : i32
    %798 = tpu.dynamic_rotate %704 by %c16_i32_70 dim 1 : vector<8x256xf32>, i32 -> vector<8x256xf32>
    %799 = vector.broadcast %794 : vector<1x256xf32> to vector<8x256xf32>
    %800 = arith.mulf %798, %799 : vector<8x256xf32>
    %c16_i32_71 = arith.constant 16 : i32
    %801 = tpu.dynamic_rotate %706 by %c16_i32_71 dim 1 : vector<8x256xf32>, i32 -> vector<8x256xf32>
    %802 = vector.broadcast %794 : vector<1x256xf32> to vector<8x256xf32>
    %803 = arith.mulf %801, %802 : vector<8x256xf32>
    %c16_i32_72 = arith.constant 16 : i32
    %804 = tpu.dynamic_rotate %708 by %c16_i32_72 dim 1 : vector<8x256xf32>, i32 -> vector<8x256xf32>
    %805 = vector.broadcast %794 : vector<1x256xf32> to vector<8x256xf32>
    %806 = arith.mulf %804, %805 : vector<8x256xf32>
    %c4_73 = arith.constant 4 : index
    %807 = memref.load %arg4[%c4_73] : memref<144xf32, #tpu.memory_space<smem>>
    %808 = vector.broadcast %807 : f32 to vector<8x256xf32>
    %809 = arith.mulf %808, %797 : vector<8x256xf32>
    %810 = arith.addf %781, %809 : vector<8x256xf32>
    %c40_74 = arith.constant 40 : index
    %811 = memref.load %arg4[%c40_74] : memref<144xf32, #tpu.memory_space<smem>>
    %812 = vector.broadcast %811 : f32 to vector<8x256xf32>
    %813 = arith.mulf %812, %797 : vector<8x256xf32>
    %814 = arith.addf %785, %813 : vector<8x256xf32>
    %c76_75 = arith.constant 76 : index
    %815 = memref.load %arg4[%c76_75] : memref<144xf32, #tpu.memory_space<smem>>
    %816 = vector.broadcast %815 : f32 to vector<8x256xf32>
    %817 = arith.mulf %816, %797 : vector<8x256xf32>
    %818 = arith.addf %789, %817 : vector<8x256xf32>
    %c112_76 = arith.constant 112 : index
    %819 = memref.load %arg4[%c112_76] : memref<144xf32, #tpu.memory_space<smem>>
    %820 = vector.broadcast %819 : f32 to vector<8x256xf32>
    %821 = arith.mulf %820, %797 : vector<8x256xf32>
    %822 = arith.addf %793, %821 : vector<8x256xf32>
    %c5_77 = arith.constant 5 : index
    %823 = memref.load %arg4[%c5_77] : memref<144xf32, #tpu.memory_space<smem>>
    %824 = vector.broadcast %823 : f32 to vector<8x256xf32>
    %825 = arith.mulf %824, %800 : vector<8x256xf32>
    %826 = arith.addf %810, %825 : vector<8x256xf32>
    %c41_78 = arith.constant 41 : index
    %827 = memref.load %arg4[%c41_78] : memref<144xf32, #tpu.memory_space<smem>>
    %828 = vector.broadcast %827 : f32 to vector<8x256xf32>
    %829 = arith.mulf %828, %800 : vector<8x256xf32>
    %830 = arith.addf %814, %829 : vector<8x256xf32>
    %c77_79 = arith.constant 77 : index
    %831 = memref.load %arg4[%c77_79] : memref<144xf32, #tpu.memory_space<smem>>
    %832 = vector.broadcast %831 : f32 to vector<8x256xf32>
    %833 = arith.mulf %832, %800 : vector<8x256xf32>
    %834 = arith.addf %818, %833 : vector<8x256xf32>
    %c113_80 = arith.constant 113 : index
    %835 = memref.load %arg4[%c113_80] : memref<144xf32, #tpu.memory_space<smem>>
    %836 = vector.broadcast %835 : f32 to vector<8x256xf32>
    %837 = arith.mulf %836, %800 : vector<8x256xf32>
    %838 = arith.addf %822, %837 : vector<8x256xf32>
    %c6_81 = arith.constant 6 : index
    %839 = memref.load %arg4[%c6_81] : memref<144xf32, #tpu.memory_space<smem>>
    %840 = vector.broadcast %839 : f32 to vector<8x256xf32>
    %841 = arith.mulf %840, %803 : vector<8x256xf32>
    %842 = arith.addf %826, %841 : vector<8x256xf32>
    %c42_82 = arith.constant 42 : index
    %843 = memref.load %arg4[%c42_82] : memref<144xf32, #tpu.memory_space<smem>>
    %844 = vector.broadcast %843 : f32 to vector<8x256xf32>
    %845 = arith.mulf %844, %803 : vector<8x256xf32>
    %846 = arith.addf %830, %845 : vector<8x256xf32>
    %c78_83 = arith.constant 78 : index
    %847 = memref.load %arg4[%c78_83] : memref<144xf32, #tpu.memory_space<smem>>
    %848 = vector.broadcast %847 : f32 to vector<8x256xf32>
    %849 = arith.mulf %848, %803 : vector<8x256xf32>
    %850 = arith.addf %834, %849 : vector<8x256xf32>
    %c114_84 = arith.constant 114 : index
    %851 = memref.load %arg4[%c114_84] : memref<144xf32, #tpu.memory_space<smem>>
    %852 = vector.broadcast %851 : f32 to vector<8x256xf32>
    %853 = arith.mulf %852, %803 : vector<8x256xf32>
    %854 = arith.addf %838, %853 : vector<8x256xf32>
    %c7_85 = arith.constant 7 : index
    %855 = memref.load %arg4[%c7_85] : memref<144xf32, #tpu.memory_space<smem>>
    %856 = vector.broadcast %855 : f32 to vector<8x256xf32>
    %857 = arith.mulf %856, %806 : vector<8x256xf32>
    %858 = arith.addf %842, %857 : vector<8x256xf32>
    %c43_86 = arith.constant 43 : index
    %859 = memref.load %arg4[%c43_86] : memref<144xf32, #tpu.memory_space<smem>>
    %860 = vector.broadcast %859 : f32 to vector<8x256xf32>
    %861 = arith.mulf %860, %806 : vector<8x256xf32>
    %862 = arith.addf %846, %861 : vector<8x256xf32>
    %c79_87 = arith.constant 79 : index
    %863 = memref.load %arg4[%c79_87] : memref<144xf32, #tpu.memory_space<smem>>
    %864 = vector.broadcast %863 : f32 to vector<8x256xf32>
    %865 = arith.mulf %864, %806 : vector<8x256xf32>
    %866 = arith.addf %850, %865 : vector<8x256xf32>
    %c115_88 = arith.constant 115 : index
    %867 = memref.load %arg4[%c115_88] : memref<144xf32, #tpu.memory_space<smem>>
    %868 = vector.broadcast %867 : f32 to vector<8x256xf32>
    %869 = arith.mulf %868, %806 : vector<8x256xf32>
    %870 = arith.addf %854, %869 : vector<8x256xf32>
    %871 = vector.extract_strided_slice %0 {offsets = [2, 0], sizes = [1, 256], strides = [1, 1]} : vector<9x256xf32> to vector<1x256xf32>
    %c15_i32_89 = arith.constant 15 : i32
    %872 = tpu.dynamic_rotate %702 by %c15_i32_89 dim 1 : vector<8x256xf32>, i32 -> vector<8x256xf32>
    %873 = vector.broadcast %871 : vector<1x256xf32> to vector<8x256xf32>
    %874 = arith.mulf %872, %873 : vector<8x256xf32>
    %c15_i32_90 = arith.constant 15 : i32
    %875 = tpu.dynamic_rotate %704 by %c15_i32_90 dim 1 : vector<8x256xf32>, i32 -> vector<8x256xf32>
    %876 = vector.broadcast %871 : vector<1x256xf32> to vector<8x256xf32>
    %877 = arith.mulf %875, %876 : vector<8x256xf32>
    %c15_i32_91 = arith.constant 15 : i32
    %878 = tpu.dynamic_rotate %706 by %c15_i32_91 dim 1 : vector<8x256xf32>, i32 -> vector<8x256xf32>
    %879 = vector.broadcast %871 : vector<1x256xf32> to vector<8x256xf32>
    %880 = arith.mulf %878, %879 : vector<8x256xf32>
    %c15_i32_92 = arith.constant 15 : i32
    %881 = tpu.dynamic_rotate %708 by %c15_i32_92 dim 1 : vector<8x256xf32>, i32 -> vector<8x256xf32>
    %882 = vector.broadcast %871 : vector<1x256xf32> to vector<8x256xf32>
    %883 = arith.mulf %881, %882 : vector<8x256xf32>
    %c8_93 = arith.constant 8 : index
    %884 = memref.load %arg4[%c8_93] : memref<144xf32, #tpu.memory_space<smem>>
    %885 = vector.broadcast %884 : f32 to vector<8x256xf32>
    %886 = arith.mulf %885, %874 : vector<8x256xf32>
    %887 = arith.addf %858, %886 : vector<8x256xf32>
    %c44_94 = arith.constant 44 : index
    %888 = memref.load %arg4[%c44_94] : memref<144xf32, #tpu.memory_space<smem>>
    %889 = vector.broadcast %888 : f32 to vector<8x256xf32>
    %890 = arith.mulf %889, %874 : vector<8x256xf32>
    %891 = arith.addf %862, %890 : vector<8x256xf32>
    %c80_95 = arith.constant 80 : index
    %892 = memref.load %arg4[%c80_95] : memref<144xf32, #tpu.memory_space<smem>>
    %893 = vector.broadcast %892 : f32 to vector<8x256xf32>
    %894 = arith.mulf %893, %874 : vector<8x256xf32>
    %895 = arith.addf %866, %894 : vector<8x256xf32>
    %c116_96 = arith.constant 116 : index
    %896 = memref.load %arg4[%c116_96] : memref<144xf32, #tpu.memory_space<smem>>
    %897 = vector.broadcast %896 : f32 to vector<8x256xf32>
    %898 = arith.mulf %897, %874 : vector<8x256xf32>
    %899 = arith.addf %870, %898 : vector<8x256xf32>
    %c9_97 = arith.constant 9 : index
    %900 = memref.load %arg4[%c9_97] : memref<144xf32, #tpu.memory_space<smem>>
    %901 = vector.broadcast %900 : f32 to vector<8x256xf32>
    %902 = arith.mulf %901, %877 : vector<8x256xf32>
    %903 = arith.addf %887, %902 : vector<8x256xf32>
    %c45_98 = arith.constant 45 : index
    %904 = memref.load %arg4[%c45_98] : memref<144xf32, #tpu.memory_space<smem>>
    %905 = vector.broadcast %904 : f32 to vector<8x256xf32>
    %906 = arith.mulf %905, %877 : vector<8x256xf32>
    %907 = arith.addf %891, %906 : vector<8x256xf32>
    %c81_99 = arith.constant 81 : index
    %908 = memref.load %arg4[%c81_99] : memref<144xf32, #tpu.memory_space<smem>>
    %909 = vector.broadcast %908 : f32 to vector<8x256xf32>
    %910 = arith.mulf %909, %877 : vector<8x256xf32>
    %911 = arith.addf %895, %910 : vector<8x256xf32>
    %c117_100 = arith.constant 117 : index
    %912 = memref.load %arg4[%c117_100] : memref<144xf32, #tpu.memory_space<smem>>
    %913 = vector.broadcast %912 : f32 to vector<8x256xf32>
    %914 = arith.mulf %913, %877 : vector<8x256xf32>
    %915 = arith.addf %899, %914 : vector<8x256xf32>
    %c10_101 = arith.constant 10 : index
    %916 = memref.load %arg4[%c10_101] : memref<144xf32, #tpu.memory_space<smem>>
    %917 = vector.broadcast %916 : f32 to vector<8x256xf32>
    %918 = arith.mulf %917, %880 : vector<8x256xf32>
    %919 = arith.addf %903, %918 : vector<8x256xf32>
    %c46_102 = arith.constant 46 : index
    %920 = memref.load %arg4[%c46_102] : memref<144xf32, #tpu.memory_space<smem>>
    %921 = vector.broadcast %920 : f32 to vector<8x256xf32>
    %922 = arith.mulf %921, %880 : vector<8x256xf32>
    %923 = arith.addf %907, %922 : vector<8x256xf32>
    %c82_103 = arith.constant 82 : index
    %924 = memref.load %arg4[%c82_103] : memref<144xf32, #tpu.memory_space<smem>>
    %925 = vector.broadcast %924 : f32 to vector<8x256xf32>
    %926 = arith.mulf %925, %880 : vector<8x256xf32>
    %927 = arith.addf %911, %926 : vector<8x256xf32>
    %c118_104 = arith.constant 118 : index
    %928 = memref.load %arg4[%c118_104] : memref<144xf32, #tpu.memory_space<smem>>
    %929 = vector.broadcast %928 : f32 to vector<8x256xf32>
    %930 = arith.mulf %929, %880 : vector<8x256xf32>
    %931 = arith.addf %915, %930 : vector<8x256xf32>
    %c11_105 = arith.constant 11 : index
    %932 = memref.load %arg4[%c11_105] : memref<144xf32, #tpu.memory_space<smem>>
    %933 = vector.broadcast %932 : f32 to vector<8x256xf32>
    %934 = arith.mulf %933, %883 : vector<8x256xf32>
    %935 = arith.addf %919, %934 : vector<8x256xf32>
    %c47_106 = arith.constant 47 : index
    %936 = memref.load %arg4[%c47_106] : memref<144xf32, #tpu.memory_space<smem>>
    %937 = vector.broadcast %936 : f32 to vector<8x256xf32>
    %938 = arith.mulf %937, %883 : vector<8x256xf32>
    %939 = arith.addf %923, %938 : vector<8x256xf32>
    %c83_107 = arith.constant 83 : index
    %940 = memref.load %arg4[%c83_107] : memref<144xf32, #tpu.memory_space<smem>>
    %941 = vector.broadcast %940 : f32 to vector<8x256xf32>
    %942 = arith.mulf %941, %883 : vector<8x256xf32>
    %943 = arith.addf %927, %942 : vector<8x256xf32>
    %c119_108 = arith.constant 119 : index
    %944 = memref.load %arg4[%c119_108] : memref<144xf32, #tpu.memory_space<smem>>
    %945 = vector.broadcast %944 : f32 to vector<8x256xf32>
    %946 = arith.mulf %945, %883 : vector<8x256xf32>
    %947 = arith.addf %931, %946 : vector<8x256xf32>
    %948 = vector.extract_strided_slice %0 {offsets = [3, 0], sizes = [1, 256], strides = [1, 1]} : vector<9x256xf32> to vector<1x256xf32>
    %c1_i32_109 = arith.constant 1 : i32
    %949 = tpu.dynamic_rotate %702 by %c1_i32_109 dim 1 : vector<8x256xf32>, i32 -> vector<8x256xf32>
    %950 = vector.broadcast %948 : vector<1x256xf32> to vector<8x256xf32>
    %951 = arith.mulf %949, %950 : vector<8x256xf32>
    %c1_i32_110 = arith.constant 1 : i32
    %952 = tpu.dynamic_rotate %704 by %c1_i32_110 dim 1 : vector<8x256xf32>, i32 -> vector<8x256xf32>
    %953 = vector.broadcast %948 : vector<1x256xf32> to vector<8x256xf32>
    %954 = arith.mulf %952, %953 : vector<8x256xf32>
    %c1_i32_111 = arith.constant 1 : i32
    %955 = tpu.dynamic_rotate %706 by %c1_i32_111 dim 1 : vector<8x256xf32>, i32 -> vector<8x256xf32>
    %956 = vector.broadcast %948 : vector<1x256xf32> to vector<8x256xf32>
    %957 = arith.mulf %955, %956 : vector<8x256xf32>
    %c1_i32_112 = arith.constant 1 : i32
    %958 = tpu.dynamic_rotate %708 by %c1_i32_112 dim 1 : vector<8x256xf32>, i32 -> vector<8x256xf32>
    %959 = vector.broadcast %948 : vector<1x256xf32> to vector<8x256xf32>
    %960 = arith.mulf %958, %959 : vector<8x256xf32>
    %c12_113 = arith.constant 12 : index
    %961 = memref.load %arg4[%c12_113] : memref<144xf32, #tpu.memory_space<smem>>
    %962 = vector.broadcast %961 : f32 to vector<8x256xf32>
    %963 = arith.mulf %962, %951 : vector<8x256xf32>
    %964 = arith.addf %935, %963 : vector<8x256xf32>
    %c48_114 = arith.constant 48 : index
    %965 = memref.load %arg4[%c48_114] : memref<144xf32, #tpu.memory_space<smem>>
    %966 = vector.broadcast %965 : f32 to vector<8x256xf32>
    %967 = arith.mulf %966, %951 : vector<8x256xf32>
    %968 = arith.addf %939, %967 : vector<8x256xf32>
    %c84_115 = arith.constant 84 : index
    %969 = memref.load %arg4[%c84_115] : memref<144xf32, #tpu.memory_space<smem>>
    %970 = vector.broadcast %969 : f32 to vector<8x256xf32>
    %971 = arith.mulf %970, %951 : vector<8x256xf32>
    %972 = arith.addf %943, %971 : vector<8x256xf32>
    %c120_116 = arith.constant 120 : index
    %973 = memref.load %arg4[%c120_116] : memref<144xf32, #tpu.memory_space<smem>>
    %974 = vector.broadcast %973 : f32 to vector<8x256xf32>
    %975 = arith.mulf %974, %951 : vector<8x256xf32>
    %976 = arith.addf %947, %975 : vector<8x256xf32>
    %c13_117 = arith.constant 13 : index
    %977 = memref.load %arg4[%c13_117] : memref<144xf32, #tpu.memory_space<smem>>
    %978 = vector.broadcast %977 : f32 to vector<8x256xf32>
    %979 = arith.mulf %978, %954 : vector<8x256xf32>
    %980 = arith.addf %964, %979 : vector<8x256xf32>
    %c49_118 = arith.constant 49 : index
    %981 = memref.load %arg4[%c49_118] : memref<144xf32, #tpu.memory_space<smem>>
    %982 = vector.broadcast %981 : f32 to vector<8x256xf32>
    %983 = arith.mulf %982, %954 : vector<8x256xf32>
    %984 = arith.addf %968, %983 : vector<8x256xf32>
    %c85_119 = arith.constant 85 : index
    %985 = memref.load %arg4[%c85_119] : memref<144xf32, #tpu.memory_space<smem>>
    %986 = vector.broadcast %985 : f32 to vector<8x256xf32>
    %987 = arith.mulf %986, %954 : vector<8x256xf32>
    %988 = arith.addf %972, %987 : vector<8x256xf32>
    %c121_120 = arith.constant 121 : index
    %989 = memref.load %arg4[%c121_120] : memref<144xf32, #tpu.memory_space<smem>>
    %990 = vector.broadcast %989 : f32 to vector<8x256xf32>
    %991 = arith.mulf %990, %954 : vector<8x256xf32>
    %992 = arith.addf %976, %991 : vector<8x256xf32>
    %c14_121 = arith.constant 14 : index
    %993 = memref.load %arg4[%c14_121] : memref<144xf32, #tpu.memory_space<smem>>
    %994 = vector.broadcast %993 : f32 to vector<8x256xf32>
    %995 = arith.mulf %994, %957 : vector<8x256xf32>
    %996 = arith.addf %980, %995 : vector<8x256xf32>
    %c50_122 = arith.constant 50 : index
    %997 = memref.load %arg4[%c50_122] : memref<144xf32, #tpu.memory_space<smem>>
    %998 = vector.broadcast %997 : f32 to vector<8x256xf32>
    %999 = arith.mulf %998, %957 : vector<8x256xf32>
    %1000 = arith.addf %984, %999 : vector<8x256xf32>
    %c86_123 = arith.constant 86 : index
    %1001 = memref.load %arg4[%c86_123] : memref<144xf32, #tpu.memory_space<smem>>
    %1002 = vector.broadcast %1001 : f32 to vector<8x256xf32>
    %1003 = arith.mulf %1002, %957 : vector<8x256xf32>
    %1004 = arith.addf %988, %1003 : vector<8x256xf32>
    %c122_124 = arith.constant 122 : index
    %1005 = memref.load %arg4[%c122_124] : memref<144xf32, #tpu.memory_space<smem>>
    %1006 = vector.broadcast %1005 : f32 to vector<8x256xf32>
    %1007 = arith.mulf %1006, %957 : vector<8x256xf32>
    %1008 = arith.addf %992, %1007 : vector<8x256xf32>
    %c15_125 = arith.constant 15 : index
    %1009 = memref.load %arg4[%c15_125] : memref<144xf32, #tpu.memory_space<smem>>
    %1010 = vector.broadcast %1009 : f32 to vector<8x256xf32>
    %1011 = arith.mulf %1010, %960 : vector<8x256xf32>
    %1012 = arith.addf %996, %1011 : vector<8x256xf32>
    %c51_126 = arith.constant 51 : index
    %1013 = memref.load %arg4[%c51_126] : memref<144xf32, #tpu.memory_space<smem>>
    %1014 = vector.broadcast %1013 : f32 to vector<8x256xf32>
    %1015 = arith.mulf %1014, %960 : vector<8x256xf32>
    %1016 = arith.addf %1000, %1015 : vector<8x256xf32>
    %c87_127 = arith.constant 87 : index
    %1017 = memref.load %arg4[%c87_127] : memref<144xf32, #tpu.memory_space<smem>>
    %1018 = vector.broadcast %1017 : f32 to vector<8x256xf32>
    %1019 = arith.mulf %1018, %960 : vector<8x256xf32>
    %1020 = arith.addf %1004, %1019 : vector<8x256xf32>
    %c123_128 = arith.constant 123 : index
    %1021 = memref.load %arg4[%c123_128] : memref<144xf32, #tpu.memory_space<smem>>
    %1022 = vector.broadcast %1021 : f32 to vector<8x256xf32>
    %1023 = arith.mulf %1022, %960 : vector<8x256xf32>
    %1024 = arith.addf %1008, %1023 : vector<8x256xf32>
    %c16_129 = arith.constant 16 : index
    %1025 = memref.load %arg4[%c16_129] : memref<144xf32, #tpu.memory_space<smem>>
    %1026 = vector.broadcast %1025 : f32 to vector<8x256xf32>
    %1027 = arith.mulf %1026, %702 : vector<8x256xf32>
    %1028 = arith.addf %1012, %1027 : vector<8x256xf32>
    %c52_130 = arith.constant 52 : index
    %1029 = memref.load %arg4[%c52_130] : memref<144xf32, #tpu.memory_space<smem>>
    %1030 = vector.broadcast %1029 : f32 to vector<8x256xf32>
    %1031 = arith.mulf %1030, %702 : vector<8x256xf32>
    %1032 = arith.addf %1016, %1031 : vector<8x256xf32>
    %c88_131 = arith.constant 88 : index
    %1033 = memref.load %arg4[%c88_131] : memref<144xf32, #tpu.memory_space<smem>>
    %1034 = vector.broadcast %1033 : f32 to vector<8x256xf32>
    %1035 = arith.mulf %1034, %702 : vector<8x256xf32>
    %1036 = arith.addf %1020, %1035 : vector<8x256xf32>
    %c124_132 = arith.constant 124 : index
    %1037 = memref.load %arg4[%c124_132] : memref<144xf32, #tpu.memory_space<smem>>
    %1038 = vector.broadcast %1037 : f32 to vector<8x256xf32>
    %1039 = arith.mulf %1038, %702 : vector<8x256xf32>
    %1040 = arith.addf %1024, %1039 : vector<8x256xf32>
    %c17_133 = arith.constant 17 : index
    %1041 = memref.load %arg4[%c17_133] : memref<144xf32, #tpu.memory_space<smem>>
    %1042 = vector.broadcast %1041 : f32 to vector<8x256xf32>
    %1043 = arith.mulf %1042, %704 : vector<8x256xf32>
    %1044 = arith.addf %1028, %1043 : vector<8x256xf32>
    %c53_134 = arith.constant 53 : index
    %1045 = memref.load %arg4[%c53_134] : memref<144xf32, #tpu.memory_space<smem>>
    %1046 = vector.broadcast %1045 : f32 to vector<8x256xf32>
    %1047 = arith.mulf %1046, %704 : vector<8x256xf32>
    %1048 = arith.addf %1032, %1047 : vector<8x256xf32>
    %c89_135 = arith.constant 89 : index
    %1049 = memref.load %arg4[%c89_135] : memref<144xf32, #tpu.memory_space<smem>>
    %1050 = vector.broadcast %1049 : f32 to vector<8x256xf32>
    %1051 = arith.mulf %1050, %704 : vector<8x256xf32>
    %1052 = arith.addf %1036, %1051 : vector<8x256xf32>
    %c125_136 = arith.constant 125 : index
    %1053 = memref.load %arg4[%c125_136] : memref<144xf32, #tpu.memory_space<smem>>
    %1054 = vector.broadcast %1053 : f32 to vector<8x256xf32>
    %1055 = arith.mulf %1054, %704 : vector<8x256xf32>
    %1056 = arith.addf %1040, %1055 : vector<8x256xf32>
    %c18_137 = arith.constant 18 : index
    %1057 = memref.load %arg4[%c18_137] : memref<144xf32, #tpu.memory_space<smem>>
    %1058 = vector.broadcast %1057 : f32 to vector<8x256xf32>
    %1059 = arith.mulf %1058, %706 : vector<8x256xf32>
    %1060 = arith.addf %1044, %1059 : vector<8x256xf32>
    %c54_138 = arith.constant 54 : index
    %1061 = memref.load %arg4[%c54_138] : memref<144xf32, #tpu.memory_space<smem>>
    %1062 = vector.broadcast %1061 : f32 to vector<8x256xf32>
    %1063 = arith.mulf %1062, %706 : vector<8x256xf32>
    %1064 = arith.addf %1048, %1063 : vector<8x256xf32>
    %c90_139 = arith.constant 90 : index
    %1065 = memref.load %arg4[%c90_139] : memref<144xf32, #tpu.memory_space<smem>>
    %1066 = vector.broadcast %1065 : f32 to vector<8x256xf32>
    %1067 = arith.mulf %1066, %706 : vector<8x256xf32>
    %1068 = arith.addf %1052, %1067 : vector<8x256xf32>
    %c126_140 = arith.constant 126 : index
    %1069 = memref.load %arg4[%c126_140] : memref<144xf32, #tpu.memory_space<smem>>
    %1070 = vector.broadcast %1069 : f32 to vector<8x256xf32>
    %1071 = arith.mulf %1070, %706 : vector<8x256xf32>
    %1072 = arith.addf %1056, %1071 : vector<8x256xf32>
    %c19_141 = arith.constant 19 : index
    %1073 = memref.load %arg4[%c19_141] : memref<144xf32, #tpu.memory_space<smem>>
    %1074 = vector.broadcast %1073 : f32 to vector<8x256xf32>
    %1075 = arith.mulf %1074, %708 : vector<8x256xf32>
    %1076 = arith.addf %1060, %1075 : vector<8x256xf32>
    %c55_142 = arith.constant 55 : index
    %1077 = memref.load %arg4[%c55_142] : memref<144xf32, #tpu.memory_space<smem>>
    %1078 = vector.broadcast %1077 : f32 to vector<8x256xf32>
    %1079 = arith.mulf %1078, %708 : vector<8x256xf32>
    %1080 = arith.addf %1064, %1079 : vector<8x256xf32>
    %c91_143 = arith.constant 91 : index
    %1081 = memref.load %arg4[%c91_143] : memref<144xf32, #tpu.memory_space<smem>>
    %1082 = vector.broadcast %1081 : f32 to vector<8x256xf32>
    %1083 = arith.mulf %1082, %708 : vector<8x256xf32>
    %1084 = arith.addf %1068, %1083 : vector<8x256xf32>
    %c127_144 = arith.constant 127 : index
    %1085 = memref.load %arg4[%c127_144] : memref<144xf32, #tpu.memory_space<smem>>
    %1086 = vector.broadcast %1085 : f32 to vector<8x256xf32>
    %1087 = arith.mulf %1086, %708 : vector<8x256xf32>
    %1088 = arith.addf %1072, %1087 : vector<8x256xf32>
    %1089 = vector.extract_strided_slice %0 {offsets = [5, 0], sizes = [1, 256], strides = [1, 1]} : vector<9x256xf32> to vector<1x256xf32>
    %c255_i32_145 = arith.constant 255 : i32
    %1090 = tpu.dynamic_rotate %702 by %c255_i32_145 dim 1 : vector<8x256xf32>, i32 -> vector<8x256xf32>
    %1091 = vector.broadcast %1089 : vector<1x256xf32> to vector<8x256xf32>
    %1092 = arith.mulf %1090, %1091 : vector<8x256xf32>
    %c255_i32_146 = arith.constant 255 : i32
    %1093 = tpu.dynamic_rotate %704 by %c255_i32_146 dim 1 : vector<8x256xf32>, i32 -> vector<8x256xf32>
    %1094 = vector.broadcast %1089 : vector<1x256xf32> to vector<8x256xf32>
    %1095 = arith.mulf %1093, %1094 : vector<8x256xf32>
    %c255_i32_147 = arith.constant 255 : i32
    %1096 = tpu.dynamic_rotate %706 by %c255_i32_147 dim 1 : vector<8x256xf32>, i32 -> vector<8x256xf32>
    %1097 = vector.broadcast %1089 : vector<1x256xf32> to vector<8x256xf32>
    %1098 = arith.mulf %1096, %1097 : vector<8x256xf32>
    %c255_i32_148 = arith.constant 255 : i32
    %1099 = tpu.dynamic_rotate %708 by %c255_i32_148 dim 1 : vector<8x256xf32>, i32 -> vector<8x256xf32>
    %1100 = vector.broadcast %1089 : vector<1x256xf32> to vector<8x256xf32>
    %1101 = arith.mulf %1099, %1100 : vector<8x256xf32>
    %c20_149 = arith.constant 20 : index
    %1102 = memref.load %arg4[%c20_149] : memref<144xf32, #tpu.memory_space<smem>>
    %1103 = vector.broadcast %1102 : f32 to vector<8x256xf32>
    %1104 = arith.mulf %1103, %1092 : vector<8x256xf32>
    %1105 = arith.addf %1076, %1104 : vector<8x256xf32>
    %c56_150 = arith.constant 56 : index
    %1106 = memref.load %arg4[%c56_150] : memref<144xf32, #tpu.memory_space<smem>>
    %1107 = vector.broadcast %1106 : f32 to vector<8x256xf32>
    %1108 = arith.mulf %1107, %1092 : vector<8x256xf32>
    %1109 = arith.addf %1080, %1108 : vector<8x256xf32>
    %c92_151 = arith.constant 92 : index
    %1110 = memref.load %arg4[%c92_151] : memref<144xf32, #tpu.memory_space<smem>>
    %1111 = vector.broadcast %1110 : f32 to vector<8x256xf32>
    %1112 = arith.mulf %1111, %1092 : vector<8x256xf32>
    %1113 = arith.addf %1084, %1112 : vector<8x256xf32>
    %c128_152 = arith.constant 128 : index
    %1114 = memref.load %arg4[%c128_152] : memref<144xf32, #tpu.memory_space<smem>>
    %1115 = vector.broadcast %1114 : f32 to vector<8x256xf32>
    %1116 = arith.mulf %1115, %1092 : vector<8x256xf32>
    %1117 = arith.addf %1088, %1116 : vector<8x256xf32>
    %c21_153 = arith.constant 21 : index
    %1118 = memref.load %arg4[%c21_153] : memref<144xf32, #tpu.memory_space<smem>>
    %1119 = vector.broadcast %1118 : f32 to vector<8x256xf32>
    %1120 = arith.mulf %1119, %1095 : vector<8x256xf32>
    %1121 = arith.addf %1105, %1120 : vector<8x256xf32>
    %c57_154 = arith.constant 57 : index
    %1122 = memref.load %arg4[%c57_154] : memref<144xf32, #tpu.memory_space<smem>>
    %1123 = vector.broadcast %1122 : f32 to vector<8x256xf32>
    %1124 = arith.mulf %1123, %1095 : vector<8x256xf32>
    %1125 = arith.addf %1109, %1124 : vector<8x256xf32>
    %c93_155 = arith.constant 93 : index
    %1126 = memref.load %arg4[%c93_155] : memref<144xf32, #tpu.memory_space<smem>>
    %1127 = vector.broadcast %1126 : f32 to vector<8x256xf32>
    %1128 = arith.mulf %1127, %1095 : vector<8x256xf32>
    %1129 = arith.addf %1113, %1128 : vector<8x256xf32>
    %c129_156 = arith.constant 129 : index
    %1130 = memref.load %arg4[%c129_156] : memref<144xf32, #tpu.memory_space<smem>>
    %1131 = vector.broadcast %1130 : f32 to vector<8x256xf32>
    %1132 = arith.mulf %1131, %1095 : vector<8x256xf32>
    %1133 = arith.addf %1117, %1132 : vector<8x256xf32>
    %c22_157 = arith.constant 22 : index
    %1134 = memref.load %arg4[%c22_157] : memref<144xf32, #tpu.memory_space<smem>>
    %1135 = vector.broadcast %1134 : f32 to vector<8x256xf32>
    %1136 = arith.mulf %1135, %1098 : vector<8x256xf32>
    %1137 = arith.addf %1121, %1136 : vector<8x256xf32>
    %c58_158 = arith.constant 58 : index
    %1138 = memref.load %arg4[%c58_158] : memref<144xf32, #tpu.memory_space<smem>>
    %1139 = vector.broadcast %1138 : f32 to vector<8x256xf32>
    %1140 = arith.mulf %1139, %1098 : vector<8x256xf32>
    %1141 = arith.addf %1125, %1140 : vector<8x256xf32>
    %c94_159 = arith.constant 94 : index
    %1142 = memref.load %arg4[%c94_159] : memref<144xf32, #tpu.memory_space<smem>>
    %1143 = vector.broadcast %1142 : f32 to vector<8x256xf32>
    %1144 = arith.mulf %1143, %1098 : vector<8x256xf32>
    %1145 = arith.addf %1129, %1144 : vector<8x256xf32>
    %c130_160 = arith.constant 130 : index
    %1146 = memref.load %arg4[%c130_160] : memref<144xf32, #tpu.memory_space<smem>>
    %1147 = vector.broadcast %1146 : f32 to vector<8x256xf32>
    %1148 = arith.mulf %1147, %1098 : vector<8x256xf32>
    %1149 = arith.addf %1133, %1148 : vector<8x256xf32>
    %c23_161 = arith.constant 23 : index
    %1150 = memref.load %arg4[%c23_161] : memref<144xf32, #tpu.memory_space<smem>>
    %1151 = vector.broadcast %1150 : f32 to vector<8x256xf32>
    %1152 = arith.mulf %1151, %1101 : vector<8x256xf32>
    %1153 = arith.addf %1137, %1152 : vector<8x256xf32>
    %c59_162 = arith.constant 59 : index
    %1154 = memref.load %arg4[%c59_162] : memref<144xf32, #tpu.memory_space<smem>>
    %1155 = vector.broadcast %1154 : f32 to vector<8x256xf32>
    %1156 = arith.mulf %1155, %1101 : vector<8x256xf32>
    %1157 = arith.addf %1141, %1156 : vector<8x256xf32>
    %c95_163 = arith.constant 95 : index
    %1158 = memref.load %arg4[%c95_163] : memref<144xf32, #tpu.memory_space<smem>>
    %1159 = vector.broadcast %1158 : f32 to vector<8x256xf32>
    %1160 = arith.mulf %1159, %1101 : vector<8x256xf32>
    %1161 = arith.addf %1145, %1160 : vector<8x256xf32>
    %c131_164 = arith.constant 131 : index
    %1162 = memref.load %arg4[%c131_164] : memref<144xf32, #tpu.memory_space<smem>>
    %1163 = vector.broadcast %1162 : f32 to vector<8x256xf32>
    %1164 = arith.mulf %1163, %1101 : vector<8x256xf32>
    %1165 = arith.addf %1149, %1164 : vector<8x256xf32>
    %1166 = vector.extract_strided_slice %0 {offsets = [6, 0], sizes = [1, 256], strides = [1, 1]} : vector<9x256xf32> to vector<1x256xf32>
    %c241_i32_165 = arith.constant 241 : i32
    %1167 = tpu.dynamic_rotate %702 by %c241_i32_165 dim 1 : vector<8x256xf32>, i32 -> vector<8x256xf32>
    %1168 = vector.broadcast %1166 : vector<1x256xf32> to vector<8x256xf32>
    %1169 = arith.mulf %1167, %1168 : vector<8x256xf32>
    %c241_i32_166 = arith.constant 241 : i32
    %1170 = tpu.dynamic_rotate %704 by %c241_i32_166 dim 1 : vector<8x256xf32>, i32 -> vector<8x256xf32>
    %1171 = vector.broadcast %1166 : vector<1x256xf32> to vector<8x256xf32>
    %1172 = arith.mulf %1170, %1171 : vector<8x256xf32>
    %c241_i32_167 = arith.constant 241 : i32
    %1173 = tpu.dynamic_rotate %706 by %c241_i32_167 dim 1 : vector<8x256xf32>, i32 -> vector<8x256xf32>
    %1174 = vector.broadcast %1166 : vector<1x256xf32> to vector<8x256xf32>
    %1175 = arith.mulf %1173, %1174 : vector<8x256xf32>
    %c241_i32_168 = arith.constant 241 : i32
    %1176 = tpu.dynamic_rotate %708 by %c241_i32_168 dim 1 : vector<8x256xf32>, i32 -> vector<8x256xf32>
    %1177 = vector.broadcast %1166 : vector<1x256xf32> to vector<8x256xf32>
    %1178 = arith.mulf %1176, %1177 : vector<8x256xf32>
    %c24_169 = arith.constant 24 : index
    %1179 = memref.load %arg4[%c24_169] : memref<144xf32, #tpu.memory_space<smem>>
    %1180 = vector.broadcast %1179 : f32 to vector<8x256xf32>
    %1181 = arith.mulf %1180, %1169 : vector<8x256xf32>
    %1182 = arith.addf %1153, %1181 : vector<8x256xf32>
    %c60_170 = arith.constant 60 : index
    %1183 = memref.load %arg4[%c60_170] : memref<144xf32, #tpu.memory_space<smem>>
    %1184 = vector.broadcast %1183 : f32 to vector<8x256xf32>
    %1185 = arith.mulf %1184, %1169 : vector<8x256xf32>
    %1186 = arith.addf %1157, %1185 : vector<8x256xf32>
    %c96_171 = arith.constant 96 : index
    %1187 = memref.load %arg4[%c96_171] : memref<144xf32, #tpu.memory_space<smem>>
    %1188 = vector.broadcast %1187 : f32 to vector<8x256xf32>
    %1189 = arith.mulf %1188, %1169 : vector<8x256xf32>
    %1190 = arith.addf %1161, %1189 : vector<8x256xf32>
    %c132_172 = arith.constant 132 : index
    %1191 = memref.load %arg4[%c132_172] : memref<144xf32, #tpu.memory_space<smem>>
    %1192 = vector.broadcast %1191 : f32 to vector<8x256xf32>
    %1193 = arith.mulf %1192, %1169 : vector<8x256xf32>
    %1194 = arith.addf %1165, %1193 : vector<8x256xf32>
    %c25_173 = arith.constant 25 : index
    %1195 = memref.load %arg4[%c25_173] : memref<144xf32, #tpu.memory_space<smem>>
    %1196 = vector.broadcast %1195 : f32 to vector<8x256xf32>
    %1197 = arith.mulf %1196, %1172 : vector<8x256xf32>
    %1198 = arith.addf %1182, %1197 : vector<8x256xf32>
    %c61_174 = arith.constant 61 : index
    %1199 = memref.load %arg4[%c61_174] : memref<144xf32, #tpu.memory_space<smem>>
    %1200 = vector.broadcast %1199 : f32 to vector<8x256xf32>
    %1201 = arith.mulf %1200, %1172 : vector<8x256xf32>
    %1202 = arith.addf %1186, %1201 : vector<8x256xf32>
    %c97_175 = arith.constant 97 : index
    %1203 = memref.load %arg4[%c97_175] : memref<144xf32, #tpu.memory_space<smem>>
    %1204 = vector.broadcast %1203 : f32 to vector<8x256xf32>
    %1205 = arith.mulf %1204, %1172 : vector<8x256xf32>
    %1206 = arith.addf %1190, %1205 : vector<8x256xf32>
    %c133_176 = arith.constant 133 : index
    %1207 = memref.load %arg4[%c133_176] : memref<144xf32, #tpu.memory_space<smem>>
    %1208 = vector.broadcast %1207 : f32 to vector<8x256xf32>
    %1209 = arith.mulf %1208, %1172 : vector<8x256xf32>
    %1210 = arith.addf %1194, %1209 : vector<8x256xf32>
    %c26_177 = arith.constant 26 : index
    %1211 = memref.load %arg4[%c26_177] : memref<144xf32, #tpu.memory_space<smem>>
    %1212 = vector.broadcast %1211 : f32 to vector<8x256xf32>
    %1213 = arith.mulf %1212, %1175 : vector<8x256xf32>
    %1214 = arith.addf %1198, %1213 : vector<8x256xf32>
    %c62_178 = arith.constant 62 : index
    %1215 = memref.load %arg4[%c62_178] : memref<144xf32, #tpu.memory_space<smem>>
    %1216 = vector.broadcast %1215 : f32 to vector<8x256xf32>
    %1217 = arith.mulf %1216, %1175 : vector<8x256xf32>
    %1218 = arith.addf %1202, %1217 : vector<8x256xf32>
    %c98_179 = arith.constant 98 : index
    %1219 = memref.load %arg4[%c98_179] : memref<144xf32, #tpu.memory_space<smem>>
    %1220 = vector.broadcast %1219 : f32 to vector<8x256xf32>
    %1221 = arith.mulf %1220, %1175 : vector<8x256xf32>
    %1222 = arith.addf %1206, %1221 : vector<8x256xf32>
    %c134_180 = arith.constant 134 : index
    %1223 = memref.load %arg4[%c134_180] : memref<144xf32, #tpu.memory_space<smem>>
    %1224 = vector.broadcast %1223 : f32 to vector<8x256xf32>
    %1225 = arith.mulf %1224, %1175 : vector<8x256xf32>
    %1226 = arith.addf %1210, %1225 : vector<8x256xf32>
    %c27_181 = arith.constant 27 : index
    %1227 = memref.load %arg4[%c27_181] : memref<144xf32, #tpu.memory_space<smem>>
    %1228 = vector.broadcast %1227 : f32 to vector<8x256xf32>
    %1229 = arith.mulf %1228, %1178 : vector<8x256xf32>
    %1230 = arith.addf %1214, %1229 : vector<8x256xf32>
    %c63_182 = arith.constant 63 : index
    %1231 = memref.load %arg4[%c63_182] : memref<144xf32, #tpu.memory_space<smem>>
    %1232 = vector.broadcast %1231 : f32 to vector<8x256xf32>
    %1233 = arith.mulf %1232, %1178 : vector<8x256xf32>
    %1234 = arith.addf %1218, %1233 : vector<8x256xf32>
    %c99_183 = arith.constant 99 : index
    %1235 = memref.load %arg4[%c99_183] : memref<144xf32, #tpu.memory_space<smem>>
    %1236 = vector.broadcast %1235 : f32 to vector<8x256xf32>
    %1237 = arith.mulf %1236, %1178 : vector<8x256xf32>
    %1238 = arith.addf %1222, %1237 : vector<8x256xf32>
    %c135_184 = arith.constant 135 : index
    %1239 = memref.load %arg4[%c135_184] : memref<144xf32, #tpu.memory_space<smem>>
    %1240 = vector.broadcast %1239 : f32 to vector<8x256xf32>
    %1241 = arith.mulf %1240, %1178 : vector<8x256xf32>
    %1242 = arith.addf %1226, %1241 : vector<8x256xf32>
    %1243 = vector.extract_strided_slice %0 {offsets = [7, 0], sizes = [1, 256], strides = [1, 1]} : vector<9x256xf32> to vector<1x256xf32>
    %c240_i32_185 = arith.constant 240 : i32
    %1244 = tpu.dynamic_rotate %702 by %c240_i32_185 dim 1 : vector<8x256xf32>, i32 -> vector<8x256xf32>
    %1245 = vector.broadcast %1243 : vector<1x256xf32> to vector<8x256xf32>
    %1246 = arith.mulf %1244, %1245 : vector<8x256xf32>
    %c240_i32_186 = arith.constant 240 : i32
    %1247 = tpu.dynamic_rotate %704 by %c240_i32_186 dim 1 : vector<8x256xf32>, i32 -> vector<8x256xf32>
    %1248 = vector.broadcast %1243 : vector<1x256xf32> to vector<8x256xf32>
    %1249 = arith.mulf %1247, %1248 : vector<8x256xf32>
    %c240_i32_187 = arith.constant 240 : i32
    %1250 = tpu.dynamic_rotate %706 by %c240_i32_187 dim 1 : vector<8x256xf32>, i32 -> vector<8x256xf32>
    %1251 = vector.broadcast %1243 : vector<1x256xf32> to vector<8x256xf32>
    %1252 = arith.mulf %1250, %1251 : vector<8x256xf32>
    %c240_i32_188 = arith.constant 240 : i32
    %1253 = tpu.dynamic_rotate %708 by %c240_i32_188 dim 1 : vector<8x256xf32>, i32 -> vector<8x256xf32>
    %1254 = vector.broadcast %1243 : vector<1x256xf32> to vector<8x256xf32>
    %1255 = arith.mulf %1253, %1254 : vector<8x256xf32>
    %c28_189 = arith.constant 28 : index
    %1256 = memref.load %arg4[%c28_189] : memref<144xf32, #tpu.memory_space<smem>>
    %1257 = vector.broadcast %1256 : f32 to vector<8x256xf32>
    %1258 = arith.mulf %1257, %1246 : vector<8x256xf32>
    %1259 = arith.addf %1230, %1258 : vector<8x256xf32>
    %c64_190 = arith.constant 64 : index
    %1260 = memref.load %arg4[%c64_190] : memref<144xf32, #tpu.memory_space<smem>>
    %1261 = vector.broadcast %1260 : f32 to vector<8x256xf32>
    %1262 = arith.mulf %1261, %1246 : vector<8x256xf32>
    %1263 = arith.addf %1234, %1262 : vector<8x256xf32>
    %c100_191 = arith.constant 100 : index
    %1264 = memref.load %arg4[%c100_191] : memref<144xf32, #tpu.memory_space<smem>>
    %1265 = vector.broadcast %1264 : f32 to vector<8x256xf32>
    %1266 = arith.mulf %1265, %1246 : vector<8x256xf32>
    %1267 = arith.addf %1238, %1266 : vector<8x256xf32>
    %c136_192 = arith.constant 136 : index
    %1268 = memref.load %arg4[%c136_192] : memref<144xf32, #tpu.memory_space<smem>>
    %1269 = vector.broadcast %1268 : f32 to vector<8x256xf32>
    %1270 = arith.mulf %1269, %1246 : vector<8x256xf32>
    %1271 = arith.addf %1242, %1270 : vector<8x256xf32>
    %c29_193 = arith.constant 29 : index
    %1272 = memref.load %arg4[%c29_193] : memref<144xf32, #tpu.memory_space<smem>>
    %1273 = vector.broadcast %1272 : f32 to vector<8x256xf32>
    %1274 = arith.mulf %1273, %1249 : vector<8x256xf32>
    %1275 = arith.addf %1259, %1274 : vector<8x256xf32>
    %c65_194 = arith.constant 65 : index
    %1276 = memref.load %arg4[%c65_194] : memref<144xf32, #tpu.memory_space<smem>>
    %1277 = vector.broadcast %1276 : f32 to vector<8x256xf32>
    %1278 = arith.mulf %1277, %1249 : vector<8x256xf32>
    %1279 = arith.addf %1263, %1278 : vector<8x256xf32>
    %c101_195 = arith.constant 101 : index
    %1280 = memref.load %arg4[%c101_195] : memref<144xf32, #tpu.memory_space<smem>>
    %1281 = vector.broadcast %1280 : f32 to vector<8x256xf32>
    %1282 = arith.mulf %1281, %1249 : vector<8x256xf32>
    %1283 = arith.addf %1267, %1282 : vector<8x256xf32>
    %c137_196 = arith.constant 137 : index
    %1284 = memref.load %arg4[%c137_196] : memref<144xf32, #tpu.memory_space<smem>>
    %1285 = vector.broadcast %1284 : f32 to vector<8x256xf32>
    %1286 = arith.mulf %1285, %1249 : vector<8x256xf32>
    %1287 = arith.addf %1271, %1286 : vector<8x256xf32>
    %c30_197 = arith.constant 30 : index
    %1288 = memref.load %arg4[%c30_197] : memref<144xf32, #tpu.memory_space<smem>>
    %1289 = vector.broadcast %1288 : f32 to vector<8x256xf32>
    %1290 = arith.mulf %1289, %1252 : vector<8x256xf32>
    %1291 = arith.addf %1275, %1290 : vector<8x256xf32>
    %c66_198 = arith.constant 66 : index
    %1292 = memref.load %arg4[%c66_198] : memref<144xf32, #tpu.memory_space<smem>>
    %1293 = vector.broadcast %1292 : f32 to vector<8x256xf32>
    %1294 = arith.mulf %1293, %1252 : vector<8x256xf32>
    %1295 = arith.addf %1279, %1294 : vector<8x256xf32>
    %c102_199 = arith.constant 102 : index
    %1296 = memref.load %arg4[%c102_199] : memref<144xf32, #tpu.memory_space<smem>>
    %1297 = vector.broadcast %1296 : f32 to vector<8x256xf32>
    %1298 = arith.mulf %1297, %1252 : vector<8x256xf32>
    %1299 = arith.addf %1283, %1298 : vector<8x256xf32>
    %c138_200 = arith.constant 138 : index
    %1300 = memref.load %arg4[%c138_200] : memref<144xf32, #tpu.memory_space<smem>>
    %1301 = vector.broadcast %1300 : f32 to vector<8x256xf32>
    %1302 = arith.mulf %1301, %1252 : vector<8x256xf32>
    %1303 = arith.addf %1287, %1302 : vector<8x256xf32>
    %c31_201 = arith.constant 31 : index
    %1304 = memref.load %arg4[%c31_201] : memref<144xf32, #tpu.memory_space<smem>>
    %1305 = vector.broadcast %1304 : f32 to vector<8x256xf32>
    %1306 = arith.mulf %1305, %1255 : vector<8x256xf32>
    %1307 = arith.addf %1291, %1306 : vector<8x256xf32>
    %c67_202 = arith.constant 67 : index
    %1308 = memref.load %arg4[%c67_202] : memref<144xf32, #tpu.memory_space<smem>>
    %1309 = vector.broadcast %1308 : f32 to vector<8x256xf32>
    %1310 = arith.mulf %1309, %1255 : vector<8x256xf32>
    %1311 = arith.addf %1295, %1310 : vector<8x256xf32>
    %c103_203 = arith.constant 103 : index
    %1312 = memref.load %arg4[%c103_203] : memref<144xf32, #tpu.memory_space<smem>>
    %1313 = vector.broadcast %1312 : f32 to vector<8x256xf32>
    %1314 = arith.mulf %1313, %1255 : vector<8x256xf32>
    %1315 = arith.addf %1299, %1314 : vector<8x256xf32>
    %c139_204 = arith.constant 139 : index
    %1316 = memref.load %arg4[%c139_204] : memref<144xf32, #tpu.memory_space<smem>>
    %1317 = vector.broadcast %1316 : f32 to vector<8x256xf32>
    %1318 = arith.mulf %1317, %1255 : vector<8x256xf32>
    %1319 = arith.addf %1303, %1318 : vector<8x256xf32>
    %1320 = vector.extract_strided_slice %0 {offsets = [8, 0], sizes = [1, 256], strides = [1, 1]} : vector<9x256xf32> to vector<1x256xf32>
    %c239_i32_205 = arith.constant 239 : i32
    %1321 = tpu.dynamic_rotate %702 by %c239_i32_205 dim 1 : vector<8x256xf32>, i32 -> vector<8x256xf32>
    %1322 = vector.broadcast %1320 : vector<1x256xf32> to vector<8x256xf32>
    %1323 = arith.mulf %1321, %1322 : vector<8x256xf32>
    %c239_i32_206 = arith.constant 239 : i32
    %1324 = tpu.dynamic_rotate %704 by %c239_i32_206 dim 1 : vector<8x256xf32>, i32 -> vector<8x256xf32>
    %1325 = vector.broadcast %1320 : vector<1x256xf32> to vector<8x256xf32>
    %1326 = arith.mulf %1324, %1325 : vector<8x256xf32>
    %c239_i32_207 = arith.constant 239 : i32
    %1327 = tpu.dynamic_rotate %706 by %c239_i32_207 dim 1 : vector<8x256xf32>, i32 -> vector<8x256xf32>
    %1328 = vector.broadcast %1320 : vector<1x256xf32> to vector<8x256xf32>
    %1329 = arith.mulf %1327, %1328 : vector<8x256xf32>
    %c239_i32_208 = arith.constant 239 : i32
    %1330 = tpu.dynamic_rotate %708 by %c239_i32_208 dim 1 : vector<8x256xf32>, i32 -> vector<8x256xf32>
    %1331 = vector.broadcast %1320 : vector<1x256xf32> to vector<8x256xf32>
    %1332 = arith.mulf %1330, %1331 : vector<8x256xf32>
    %c32_209 = arith.constant 32 : index
    %1333 = memref.load %arg4[%c32_209] : memref<144xf32, #tpu.memory_space<smem>>
    %1334 = vector.broadcast %1333 : f32 to vector<8x256xf32>
    %1335 = arith.mulf %1334, %1323 : vector<8x256xf32>
    %1336 = arith.addf %1307, %1335 : vector<8x256xf32>
    %c68_210 = arith.constant 68 : index
    %1337 = memref.load %arg4[%c68_210] : memref<144xf32, #tpu.memory_space<smem>>
    %1338 = vector.broadcast %1337 : f32 to vector<8x256xf32>
    %1339 = arith.mulf %1338, %1323 : vector<8x256xf32>
    %1340 = arith.addf %1311, %1339 : vector<8x256xf32>
    %c104_211 = arith.constant 104 : index
    %1341 = memref.load %arg4[%c104_211] : memref<144xf32, #tpu.memory_space<smem>>
    %1342 = vector.broadcast %1341 : f32 to vector<8x256xf32>
    %1343 = arith.mulf %1342, %1323 : vector<8x256xf32>
    %1344 = arith.addf %1315, %1343 : vector<8x256xf32>
    %c140_212 = arith.constant 140 : index
    %1345 = memref.load %arg4[%c140_212] : memref<144xf32, #tpu.memory_space<smem>>
    %1346 = vector.broadcast %1345 : f32 to vector<8x256xf32>
    %1347 = arith.mulf %1346, %1323 : vector<8x256xf32>
    %1348 = arith.addf %1319, %1347 : vector<8x256xf32>
    %c33_213 = arith.constant 33 : index
    %1349 = memref.load %arg4[%c33_213] : memref<144xf32, #tpu.memory_space<smem>>
    %1350 = vector.broadcast %1349 : f32 to vector<8x256xf32>
    %1351 = arith.mulf %1350, %1326 : vector<8x256xf32>
    %1352 = arith.addf %1336, %1351 : vector<8x256xf32>
    %c69_214 = arith.constant 69 : index
    %1353 = memref.load %arg4[%c69_214] : memref<144xf32, #tpu.memory_space<smem>>
    %1354 = vector.broadcast %1353 : f32 to vector<8x256xf32>
    %1355 = arith.mulf %1354, %1326 : vector<8x256xf32>
    %1356 = arith.addf %1340, %1355 : vector<8x256xf32>
    %c105_215 = arith.constant 105 : index
    %1357 = memref.load %arg4[%c105_215] : memref<144xf32, #tpu.memory_space<smem>>
    %1358 = vector.broadcast %1357 : f32 to vector<8x256xf32>
    %1359 = arith.mulf %1358, %1326 : vector<8x256xf32>
    %1360 = arith.addf %1344, %1359 : vector<8x256xf32>
    %c141_216 = arith.constant 141 : index
    %1361 = memref.load %arg4[%c141_216] : memref<144xf32, #tpu.memory_space<smem>>
    %1362 = vector.broadcast %1361 : f32 to vector<8x256xf32>
    %1363 = arith.mulf %1362, %1326 : vector<8x256xf32>
    %1364 = arith.addf %1348, %1363 : vector<8x256xf32>
    %c34_217 = arith.constant 34 : index
    %1365 = memref.load %arg4[%c34_217] : memref<144xf32, #tpu.memory_space<smem>>
    %1366 = vector.broadcast %1365 : f32 to vector<8x256xf32>
    %1367 = arith.mulf %1366, %1329 : vector<8x256xf32>
    %1368 = arith.addf %1352, %1367 : vector<8x256xf32>
    %c70_218 = arith.constant 70 : index
    %1369 = memref.load %arg4[%c70_218] : memref<144xf32, #tpu.memory_space<smem>>
    %1370 = vector.broadcast %1369 : f32 to vector<8x256xf32>
    %1371 = arith.mulf %1370, %1329 : vector<8x256xf32>
    %1372 = arith.addf %1356, %1371 : vector<8x256xf32>
    %c106_219 = arith.constant 106 : index
    %1373 = memref.load %arg4[%c106_219] : memref<144xf32, #tpu.memory_space<smem>>
    %1374 = vector.broadcast %1373 : f32 to vector<8x256xf32>
    %1375 = arith.mulf %1374, %1329 : vector<8x256xf32>
    %1376 = arith.addf %1360, %1375 : vector<8x256xf32>
    %c142_220 = arith.constant 142 : index
    %1377 = memref.load %arg4[%c142_220] : memref<144xf32, #tpu.memory_space<smem>>
    %1378 = vector.broadcast %1377 : f32 to vector<8x256xf32>
    %1379 = arith.mulf %1378, %1329 : vector<8x256xf32>
    %1380 = arith.addf %1364, %1379 : vector<8x256xf32>
    %c35_221 = arith.constant 35 : index
    %1381 = memref.load %arg4[%c35_221] : memref<144xf32, #tpu.memory_space<smem>>
    %1382 = vector.broadcast %1381 : f32 to vector<8x256xf32>
    %1383 = arith.mulf %1382, %1332 : vector<8x256xf32>
    %1384 = arith.addf %1368, %1383 : vector<8x256xf32>
    %c71_222 = arith.constant 71 : index
    %1385 = memref.load %arg4[%c71_222] : memref<144xf32, #tpu.memory_space<smem>>
    %1386 = vector.broadcast %1385 : f32 to vector<8x256xf32>
    %1387 = arith.mulf %1386, %1332 : vector<8x256xf32>
    %1388 = arith.addf %1372, %1387 : vector<8x256xf32>
    %c107_223 = arith.constant 107 : index
    %1389 = memref.load %arg4[%c107_223] : memref<144xf32, #tpu.memory_space<smem>>
    %1390 = vector.broadcast %1389 : f32 to vector<8x256xf32>
    %1391 = arith.mulf %1390, %1332 : vector<8x256xf32>
    %1392 = arith.addf %1376, %1391 : vector<8x256xf32>
    %c143_224 = arith.constant 143 : index
    %1393 = memref.load %arg4[%c143_224] : memref<144xf32, #tpu.memory_space<smem>>
    %1394 = vector.broadcast %1393 : f32 to vector<8x256xf32>
    %1395 = arith.mulf %1394, %1332 : vector<8x256xf32>
    %1396 = arith.addf %1380, %1395 : vector<8x256xf32>
    %1397 = arith.addf %1384, %3 : vector<8x256xf32>
    %cst_225 = arith.constant 0.000000e+00 : f32
    %1398 = vector.broadcast %cst_225 : f32 to vector<8x256xf32>
    %1399 = arith.maximumf %1397, %1398 : vector<8x256xf32>
    %c0_226 = arith.constant 0 : index
    %1400 = arith.index_cast %c0_i32 : i32 to index
    %c0_227 = arith.constant 0 : index
    %c0_228 = arith.constant 0 : index
    %1401 = vector.load %arg7[%c0_226, %1400, %c0_227, %c0_228] : memref<4x1x8x256xf32, #tpu.memory_space<vmem>>, vector<1x1x8x256xf32>
    %1402 = vector.shape_cast %1401 : vector<1x1x8x256xf32> to vector<8x256xf32>
    %1403 = vector.shape_cast %1399 : vector<8x256xf32> to vector<1x1x8x256xf32>
    tpu.vector_store %arg7[%c0_226, %1400, %c0_227, %c0_228], %1403 {strides = array<i32>} : memref<4x1x8x256xf32, #tpu.memory_space<vmem>>, vector<1x1x8x256xf32>,
    %1404 = arith.addf %1388, %6 : vector<8x256xf32>
    %cst_229 = arith.constant 0.000000e+00 : f32
    %1405 = vector.broadcast %cst_229 : f32 to vector<8x256xf32>
    %1406 = arith.maximumf %1404, %1405 : vector<8x256xf32>
    %c1_230 = arith.constant 1 : index
    %1407 = arith.index_cast %c0_i32 : i32 to index
    %c0_231 = arith.constant 0 : index
    %c0_232 = arith.constant 0 : index
    %1408 = vector.load %arg7[%c1_230, %1407, %c0_231, %c0_232] : memref<4x1x8x256xf32, #tpu.memory_space<vmem>>, vector<1x1x8x256xf32>
    %1409 = vector.shape_cast %1408 : vector<1x1x8x256xf32> to vector<8x256xf32>
    %1410 = vector.shape_cast %1406 : vector<8x256xf32> to vector<1x1x8x256xf32>
    tpu.vector_store %arg7[%c1_230, %1407, %c0_231, %c0_232], %1410 {strides = array<i32>} : memref<4x1x8x256xf32, #tpu.memory_space<vmem>>, vector<1x1x8x256xf32>,
    %1411 = arith.addf %1392, %9 : vector<8x256xf32>
    %cst_233 = arith.constant 0.000000e+00 : f32
    %1412 = vector.broadcast %cst_233 : f32 to vector<8x256xf32>
    %1413 = arith.maximumf %1411, %1412 : vector<8x256xf32>
    %c2_234 = arith.constant 2 : index
    %1414 = arith.index_cast %c0_i32 : i32 to index
    %c0_235 = arith.constant 0 : index
    %c0_236 = arith.constant 0 : index
    %1415 = vector.load %arg7[%c2_234, %1414, %c0_235, %c0_236] : memref<4x1x8x256xf32, #tpu.memory_space<vmem>>, vector<1x1x8x256xf32>
    %1416 = vector.shape_cast %1415 : vector<1x1x8x256xf32> to vector<8x256xf32>
    %1417 = vector.shape_cast %1413 : vector<8x256xf32> to vector<1x1x8x256xf32>
    tpu.vector_store %arg7[%c2_234, %1414, %c0_235, %c0_236], %1417 {strides = array<i32>} : memref<4x1x8x256xf32, #tpu.memory_space<vmem>>, vector<1x1x8x256xf32>,
    %1418 = arith.addf %1396, %12 : vector<8x256xf32>
    %cst_237 = arith.constant 0.000000e+00 : f32
    %1419 = vector.broadcast %cst_237 : f32 to vector<8x256xf32>
    %1420 = arith.maximumf %1418, %1419 : vector<8x256xf32>
    %c3_238 = arith.constant 3 : index
    %1421 = arith.index_cast %c0_i32 : i32 to index
    %c0_239 = arith.constant 0 : index
    %c0_240 = arith.constant 0 : index
    %1422 = vector.load %arg7[%c3_238, %1421, %c0_239, %c0_240] : memref<4x1x8x256xf32, #tpu.memory_space<vmem>>, vector<1x1x8x256xf32>
    %1423 = vector.shape_cast %1422 : vector<1x1x8x256xf32> to vector<8x256xf32>
    %1424 = vector.shape_cast %1420 : vector<8x256xf32> to vector<1x1x8x256xf32>
    tpu.vector_store %arg7[%c3_238, %1421, %c0_239, %c0_240], %1424 {strides = array<i32>} : memref<4x1x8x256xf32, #tpu.memory_space<vmem>>, vector<1x1x8x256xf32>,
    %c1_i32_241 = arith.constant 1 : i32
    return
  }
  func.func @transform_0(%arg0: i32) -> (i32, i32, i32, i32) {
    %c0_i32 = arith.constant 0 : i32
    %c0_i32_0 = arith.constant 0 : i32
    %c0_i32_1 = arith.constant 0 : i32
    %c0_i32_2 = arith.constant 0 : i32
    return %c0_i32, %arg0, %c0_i32_0, %c0_i32_1 : i32, i32, i32, i32
  }
  func.func @transform_1(%arg0: i32) -> i32 {
    %c0_i32 = arith.constant 0 : i32
    %c0_i32_0 = arith.constant 0 : i32
    return %c0_i32 : i32
  }
  func.func @transform_2(%arg0: i32) -> i32 {
    %c0_i32 = arith.constant 0 : i32
    %c0_i32_0 = arith.constant 0 : i32
    return %c0_i32 : i32
  }
  func.func @transform_3(%arg0: i32) -> i32 {
    %c0_i32 = arith.constant 0 : i32
    %c0_i32_0 = arith.constant 0 : i32
    return %c0_i32 : i32
  }
  func.func @transform_4(%arg0: i32) -> i32 {
    %c0_i32 = arith.constant 0 : i32
    %c0_i32_0 = arith.constant 0 : i32
    return %c0_i32 : i32
  }
  func.func @transform_5(%arg0: i32) -> (i32, i32) {
    %c0_i32 = arith.constant 0 : i32
    %c0_i32_0 = arith.constant 0 : i32
    %c0_i32_1 = arith.constant 0 : i32
    return %c0_i32, %c0_i32_0 : i32, i32
  }
  func.func @transform_6(%arg0: i32) -> (i32, i32, i32, i32) {
    %c0_i32 = arith.constant 0 : i32
    %c0_i32_0 = arith.constant 0 : i32
    %c0_i32_1 = arith.constant 0 : i32
    %c0_i32_2 = arith.constant 0 : i32
    return %c0_i32, %arg0, %c0_i32_0, %c0_i32_1 : i32, i32, i32, i32
  }
}

</mosaic_0001>

<llo_original>
// kernel: basic_block_forward.1
$region0: #{basic_block_forward.1}
  #allocation0 [shape = 'u32[]', space=smem, size = 0x4, offset = 0x4, fixed_abs, tag = 'smem constant byte address 0x4 - core index']
  #allocation1 [shape = 'u32[144,128]{1,0:T(1,128)}', space=vmem, size = 0x12000, scoped, tag = 'internal scratch']
  %s0 = inlined_call_operand.vmem [shape: f32[4,2,8,256], index: 0, kind: input, shape index: {}]
  %s1 = inlined_call_operand.vmem [shape: f32[144], index: 1, kind: input, shape index: {}]
  %s2 = inlined_call_operand.vmem [shape: f32[4], index: 2, kind: input, shape index: {}]
  %s3 = inlined_call_operand.vmem [shape: f32[144], index: 3, kind: input, shape index: {}]
  %s4 = inlined_call_operand.vmem [shape: f32[4], index: 4, kind: input, shape index: {}]
  %s5 = inlined_call_operand.vmem [shape: f32[9,256], index: 5, kind: input, shape index: {}]
  %s6 = inlined_call_operand.vmem [shape: f32[4,2,8,256], index: 6, kind: output, shape index: {}]
  %s7 = sld [smem:[#allocation0]]
  $region115: #{basic_block_forward.1} parent=0
    _
  %s9 = ssub.s32 1, %s7
  %s10 = scalar_select 0, %s9, %s7
  $region1: #{basic_block_forward.1} parent=0
    #allocation2 [shape = 'u8[65536]{0}', space=vmem, size = 0x10000, scoped, tag = 'input window, operand 0']
    #allocation3 [shape = 'u8[1024]{0}', space=smem, size = 0x400, scoped, tag = 'input window, operand 1, single buffered']
    #allocation4 [shape = 's32[2]{0}', space=sflag, size = 0x8, scoped, tag = 'scoped memory for basic_block_forward.1']
    #allocation5 [shape = 'u8[512]{0}', space=smem, size = 0x200, scoped, tag = 'input window, operand 2, single buffered']
    #allocation6 [shape = 's32[1]{0}', space=sflag, size = 0x4, scoped, tag = 'scoped memory for basic_block_forward.1']
    #allocation7 [shape = 'u8[1024]{0}', space=smem, size = 0x400, scoped, tag = 'input window, operand 3, single buffered']
    #allocation8 [shape = 'u8[512]{0}', space=smem, size = 0x200, scoped, tag = 'input window, operand 4, single buffered']
    #allocation9 [shape = 's32[1]{0}', space=sflag, size = 0x4, scoped, tag = 'scoped memory for basic_block_forward.1']
    #allocation10 [shape = 'u8[65536]{0}', space=vmem, size = 0x10000, scoped, tag = 'output window, operand 0']
    %11 = vsyncpa [#allocation4], 0
    %12 = vsyncpa [#allocation6], 0
    %13 = vsyncpa [#allocation9], 0
    loop: start=0, step=1, limit=4
    $region2: #{basic_block_forward.1} parent=1 // loop_pre_header
      _
    $region3: #{basic_block_forward.1} parent=1 // loop_header
      %s15 = sphi 0, %s19
      %p16 = scmp.ge.s32.totalorder %s15, 4
      %s25 = sphi 0, %s27
      %s28 = sphi 0, %s25
      %s29 = sphi 0, %s28
      %s45 = sphi 0, %s29
      %s49 = sphi 0, %s49
      %s51 = sphi 0, %s49
      %s52 = sphi 0, %s51
      %s66 = sphi 0, %s52
      %s70 = sphi 0, %s70
      %s72 = sphi 0, %s70
      %s73 = sphi 0, %s72
      %s87 = sphi 0, %s73
      %s91 = sphi 0, %s91
      %s93 = sphi 0, %s91
      %s94 = sphi 0, %s93
      %s108 = sphi 0, %s94
      %s112 = sphi 0, %s112
      %s114 = sphi 0, %s112
      %s115 = sphi 0, %s114
      %s129 = sphi 0, %s115
      %s133 = sphi 0, %s133
      %s135 = sphi 0, %s133
      %s136 = sphi 0, %s135
      %s150 = sphi 0, %s136
      %s156 = sphi 0, %s158
      %s159 = sphi 0, %s156
      %s160 = sphi 0, %s159
      %s176 = sphi 0, %s160
    $region4: #{basic_block_forward.1} parent=1 // loop_header_branch
      %18 = sbr.rel (%p16) target = $region8
    $region5: #{basic_block_forward.1} parent=1 // loop_body
      %s20 = ssub.s32 %s15, 1
      %s21 = ssub.s32 %s15, 2
      %s22 = sadd.s32 %s15, 1
      %s23 = ssub.s32 %s15, %s22
      %p24 = scmp.eq.s32.totalorder %s23, 0
      %s26 = sadd.s32 %s25, 1
      %s27 = scalar_select %p24, %s25, %s26
      %p30 = pneg %p24
      %p31 = scmp.eq.s32.totalorder %s15, 1
      %p32 = por %p30, %p31
      %p33 = scmp.ne.s32.totalorder %s25, %s28
      %p34 = scmp.eq.s32.totalorder %s15, 0
      %p35 = por %p33, %p34
      %p36 = scmp.ne.s32.totalorder %s25, %s28
      %p37 = scmp.eq.s32.totalorder %s20, 1
      %p38 = por %p36, %p37
      %p39 = scmp.ne.s32.totalorder %s28, %s29
      %p40 = scmp.eq.s32.totalorder %s20, 0
      %p41 = por %p39, %p40
      %p42 = scmp.ne.s32.totalorder %s28, %s29
      %p43 = scmp.eq.s32.totalorder %s21, 1
      %p44 = por %p42, %p43
      %p46 = scmp.ne.s32.totalorder %s29, %s45
      %p47 = scmp.eq.s32.totalorder %s21, 0
      %p48 = por %p46, %p47
      %s50 = sadd.s32 %s49, 1
      %p53 = scmp.eq.s32.totalorder %s15, 1
      %p54 = scmp.ne.s32.totalorder %s49, %s51
      %p55 = scmp.eq.s32.totalorder %s15, 0
      %p56 = por %p54, %p55
      %p57 = scmp.ne.s32.totalorder %s49, %s51
      %p58 = scmp.eq.s32.totalorder %s20, 1
      %p59 = por %p57, %p58
      %p60 = scmp.ne.s32.totalorder %s51, %s52
      %p61 = scmp.eq.s32.totalorder %s20, 0
      %p62 = por %p60, %p61
      %p63 = scmp.ne.s32.totalorder %s51, %s52
      %p64 = scmp.eq.s32.totalorder %s21, 1
      %p65 = por %p63, %p64
      %p67 = scmp.ne.s32.totalorder %s52, %s66
      %p68 = scmp.eq.s32.totalorder %s21, 0
      %p69 = por %p67, %p68
      %s71 = sadd.s32 %s70, 1
      %p74 = scmp.eq.s32.totalorder %s15, 1
      %p75 = scmp.ne.s32.totalorder %s70, %s72
      %p76 = scmp.eq.s32.totalorder %s15, 0
      %p77 = por %p75, %p76
      %p78 = scmp.ne.s32.totalorder %s70, %s72
      %p79 = scmp.eq.s32.totalorder %s20, 1
      %p80 = por %p78, %p79
      %p81 = scmp.ne.s32.totalorder %s72, %s73
      %p82 = scmp.eq.s32.totalorder %s20, 0
      %p83 = por %p81, %p82
      %p84 = scmp.ne.s32.totalorder %s72, %s73
      %p85 = scmp.eq.s32.totalorder %s21, 1
      %p86 = por %p84, %p85
      %p88 = scmp.ne.s32.totalorder %s73, %s87
      %p89 = scmp.eq.s32.totalorder %s21, 0
      %p90 = por %p88, %p89
      %s92 = sadd.s32 %s91, 1
      %p95 = scmp.eq.s32.totalorder %s15, 1
      %p96 = scmp.ne.s32.totalorder %s91, %s93
      %p97 = scmp.eq.s32.totalorder %s15, 0
      %p98 = por %p96, %p97
      %p99 = scmp.ne.s32.totalorder %s91, %s93
      %p100 = scmp.eq.s32.totalorder %s20, 1
      %p101 = por %p99, %p100
      %p102 = scmp.ne.s32.totalorder %s93, %s94
      %p103 = scmp.eq.s32.totalorder %s20, 0
      %p104 = por %p102, %p103
      %p105 = scmp.ne.s32.totalorder %s93, %s94
      %p106 = scmp.eq.s32.totalorder %s21, 1
      %p107 = por %p105, %p106
      %p109 = scmp.ne.s32.totalorder %s94, %s108
      %p110 = scmp.eq.s32.totalorder %s21, 0
      %p111 = por %p109, %p110
      %s113 = sadd.s32 %s112, 1
      %p116 = scmp.eq.s32.totalorder %s15, 1
      %p117 = scmp.ne.s32.totalorder %s112, %s114
      %p118 = scmp.eq.s32.totalorder %s15, 0
      %p119 = por %p117, %p118
      %p120 = scmp.ne.s32.totalorder %s112, %s114
      %p121 = scmp.eq.s32.totalorder %s20, 1
      %p122 = por %p120, %p121
      %p123 = scmp.ne.s32.totalorder %s114, %s115
      %p124 = scmp.eq.s32.totalorder %s20, 0
      %p125 = por %p123, %p124
      %p126 = scmp.ne.s32.totalorder %s114, %s115
      %p127 = scmp.eq.s32.totalorder %s21, 1
      %p128 = por %p126, %p127
      %p130 = scmp.ne.s32.totalorder %s115, %s129
      %p131 = scmp.eq.s32.totalorder %s21, 0
      %p132 = por %p130, %p131
      %s134 = sadd.s32 %s133, 1
      %p137 = scmp.eq.s32.totalorder %s15, 1
      %p138 = scmp.ne.s32.totalorder %s133, %s135
      %p139 = scmp.eq.s32.totalorder %s15, 0
      %p140 = por %p138, %p139
      %p141 = scmp.ne.s32.totalorder %s133, %s135
      %p142 = scmp.eq.s32.totalorder %s20, 1
      %p143 = por %p141, %p142
      %p144 = scmp.ne.s32.totalorder %s135, %s136
      %p145 = scmp.eq.s32.totalorder %s20, 0
      %p146 = por %p144, %p145
      %p147 = scmp.ne.s32.totalorder %s135, %s136
      %p148 = scmp.eq.s32.totalorder %s21, 1
      %p149 = por %p147, %p148
      %p151 = scmp.ne.s32.totalorder %s136, %s150
      %p152 = scmp.eq.s32.totalorder %s21, 0
      %p153 = por %p151, %p152
      %s154 = ssub.s32 %s15, %s22
      %p155 = scmp.eq.s32.totalorder %s154, 0
      %s157 = sadd.s32 %s156, 1
      %s158 = scalar_select %p155, %s156, %s157
      %p161 = pneg %p155
      %p162 = scmp.eq.s32.totalorder %s15, 1
      %p163 = por %p161, %p162
      %p164 = scmp.ne.s32.totalorder %s156, %s159
      %p165 = scmp.eq.s32.totalorder %s15, 0
      %p166 = por %p164, %p165
      %p167 = scmp.ne.s32.totalorder %s156, %s159
      %p168 = scmp.eq.s32.totalorder %s20, 1
      %p169 = por %p167, %p168
      %p170 = scmp.ne.s32.totalorder %s159, %s160
      %p171 = scmp.eq.s32.totalorder %s20, 0
      %p172 = por %p170, %p171
      %p173 = scmp.ne.s32.totalorder %s159, %s160
      %p174 = scmp.eq.s32.totalorder %s21, 1
      %p175 = por %p173, %p174
      %p177 = scmp.ne.s32.totalorder %s160, %s176
      %p178 = scmp.eq.s32.totalorder %s21, 0
      %p179 = por %p177, %p178
      %p180 = scmp.le.s32.totalorder 1, %s15
      %p181 = scmp.lt.s32.totalorder %s15, 3
      %p182 = pnand %p180, %p181
      %p183 = pneg %p182
      // Predicated region
      $region9: #{basic_block_forward.1} parent=5 // pred_check
        _
      $region10: #{basic_block_forward.1} parent=5 // pred_check_branch
        %185 = sbr.rel (%p182) target = $region12
      $region11: #{basic_block_forward.1} parent=5 // pred_region
        %s186 = ssub.s32 %s15, 1
        // Predicated region
        $region13: #{basic_block_forward.1} parent=11 // pred_check
          %p187 = pneg %p62
        $region14: #{basic_block_forward.1} parent=11 // pred_check_branch
          %189 = sbr.rel (%p187) target = $region16
        $region15: #{basic_block_forward.1} parent=11 // pred_region
          %s191 = ssub.s32 32, 32
          %192 = vsyncadd [#allocation4], %s191
          %s194 = sshll.u32 %s1, 4
          %s195 = int_to_ptr.vmem [resolvable:$true] %s194
          %197 = dma.vmem_to_smem %s195, 32, [#allocation3], [#allocation4]
        $region16: #{basic_block_forward.1} parent=11 // pred_fallthru
          _
        // Predicated region
        $region17: #{basic_block_forward.1} parent=11 // pred_check
          %p198 = pneg %p83
        $region18: #{basic_block_forward.1} parent=11 // pred_check_branch
          %200 = sbr.rel (%p198) target = $region20
        $region19: #{basic_block_forward.1} parent=11 // pred_region
          %s202 = ssub.s32 16, 16
          %203 = vsyncadd [#allocation6], %s202
          %s205 = sshll.u32 %s2, 4
          %s206 = int_to_ptr.vmem [resolvable:$true] %s205
          %208 = dma.vmem_to_smem %s206, 16, [#allocation5], [#allocation6]
        $region20: #{basic_block_forward.1} parent=11 // pred_fallthru
          _
        // Predicated region
        $region21: #{basic_block_forward.1} parent=11 // pred_check
          %p209 = pneg %p104
        $region22: #{basic_block_forward.1} parent=11 // pred_check_branch
          %211 = sbr.rel (%p209) target = $region24
        $region23: #{basic_block_forward.1} parent=11 // pred_region
          %s213 = ssub.s32 32, 32
          %214 = vsyncadd [#allocation6], %s213
          %s216 = sshll.u32 %s3, 4
          %s217 = int_to_ptr.vmem [resolvable:$true] %s216
          %219 = dma.vmem_to_smem %s217, 32, [#allocation7], [#allocation6]
        $region24: #{basic_block_forward.1} parent=11 // pred_fallthru
          _
        // Predicated region
        $region25: #{basic_block_forward.1} parent=11 // pred_check
          %p220 = pneg %p125
        $region26: #{basic_block_forward.1} parent=11 // pred_check_branch
          %222 = sbr.rel (%p220) target = $region28
        $region27: #{basic_block_forward.1} parent=11 // pred_region
          %s224 = ssub.s32 16, 16
          %225 = vsyncadd [#allocation9], %s224
          %s227 = sshll.u32 %s4, 4
          %s228 = int_to_ptr.vmem [resolvable:$true] %s227
          %230 = dma.vmem_to_smem %s228, 16, [#allocation8], [#allocation9]
        $region28: #{basic_block_forward.1} parent=11 // pred_fallthru
          _
        // Predicated region
        $region29: #{basic_block_forward.1} parent=11 // pred_check
          %p231 = pneg %p146
        $region30: #{basic_block_forward.1} parent=11 // pred_check_branch
          %233 = sbr.rel (%p231) target = $region32
        $region31: #{basic_block_forward.1} parent=11 // pred_region
          _
        $region32: #{basic_block_forward.1} parent=11 // pred_fallthru
          _
      $region12: #{basic_block_forward.1} parent=5 // pred_fallthru
        _
      %p234 = scmp.lt.s32.totalorder %s15, 2
      // Predicated region
      $region33: #{basic_block_forward.1} parent=5 // pred_check
        %p235 = pneg %p234
      $region34: #{basic_block_forward.1} parent=5 // pred_check_branch
        %237 = sbr.rel (%p235) target = $region36
      $region35: #{basic_block_forward.1} parent=5 // pred_region
        // Predicated region
        $region37: #{basic_block_forward.1} parent=35 // pred_check
          %p238 = pneg %p35
        $region38: #{basic_block_forward.1} parent=35 // pred_check_branch
          %240 = sbr.rel (%p238) target = $region40
        $region39: #{basic_block_forward.1} parent=35 // pred_region
          %s241 = sand.u32 %s25, 1
          %s242 = sand.u32 %s25, 1
          %s243 = smul.addr %s242, 64
          %s244 = scalar_lea.vmem [#allocation2], %s243
          %s245 = smul.addr %s15, 2
          %s246 = smul.addr %s245, 8
          %s247 = scalar_lea.vmem %s0, %s246
          // Predicated region
          $region41: #{basic_block_forward.1} parent=39 // pred_check
            _
          $region42: #{basic_block_forward.1} parent=39 // pred_check_branch
            %249 = sbr.rel (0) target = $region44
          $region43: #{basic_block_forward.1} parent=39 // pred_region
            // Predicated region
            $region45: #{basic_block_forward.1} parent=43 // pred_check
              _
            $region46: #{basic_block_forward.1} parent=43 // pred_check_branch
              %251 = sbr.rel (0) target = $region48
            $region47: #{basic_block_forward.1} parent=43 // pred_region
              loop: start=0, step=1, limit=1
              $region49: #{basic_block_forward.1} parent=47 // loop_pre_header
                _
              $region50: #{basic_block_forward.1} parent=47 // loop_header
                %s253 = sphi 0, %s257
                %p254 = scmp.ge.s32.totalorder %s253, 1
                %s258 = sphi %s247, %s247
                %s259 = sphi %s244, %s244
              $region51: #{basic_block_forward.1} parent=47 // loop_header_branch
                %256 = sbr.rel (%p254) target = $region55
              $region52: #{basic_block_forward.1} parent=47 // loop_body
                %v260 = vld [vmem:[%s258] sm:$0xff]
                %261 = vst [vmem:[%s259] sm:$0xff] %v260
                %v262 = vld [vmem:[%s258 + $0x8] sm:$0xff]
                %263 = vst [vmem:[%s259 + $0x8] sm:$0xff] %v262
                %v264 = vld [vmem:[%s258 + $0x20] sm:$0xff]
                %265 = vst [vmem:[%s259 + $0x10] sm:$0xff] %v264
                %v266 = vld [vmem:[%s258 + $0x28] sm:$0xff]
                %267 = vst [vmem:[%s259 + $0x18] sm:$0xff] %v266
                %v268 = vld [vmem:[%s258 + $0x40] sm:$0xff]
                %269 = vst [vmem:[%s259 + $0x20] sm:$0xff] %v268
                %v270 = vld [vmem:[%s258 + $0x48] sm:$0xff]
                %271 = vst [vmem:[%s259 + $0x28] sm:$0xff] %v270
                %v272 = vld [vmem:[%s258 + $0x60] sm:$0xff]
                %273 = vst [vmem:[%s259 + $0x30] sm:$0xff] %v272
                %v274 = vld [vmem:[%s258 + $0x68] sm:$0xff]
                %275 = vst [vmem:[%s259 + $0x38] sm:$0xff] %v274
              $region53: #{basic_block_forward.1} parent=47 // loop_footer
                %s257 = sadd.s32 1, %s253
              $region54: #{basic_block_forward.1} parent=47 // loop_footer_branch
                %252 = sbr.rel target = $region50
              $region55: #{basic_block_forward.1} parent=47 // loop_exit
                _
            $region48: #{basic_block_forward.1} parent=43 // pred_fallthru
              _
            // Predicated region
            $region56: #{basic_block_forward.1} parent=43 // pred_check
              _
            $region57: #{basic_block_forward.1} parent=43 // pred_check_branch
              %277 = sbr.rel target = $region59
            $region58: #{basic_block_forward.1} parent=43 // pred_region
              _
            $region59: #{basic_block_forward.1} parent=43 // pred_fallthru
              _
          $region44: #{basic_block_forward.1} parent=39 // pred_fallthru
            _
          %278 = vnop
        $region40: #{basic_block_forward.1} parent=35 // pred_fallthru
          _
      $region36: #{basic_block_forward.1} parent=5 // pred_fallthru
        _
      %p279 = scmp.le.s32.totalorder 1, %s15
      %p280 = scmp.lt.s32.totalorder %s15, 3
      %p281 = pnand %p279, %p280
      %p282 = pneg %p281
      // Predicated region
      $region60: #{basic_block_forward.1} parent=5 // pred_check
        _
      $region61: #{basic_block_forward.1} parent=5 // pred_check_branch
        %284 = sbr.rel (%p281) target = $region63
      $region62: #{basic_block_forward.1} parent=5 // pred_region
        %s285 = ssub.s32 %s15, 1
        %s286 = sand.u32 %s28, 1
        %s287 = sand.u32 %s28, 1
        %s288 = smul.addr %s287, 64
        %s289 = scalar_lea.vmem [#allocation2], %s288
        // Predicated region
        $region64: #{basic_block_forward.1} parent=62 // pred_check
          %p290 = pneg %p41
        $region65: #{basic_block_forward.1} parent=62 // pred_check_branch
          %292 = sbr.rel (%p290) target = $region67
        $region66: #{basic_block_forward.1} parent=62 // pred_region
          _
        $region67: #{basic_block_forward.1} parent=62 // pred_fallthru
          _
        // Predicated region
        $region68: #{basic_block_forward.1} parent=62 // pred_check
          %p293 = pneg %p62
        $region69: #{basic_block_forward.1} parent=62 // pred_check_branch
          %295 = sbr.rel (%p293) target = $region71
        $region70: #{basic_block_forward.1} parent=62 // pred_region
          %296 = dma.done [#allocation4], 32
        $region71: #{basic_block_forward.1} parent=62 // pred_fallthru
          _
        // Predicated region
        $region72: #{basic_block_forward.1} parent=62 // pred_check
          %p297 = pneg %p83
        $region73: #{basic_block_forward.1} parent=62 // pred_check_branch
          %299 = sbr.rel (%p297) target = $region75
        $region74: #{basic_block_forward.1} parent=62 // pred_region
          %300 = dma.done [#allocation6], 16
        $region75: #{basic_block_forward.1} parent=62 // pred_fallthru
          _
        // Predicated region
        $region76: #{basic_block_forward.1} parent=62 // pred_check
          %p301 = pneg %p104
        $region77: #{basic_block_forward.1} parent=62 // pred_check_branch
          %303 = sbr.rel (%p301) target = $region79
        $region78: #{basic_block_forward.1} parent=62 // pred_region
          %304 = dma.done [#allocation6], 32
        $region79: #{basic_block_forward.1} parent=62 // pred_fallthru
          _
        // Predicated region
        $region80: #{basic_block_forward.1} parent=62 // pred_check
          %p305 = pneg %p125
        $region81: #{basic_block_forward.1} parent=62 // pred_check_branch
          %307 = sbr.rel (%p305) target = $region83
        $region82: #{basic_block_forward.1} parent=62 // pred_region
          %308 = dma.done [#allocation9], 16
        $region83: #{basic_block_forward.1} parent=62 // pred_fallthru
          _
        %309 = sfence
        %s310 = sand.u32 %s28, 1
        %s311 = sand.u32 %s28, 1
        %s312 = smul.addr %s311, 64
        %s313 = scalar_lea.vmem [#allocation2], %s312
        %p314 = pneg %p41
        %p315 = pneg %p38
        %p316 = pneg %p62
        %p317 = pneg %p59
        %p318 = pneg %p83
        %p319 = pneg %p80
        %p320 = pneg %p104
        %p321 = pneg %p101
        %p322 = pneg %p125
        %p323 = pneg %p122
        %p324 = pneg %p146
        %p325 = pneg %p143
        %p326 = pneg %p172
        %p327 = pneg %p169
        %s328 = sand.u32 %s159, 1
        %s329 = sand.u32 %s159, 1
        %s330 = smul.addr %s329, 64
        %s331 = scalar_lea.vmem [#allocation10], %s330
        %v332 = vld [vmem:[%s5] sm:$0xff]
        %v333 = vld [vmem:[%s5 + $0x8] sm:$0xff]
        %v334 = vld [vmem:[%s5 + $0x10] sm:$0x1]
        %v335 = vld [vmem:[%s5 + $0x18] sm:$0x1]
        %v336 = vld [vmem:[%s289] sm:$0xff]
        %v337 = vld [vmem:[%s289 + $0x8] sm:$0xff]
        %s338 = scalar_lea.vmem %s289, 16 [#allocation2]
        %v339 = vld [vmem:[%s338] sm:$0xff]
        %v340 = vld [vmem:[%s338 + $0x8] sm:$0xff]
        %s341 = scalar_lea.vmem %s289, 32 [#allocation2]
        %v342 = vld [vmem:[%s341] sm:$0xff]
        %v343 = vld [vmem:[%s341 + $0x8] sm:$0xff]
        %s344 = scalar_lea.vmem %s289, 48 [#allocation2]
        %v345 = vld [vmem:[%s344] sm:$0xff]
        %v346 = vld [vmem:[%s344 + $0x8] sm:$0xff]
        %s347 = sld [smem:[#allocation5]]
        %v348 = vstv %s347
        %s349 = sld [smem:[#allocation5 + $0x1]]
        %v350 = vstv %s349
        %s351 = sld [smem:[#allocation5 + $0x2]]
        %v352 = vstv %s351
        %s353 = sld [smem:[#allocation5 + $0x3]]
        %v354 = vstv %s353
        %355 = vrot.lane.b32.xlu0 %v336, 17
        %v356 = vpop.permute.xlu0 %355
        %357 = vrot.lane.b32.xlu0 %v337, 17
        %v358 = vpop.permute.xlu0 %357
        %v359 = vlaneseq
        %v360 = vand.u32 %v359, 127
        %vm361 = vcmp.lt.s32.totalorder %v360, 17
        %v362 = vsel %vm361, %v356, %v358
        %v363 = vsel %vm361, %v358, %v356
        %v364 = vlaneseq
        %v365 = vshrl.u32 %v364, 7
        %v366 = vsub.s32 0, %v365
        %v367 = vrot.slane %v332, %v366
        %v368 = vlaneseq
        %v369 = vshrl.u32 %v368, 7
        %v370 = vsub.s32 0, %v369
        %v371 = vrot.slane %v333, %v370
        %v372 = vmul.f32 %v363, %v367
        %v373 = vmul.f32 %v362, %v371
        %374 = vrot.lane.b32.xlu0 %v339, 17
        %v375 = vpop.permute.xlu0 %374
        %376 = vrot.lane.b32.xlu0 %v340, 17
        %v377 = vpop.permute.xlu0 %376
        %v378 = vsel %vm361, %v375, %v377
        %v379 = vsel %vm361, %v377, %v375
        %v380 = vmul.f32 %v379, %v367
        %v381 = vmul.f32 %v378, %v371
        %382 = vrot.lane.b32.xlu0 %v342, 17
        %v383 = vpop.permute.xlu0 %382
        %384 = vrot.lane.b32.xlu0 %v343, 17
        %v385 = vpop.permute.xlu0 %384
        %v386 = vsel %vm361, %v383, %v385
        %v387 = vsel %vm361, %v385, %v383
        %v388 = vmul.f32 %v387, %v367
        %v389 = vmul.f32 %v386, %v371
        %390 = vrot.lane.b32.xlu0 %v345, 17
        %v391 = vpop.permute.xlu0 %390
        %392 = vrot.lane.b32.xlu0 %v346, 17
        %v393 = vpop.permute.xlu0 %392
        %v394 = vsel %vm361, %v391, %v393
        %v395 = vsel %vm361, %v393, %v391
        %v396 = vmul.f32 %v395, %v367
        %v397 = vmul.f32 %v394, %v371
        %s398 = sld [smem:[#allocation3]]
        %v399 = vstv %s398
        %v400 = vmul.f32 %v399, %v372
        %v401 = vmul.f32 %v399, %v373
        %v402 = vadd.f32 %v348, %v400
        %v403 = vadd.f32 %v348, %v401
        %s404 = sld [smem:[#allocation3 + $0x24]]
        %v405 = vstv %s404
        %v406 = vmul.f32 %v405, %v372
        %v407 = vmul.f32 %v405, %v373
        %v408 = vadd.f32 %v350, %v406
        %v409 = vadd.f32 %v350, %v407
        %s410 = sld [smem:[#allocation3 + $0x48]]
        %v411 = vstv %s410
        %v412 = vmul.f32 %v411, %v372
        %v413 = vmul.f32 %v411, %v373
        %v414 = vadd.f32 %v352, %v412
        %v415 = vadd.f32 %v352, %v413
        %s416 = sld [smem:[#allocation3 + $0x6c]]
        %v417 = vstv %s416
        %v418 = vmul.f32 %v417, %v372
        %v419 = vmul.f32 %v417, %v373
        %v420 = vadd.f32 %v354, %v418
        %v421 = vadd.f32 %v354, %v419
        %s422 = sld [smem:[#allocation3 + $0x1]]
        %v423 = vstv %s422
        %v424 = vmul.f32 %v423, %v380
        %v425 = vmul.f32 %v423, %v381
        %v426 = vadd.f32 %v402, %v424
        %v427 = vadd.f32 %v403, %v425
        %s428 = sld [smem:[#allocation3 + $0x25]]
        %v429 = vstv %s428
        %v430 = vmul.f32 %v429, %v380
        %v431 = vmul.f32 %v429, %v381
        %v432 = vadd.f32 %v408, %v430
        %v433 = vadd.f32 %v409, %v431
        %s434 = sld [smem:[#allocation3 + $0x49]]
        %v435 = vstv %s434
        %v436 = vmul.f32 %v435, %v380
        %v437 = vmul.f32 %v435, %v381
        %v438 = vadd.f32 %v414, %v436
        %v439 = vadd.f32 %v415, %v437
        %s440 = sld [smem:[#allocation3 + $0x6d]]
        %v441 = vstv %s440
        %v442 = vmul.f32 %v441, %v380
        %v443 = vmul.f32 %v441, %v381
        %v444 = vadd.f32 %v420, %v442
        %v445 = vadd.f32 %v421, %v443
        %s446 = sld [smem:[#allocation3 + $0x2]]
        %v447 = vstv %s446
        %v448 = vmul.f32 %v447, %v388
        %v449 = vmul.f32 %v447, %v389
        %v450 = vadd.f32 %v426, %v448
        %v451 = vadd.f32 %v427, %v449
        %s452 = sld [smem:[#allocation3 + $0x26]]
        %v453 = vstv %s452
        %v454 = vmul.f32 %v453, %v388
        %v455 = vmul.f32 %v453, %v389
        %v456 = vadd.f32 %v432, %v454
        %v457 = vadd.f32 %v433, %v455
        %s458 = sld [smem:[#allocation3 + $0x4a]]
        %v459 = vstv %s458
        %v460 = vmul.f32 %v459, %v388
        %v461 = vmul.f32 %v459, %v389
        %v462 = vadd.f32 %v438, %v460
        %v463 = vadd.f32 %v439, %v461
        %s464 = sld [smem:[#allocation3 + $0x6e]]
        %v465 = vstv %s464
        %v466 = vmul.f32 %v465, %v388
        %v467 = vmul.f32 %v465, %v389
        %v468 = vadd.f32 %v444, %v466
        %v469 = vadd.f32 %v445, %v467
        %s470 = sld [smem:[#allocation3 + $0x3]]
        %v471 = vstv %s470
        %v472 = vmul.f32 %v471, %v396
        %v473 = vmul.f32 %v471, %v397
        %v474 = vadd.f32 %v450, %v472
        %v475 = vadd.f32 %v451, %v473
        %s476 = sld [smem:[#allocation3 + $0x27]]
        %v477 = vstv %s476
        %v478 = vmul.f32 %v477, %v396
        %v479 = vmul.f32 %v477, %v397
        %v480 = vadd.f32 %v456, %v478
        %v481 = vadd.f32 %v457, %v479
        %s482 = sld [smem:[#allocation3 + $0x4b]]
        %v483 = vstv %s482
        %v484 = vmul.f32 %v483, %v396
        %v485 = vmul.f32 %v483, %v397
        %v486 = vadd.f32 %v462, %v484
        %v487 = vadd.f32 %v463, %v485
        %s488 = sld [smem:[#allocation3 + $0x6f]]
        %v489 = vstv %s488
        %v490 = vmul.f32 %v489, %v396
        %v491 = vmul.f32 %v489, %v397
        %v492 = vadd.f32 %v468, %v490
        %v493 = vadd.f32 %v469, %v491
        %494 = vrot.lane.b32.xlu0 %v336, 16
        %v495 = vpop.permute.xlu0 %494
        %496 = vrot.lane.b32.xlu0 %v337, 16
        %v497 = vpop.permute.xlu0 %496
        %vm498 = vcmp.lt.s32.totalorder %v360, 16
        %v499 = vsel %vm498, %v495, %v497
        %v500 = vsel %vm498, %v497, %v495
        %v501 = vlaneseq
        %v502 = vshrl.u32 %v501, 7
        %v503 = vsub.s32 1, %v502
        %v504 = vrot.slane %v332, %v503
        %v505 = vlaneseq
        %v506 = vshrl.u32 %v505, 7
        %v507 = vsub.s32 1, %v506
        %v508 = vrot.slane %v333, %v507
        %v509 = vmul.f32 %v500, %v504
        %v510 = vmul.f32 %v499, %v508
        %511 = vrot.lane.b32.xlu0 %v339, 16
        %v512 = vpop.permute.xlu0 %511
        %513 = vrot.lane.b32.xlu0 %v340, 16
        %v514 = vpop.permute.xlu0 %513
        %v515 = vsel %vm498, %v512, %v514
        %v516 = vsel %vm498, %v514, %v512
        %v517 = vmul.f32 %v516, %v504
        %v518 = vmul.f32 %v515, %v508
        %519 = vrot.lane.b32.xlu0 %v342, 16
        %v520 = vpop.permute.xlu0 %519
        %521 = vrot.lane.b32.xlu0 %v343, 16
        %v522 = vpop.permute.xlu0 %521
        %v523 = vsel %vm498, %v520, %v522
        %v524 = vsel %vm498, %v522, %v520
        %v525 = vmul.f32 %v524, %v504
        %v526 = vmul.f32 %v523, %v508
        %527 = vrot.lane.b32.xlu0 %v345, 16
        %v528 = vpop.permute.xlu0 %527
        %529 = vrot.lane.b32.xlu0 %v346, 16
        %v530 = vpop.permute.xlu0 %529
        %v531 = vsel %vm498, %v528, %v530
        %v532 = vsel %vm498, %v530, %v528
        %v533 = vmul.f32 %v532, %v504
        %v534 = vmul.f32 %v531, %v508
        %s535 = sld [smem:[#allocation3 + $0x4]]
        %v536 = vstv %s535
        %v537 = vmul.f32 %v536, %v509
        %v538 = vmul.f32 %v536, %v510
        %v539 = vadd.f32 %v474, %v537
        %v540 = vadd.f32 %v475, %v538
        %s541 = sld [smem:[#allocation3 + $0x28]]
        %v542 = vstv %s541
        %v543 = vmul.f32 %v542, %v509
        %v544 = vmul.f32 %v542, %v510
        %v545 = vadd.f32 %v480, %v543
        %v546 = vadd.f32 %v481, %v544
        %s547 = sld [smem:[#allocation3 + $0x4c]]
        %v548 = vstv %s547
        %v549 = vmul.f32 %v548, %v509
        %v550 = vmul.f32 %v548, %v510
        %v551 = vadd.f32 %v486, %v549
        %v552 = vadd.f32 %v487, %v550
        %s553 = sld [smem:[#allocation3 + $0x70]]
        %v554 = vstv %s553
        %v555 = vmul.f32 %v554, %v509
        %v556 = vmul.f32 %v554, %v510
        %v557 = vadd.f32 %v492, %v555
        %v558 = vadd.f32 %v493, %v556
        %s559 = sld [smem:[#allocation3 + $0x5]]
        %v560 = vstv %s559
        %v561 = vmul.f32 %v560, %v517
        %v562 = vmul.f32 %v560, %v518
        %v563 = vadd.f32 %v539, %v561
        %v564 = vadd.f32 %v540, %v562
        %s565 = sld [smem:[#allocation3 + $0x29]]
        %v566 = vstv %s565
        %v567 = vmul.f32 %v566, %v517
        %v568 = vmul.f32 %v566, %v518
        %v569 = vadd.f32 %v545, %v567
        %v570 = vadd.f32 %v546, %v568
        %s571 = sld [smem:[#allocation3 + $0x4d]]
        %v572 = vstv %s571
        %v573 = vmul.f32 %v572, %v517
        %v574 = vmul.f32 %v572, %v518
        %v575 = vadd.f32 %v551, %v573
        %v576 = vadd.f32 %v552, %v574
        %s577 = sld [smem:[#allocation3 + $0x71]]
        %v578 = vstv %s577
        %v579 = vmul.f32 %v578, %v517
        %v580 = vmul.f32 %v578, %v518
        %v581 = vadd.f32 %v557, %v579
        %v582 = vadd.f32 %v558, %v580
        %s583 = sld [smem:[#allocation3 + $0x6]]
        %v584 = vstv %s583
        %v585 = vmul.f32 %v584, %v525
        %v586 = vmul.f32 %v584, %v526
        %v587 = vadd.f32 %v563, %v585
        %v588 = vadd.f32 %v564, %v586
        %s589 = sld [smem:[#allocation3 + $0x2a]]
        %v590 = vstv %s589
        %v591 = vmul.f32 %v590, %v525
        %v592 = vmul.f32 %v590, %v526
        %v593 = vadd.f32 %v569, %v591
        %v594 = vadd.f32 %v570, %v592
        %s595 = sld [smem:[#allocation3 + $0x4e]]
        %v596 = vstv %s595
        %v597 = vmul.f32 %v596, %v525
        %v598 = vmul.f32 %v596, %v526
        %v599 = vadd.f32 %v575, %v597
        %v600 = vadd.f32 %v576, %v598
        %s601 = sld [smem:[#allocation3 + $0x72]]
        %v602 = vstv %s601
        %v603 = vmul.f32 %v602, %v525
        %v604 = vmul.f32 %v602, %v526
        %v605 = vadd.f32 %v581, %v603
        %v606 = vadd.f32 %v582, %v604
        %s607 = sld [smem:[#allocation3 + $0x7]]
        %v608 = vstv %s607
        %v609 = vmul.f32 %v608, %v533
        %v610 = vmul.f32 %v608, %v534
        %v611 = vadd.f32 %v587, %v609
        %v612 = vadd.f32 %v588, %v610
        %s613 = sld [smem:[#allocation3 + $0x2b]]
        %v614 = vstv %s613
        %v615 = vmul.f32 %v614, %v533
        %v616 = vmul.f32 %v614, %v534
        %v617 = vadd.f32 %v593, %v615
        %v618 = vadd.f32 %v594, %v616
        %s619 = sld [smem:[#allocation3 + $0x4f]]
        %v620 = vstv %s619
        %v621 = vmul.f32 %v620, %v533
        %v622 = vmul.f32 %v620, %v534
        %v623 = vadd.f32 %v599, %v621
        %v624 = vadd.f32 %v600, %v622
        %s625 = sld [smem:[#allocation3 + $0x73]]
        %v626 = vstv %s625
        %v627 = vmul.f32 %v626, %v533
        %v628 = vmul.f32 %v626, %v534
        %v629 = vadd.f32 %v605, %v627
        %v630 = vadd.f32 %v606, %v628
        %631 = vrot.lane.b32.xlu0 %v336, 15
        %v632 = vpop.permute.xlu0 %631
        %633 = vrot.lane.b32.xlu0 %v337, 15
        %v634 = vpop.permute.xlu0 %633
        %vm635 = vcmp.lt.s32.totalorder %v360, 15
        %v636 = vsel %vm635, %v632, %v634
        %v637 = vsel %vm635, %v634, %v632
        %v638 = vlaneseq
        %v639 = vshrl.u32 %v638, 7
        %v640 = vsub.s32 2, %v639
        %v641 = vrot.slane %v332, %v640
        %v642 = vlaneseq
        %v643 = vshrl.u32 %v642, 7
        %v644 = vsub.s32 2, %v643
        %v645 = vrot.slane %v333, %v644
        %v646 = vmul.f32 %v637, %v641
        %v647 = vmul.f32 %v636, %v645
        %648 = vrot.lane.b32.xlu0 %v339, 15
        %v649 = vpop.permute.xlu0 %648
        %650 = vrot.lane.b32.xlu0 %v340, 15
        %v651 = vpop.permute.xlu0 %650
        %v652 = vsel %vm635, %v649, %v651
        %v653 = vsel %vm635, %v651, %v649
        %v654 = vmul.f32 %v653, %v641
        %v655 = vmul.f32 %v652, %v645
        %656 = vrot.lane.b32.xlu0 %v342, 15
        %v657 = vpop.permute.xlu0 %656
        %658 = vrot.lane.b32.xlu0 %v343, 15
        %v659 = vpop.permute.xlu0 %658
        %v660 = vsel %vm635, %v657, %v659
        %v661 = vsel %vm635, %v659, %v657
        %v662 = vmul.f32 %v661, %v641
        %v663 = vmul.f32 %v660, %v645
        %664 = vrot.lane.b32.xlu0 %v345, 15
        %v665 = vpop.permute.xlu0 %664
        %666 = vrot.lane.b32.xlu0 %v346, 15
        %v667 = vpop.permute.xlu0 %666
        %v668 = vsel %vm635, %v665, %v667
        %v669 = vsel %vm635, %v667, %v665
        %v670 = vmul.f32 %v669, %v641
        %v671 = vmul.f32 %v668, %v645
        %s672 = sld [smem:[#allocation3 + $0x8]]
        %v673 = vstv %s672
        %v674 = vmul.f32 %v673, %v646
        %v675 = vmul.f32 %v673, %v647
        %v676 = vadd.f32 %v611, %v674
        %v677 = vadd.f32 %v612, %v675
        %s678 = sld [smem:[#allocation3 + $0x2c]]
        %v679 = vstv %s678
        %v680 = vmul.f32 %v679, %v646
        %v681 = vmul.f32 %v679, %v647
        %v682 = vadd.f32 %v617, %v680
        %v683 = vadd.f32 %v618, %v681
        %s684 = sld [smem:[#allocation3 + $0x50]]
        %v685 = vstv %s684
        %v686 = vmul.f32 %v685, %v646
        %v687 = vmul.f32 %v685, %v647
        %v688 = vadd.f32 %v623, %v686
        %v689 = vadd.f32 %v624, %v687
        %s690 = sld [smem:[#allocation3 + $0x74]]
        %v691 = vstv %s690
        %v692 = vmul.f32 %v691, %v646
        %v693 = vmul.f32 %v691, %v647
        %v694 = vadd.f32 %v629, %v692
        %v695 = vadd.f32 %v630, %v693
        %s696 = sld [smem:[#allocation3 + $0x9]]
        %v697 = vstv %s696
        %v698 = vmul.f32 %v697, %v654
        %v699 = vmul.f32 %v697, %v655
        %v700 = vadd.f32 %v676, %v698
        %v701 = vadd.f32 %v677, %v699
        %s702 = sld [smem:[#allocation3 + $0x2d]]
        %v703 = vstv %s702
        %v704 = vmul.f32 %v703, %v654
        %v705 = vmul.f32 %v703, %v655
        %v706 = vadd.f32 %v682, %v704
        %v707 = vadd.f32 %v683, %v705
        %s708 = sld [smem:[#allocation3 + $0x51]]
        %v709 = vstv %s708
        %v710 = vmul.f32 %v709, %v654
        %v711 = vmul.f32 %v709, %v655
        %v712 = vadd.f32 %v688, %v710
        %v713 = vadd.f32 %v689, %v711
        %s714 = sld [smem:[#allocation3 + $0x75]]
        %v715 = vstv %s714
        %v716 = vmul.f32 %v715, %v654
        %v717 = vmul.f32 %v715, %v655
        %v718 = vadd.f32 %v694, %v716
        %v719 = vadd.f32 %v695, %v717
        %s720 = sld [smem:[#allocation3 + $0xa]]
        %v721 = vstv %s720
        %v722 = vmul.f32 %v721, %v662
        %v723 = vmul.f32 %v721, %v663
        %v724 = vadd.f32 %v700, %v722
        %v725 = vadd.f32 %v701, %v723
        %s726 = sld [smem:[#allocation3 + $0x2e]]
        %v727 = vstv %s726
        %v728 = vmul.f32 %v727, %v662
        %v729 = vmul.f32 %v727, %v663
        %v730 = vadd.f32 %v706, %v728
        %v731 = vadd.f32 %v707, %v729
        %s732 = sld [smem:[#allocation3 + $0x52]]
        %v733 = vstv %s732
        %v734 = vmul.f32 %v733, %v662
        %v735 = vmul.f32 %v733, %v663
        %v736 = vadd.f32 %v712, %v734
        %v737 = vadd.f32 %v713, %v735
        %s738 = sld [smem:[#allocation3 + $0x76]]
        %v739 = vstv %s738
        %v740 = vmul.f32 %v739, %v662
        %v741 = vmul.f32 %v739, %v663
        %v742 = vadd.f32 %v718, %v740
        %v743 = vadd.f32 %v719, %v741
        %s744 = sld [smem:[#allocation3 + $0xb]]
        %v745 = vstv %s744
        %v746 = vmul.f32 %v745, %v670
        %v747 = vmul.f32 %v745, %v671
        %v748 = vadd.f32 %v724, %v746
        %v749 = vadd.f32 %v725, %v747
        %s750 = sld [smem:[#allocation3 + $0x2f]]
        %v751 = vstv %s750
        %v752 = vmul.f32 %v751, %v670
        %v753 = vmul.f32 %v751, %v671
        %v754 = vadd.f32 %v730, %v752
        %v755 = vadd.f32 %v731, %v753
        %s756 = sld [smem:[#allocation3 + $0x53]]
        %v757 = vstv %s756
        %v758 = vmul.f32 %v757, %v670
        %v759 = vmul.f32 %v757, %v671
        %v760 = vadd.f32 %v736, %v758
        %v761 = vadd.f32 %v737, %v759
        %s762 = sld [smem:[#allocation3 + $0x77]]
        %v763 = vstv %s762
        %v764 = vmul.f32 %v763, %v670
        %v765 = vmul.f32 %v763, %v671
        %v766 = vadd.f32 %v742, %v764
        %v767 = vadd.f32 %v743, %v765
        %768 = vrot.lane.b32.xlu0 %v336, 1
        %v769 = vpop.permute.xlu0 %768
        %770 = vrot.lane.b32.xlu0 %v337, 1
        %v771 = vpop.permute.xlu0 %770
        %vm772 = vcmp.lt.s32.totalorder %v360, 1
        %v773 = vsel %vm772, %v769, %v771
        %v774 = vsel %vm772, %v771, %v769
        %v775 = vlaneseq
        %v776 = vshrl.u32 %v775, 7
        %v777 = vsub.s32 3, %v776
        %v778 = vrot.slane %v332, %v777
        %v779 = vlaneseq
        %v780 = vshrl.u32 %v779, 7
        %v781 = vsub.s32 3, %v780
        %v782 = vrot.slane %v333, %v781
        %v783 = vmul.f32 %v774, %v778
        %v784 = vmul.f32 %v773, %v782
        %785 = vrot.lane.b32.xlu0 %v339, 1
        %v786 = vpop.permute.xlu0 %785
        %787 = vrot.lane.b32.xlu0 %v340, 1
        %v788 = vpop.permute.xlu0 %787
        %v789 = vsel %vm772, %v786, %v788
        %v790 = vsel %vm772, %v788, %v786
        %v791 = vmul.f32 %v790, %v778
        %v792 = vmul.f32 %v789, %v782
        %793 = vrot.lane.b32.xlu0 %v342, 1
        %v794 = vpop.permute.xlu0 %793
        %795 = vrot.lane.b32.xlu0 %v343, 1
        %v796 = vpop.permute.xlu0 %795
        %v797 = vsel %vm772, %v794, %v796
        %v798 = vsel %vm772, %v796, %v794
        %v799 = vmul.f32 %v798, %v778
        %v800 = vmul.f32 %v797, %v782
        %801 = vrot.lane.b32.xlu0 %v345, 1
        %v802 = vpop.permute.xlu0 %801
        %803 = vrot.lane.b32.xlu0 %v346, 1
        %v804 = vpop.permute.xlu0 %803
        %v805 = vsel %vm772, %v802, %v804
        %v806 = vsel %vm772, %v804, %v802
        %v807 = vmul.f32 %v806, %v778
        %v808 = vmul.f32 %v805, %v782
        %s809 = sld [smem:[#allocation3 + $0xc]]
        %v810 = vstv %s809
        %v811 = vmul.f32 %v810, %v783
        %v812 = vmul.f32 %v810, %v784
        %v813 = vadd.f32 %v748, %v811
        %v814 = vadd.f32 %v749, %v812
        %s815 = sld [smem:[#allocation3 + $0x30]]
        %v816 = vstv %s815
        %v817 = vmul.f32 %v816, %v783
        %v818 = vmul.f32 %v816, %v784
        %v819 = vadd.f32 %v754, %v817
        %v820 = vadd.f32 %v755, %v818
        %s821 = sld [smem:[#allocation3 + $0x54]]
        %v822 = vstv %s821
        %v823 = vmul.f32 %v822, %v783
        %v824 = vmul.f32 %v822, %v784
        %v825 = vadd.f32 %v760, %v823
        %v826 = vadd.f32 %v761, %v824
        %s827 = sld [smem:[#allocation3 + $0x78]]
        %v828 = vstv %s827
        %v829 = vmul.f32 %v828, %v783
        %v830 = vmul.f32 %v828, %v784
        %v831 = vadd.f32 %v766, %v829
        %v832 = vadd.f32 %v767, %v830
        %s833 = sld [smem:[#allocation3 + $0xd]]
        %v834 = vstv %s833
        %v835 = vmul.f32 %v834, %v791
        %v836 = vmul.f32 %v834, %v792
        %v837 = vadd.f32 %v813, %v835
        %v838 = vadd.f32 %v814, %v836
        %s839 = sld [smem:[#allocation3 + $0x31]]
        %v840 = vstv %s839
        %v841 = vmul.f32 %v840, %v791
        %v842 = vmul.f32 %v840, %v792
        %v843 = vadd.f32 %v819, %v841
        %v844 = vadd.f32 %v820, %v842
        %s845 = sld [smem:[#allocation3 + $0x55]]
        %v846 = vstv %s845
        %v847 = vmul.f32 %v846, %v791
        %v848 = vmul.f32 %v846, %v792
        %v849 = vadd.f32 %v825, %v847
        %v850 = vadd.f32 %v826, %v848
        %s851 = sld [smem:[#allocation3 + $0x79]]
        %v852 = vstv %s851
        %v853 = vmul.f32 %v852, %v791
        %v854 = vmul.f32 %v852, %v792
        %v855 = vadd.f32 %v831, %v853
        %v856 = vadd.f32 %v832, %v854
        %s857 = sld [smem:[#allocation3 + $0xe]]
        %v858 = vstv %s857
        %v859 = vmul.f32 %v858, %v799
        %v860 = vmul.f32 %v858, %v800
        %v861 = vadd.f32 %v837, %v859
        %v862 = vadd.f32 %v838, %v860
        %s863 = sld [smem:[#allocation3 + $0x32]]
        %v864 = vstv %s863
        %v865 = vmul.f32 %v864, %v799
        %v866 = vmul.f32 %v864, %v800
        %v867 = vadd.f32 %v843, %v865
        %v868 = vadd.f32 %v844, %v866
        %s869 = sld [smem:[#allocation3 + $0x56]]
        %v870 = vstv %s869
        %v871 = vmul.f32 %v870, %v799
        %v872 = vmul.f32 %v870, %v800
        %v873 = vadd.f32 %v849, %v871
        %v874 = vadd.f32 %v850, %v872
        %s875 = sld [smem:[#allocation3 + $0x7a]]
        %v876 = vstv %s875
        %v877 = vmul.f32 %v876, %v799
        %v878 = vmul.f32 %v876, %v800
        %v879 = vadd.f32 %v855, %v877
        %v880 = vadd.f32 %v856, %v878
        %s881 = sld [smem:[#allocation3 + $0xf]]
        %v882 = vstv %s881
        %v883 = vmul.f32 %v882, %v807
        %v884 = vmul.f32 %v882, %v808
        %v885 = vadd.f32 %v861, %v883
        %v886 = vadd.f32 %v862, %v884
        %s887 = sld [smem:[#allocation3 + $0x33]]
        %v888 = vstv %s887
        %v889 = vmul.f32 %v888, %v807
        %v890 = vmul.f32 %v888, %v808
        %v891 = vadd.f32 %v867, %v889
        %v892 = vadd.f32 %v868, %v890
        %s893 = sld [smem:[#allocation3 + $0x57]]
        %v894 = vstv %s893
        %v895 = vmul.f32 %v894, %v807
        %v896 = vmul.f32 %v894, %v808
        %v897 = vadd.f32 %v873, %v895
        %v898 = vadd.f32 %v874, %v896
        %s899 = sld [smem:[#allocation3 + $0x7b]]
        %v900 = vstv %s899
        %v901 = vmul.f32 %v900, %v807
        %v902 = vmul.f32 %v900, %v808
        %v903 = vadd.f32 %v879, %v901
        %v904 = vadd.f32 %v880, %v902
        %s905 = sld [smem:[#allocation3 + $0x10]]
        %v906 = vstv %s905
        %v907 = vmul.f32 %v906, %v336
        %v908 = vmul.f32 %v906, %v337
        %v909 = vadd.f32 %v885, %v907
        %v910 = vadd.f32 %v886, %v908
        %s911 = sld [smem:[#allocation3 + $0x34]]
        %v912 = vstv %s911
        %v913 = vmul.f32 %v912, %v336
        %v914 = vmul.f32 %v912, %v337
        %v915 = vadd.f32 %v891, %v913
        %v916 = vadd.f32 %v892, %v914
        %s917 = sld [smem:[#allocation3 + $0x58]]
        %v918 = vstv %s917
        %v919 = vmul.f32 %v918, %v336
        %v920 = vmul.f32 %v918, %v337
        %v921 = vadd.f32 %v897, %v919
        %v922 = vadd.f32 %v898, %v920
        %s923 = sld [smem:[#allocation3 + $0x7c]]
        %v924 = vstv %s923
        %v925 = vmul.f32 %v924, %v336
        %v926 = vmul.f32 %v924, %v337
        %v927 = vadd.f32 %v903, %v925
        %v928 = vadd.f32 %v904, %v926
        %s929 = sld [smem:[#allocation3 + $0x11]]
        %v930 = vstv %s929
        %v931 = vmul.f32 %v930, %v339
        %v932 = vmul.f32 %v930, %v340
        %v933 = vadd.f32 %v909, %v931
        %v934 = vadd.f32 %v910, %v932
        %s935 = sld [smem:[#allocation3 + $0x35]]
        %v936 = vstv %s935
        %v937 = vmul.f32 %v936, %v339
        %v938 = vmul.f32 %v936, %v340
        %v939 = vadd.f32 %v915, %v937
        %v940 = vadd.f32 %v916, %v938
        %s941 = sld [smem:[#allocation3 + $0x59]]
        %v942 = vstv %s941
        %v943 = vmul.f32 %v942, %v339
        %v944 = vmul.f32 %v942, %v340
        %v945 = vadd.f32 %v921, %v943
        %v946 = vadd.f32 %v922, %v944
        %s947 = sld [smem:[#allocation3 + $0x7d]]
        %v948 = vstv %s947
        %v949 = vmul.f32 %v948, %v339
        %v950 = vmul.f32 %v948, %v340
        %v951 = vadd.f32 %v927, %v949
        %v952 = vadd.f32 %v928, %v950
        %s953 = sld [smem:[#allocation3 + $0x12]]
        %v954 = vstv %s953
        %v955 = vmul.f32 %v954, %v342
        %v956 = vmul.f32 %v954, %v343
        %v957 = vadd.f32 %v933, %v955
        %v958 = vadd.f32 %v934, %v956
        %s959 = sld [smem:[#allocation3 + $0x36]]
        %v960 = vstv %s959
        %v961 = vmul.f32 %v960, %v342
        %v962 = vmul.f32 %v960, %v343
        %v963 = vadd.f32 %v939, %v961
        %v964 = vadd.f32 %v940, %v962
        %s965 = sld [smem:[#allocation3 + $0x5a]]
        %v966 = vstv %s965
        %v967 = vmul.f32 %v966, %v342
        %v968 = vmul.f32 %v966, %v343
        %v969 = vadd.f32 %v945, %v967
        %v970 = vadd.f32 %v946, %v968
        %s971 = sld [smem:[#allocation3 + $0x7e]]
        %v972 = vstv %s971
        %v973 = vmul.f32 %v972, %v342
        %v974 = vmul.f32 %v972, %v343
        %v975 = vadd.f32 %v951, %v973
        %v976 = vadd.f32 %v952, %v974
        %s977 = sld [smem:[#allocation3 + $0x13]]
        %v978 = vstv %s977
        %v979 = vmul.f32 %v978, %v345
        %v980 = vmul.f32 %v978, %v346
        %v981 = vadd.f32 %v957, %v979
        %v982 = vadd.f32 %v958, %v980
        %s983 = sld [smem:[#allocation3 + $0x37]]
        %v984 = vstv %s983
        %v985 = vmul.f32 %v984, %v345
        %v986 = vmul.f32 %v984, %v346
        %v987 = vadd.f32 %v963, %v985
        %v988 = vadd.f32 %v964, %v986
        %s989 = sld [smem:[#allocation3 + $0x5b]]
        %v990 = vstv %s989
        %v991 = vmul.f32 %v990, %v345
        %v992 = vmul.f32 %v990, %v346
        %v993 = vadd.f32 %v969, %v991
        %v994 = vadd.f32 %v970, %v992
        %s995 = sld [smem:[#allocation3 + $0x7f]]
        %v996 = vstv %s995
        %v997 = vmul.f32 %v996, %v345
        %v998 = vmul.f32 %v996, %v346
        %v999 = vadd.f32 %v975, %v997
        %v1000 = vadd.f32 %v976, %v998
        %1001 = vrot.lane.b32.xlu0 %v336, 127
        %v1002 = vpop.permute.xlu0 %1001
        %1003 = vrot.lane.b32.xlu0 %v337, 127
        %v1004 = vpop.permute.xlu0 %1003
        %vm1005 = vcmp.lt.s32.totalorder %v360, 127
        %v1006 = vsel %vm1005, %v1002, %v1004
        %v1007 = vsel %vm1005, %v1004, %v1002
        %v1008 = vlaneseq
        %v1009 = vshrl.u32 %v1008, 7
        %v1010 = vsub.s32 5, %v1009
        %v1011 = vrot.slane %v332, %v1010
        %v1012 = vlaneseq
        %v1013 = vshrl.u32 %v1012, 7
        %v1014 = vsub.s32 5, %v1013
        %v1015 = vrot.slane %v333, %v1014
        %v1016 = vmul.f32 %v1006, %v1011
        %v1017 = vmul.f32 %v1007, %v1015
        %1018 = vrot.lane.b32.xlu0 %v339, 127
        %v1019 = vpop.permute.xlu0 %1018
        %1020 = vrot.lane.b32.xlu0 %v340, 127
        %v1021 = vpop.permute.xlu0 %1020
        %v1022 = vsel %vm1005, %v1019, %v1021
        %v1023 = vsel %vm1005, %v1021, %v1019
        %v1024 = vmul.f32 %v1022, %v1011
        %v1025 = vmul.f32 %v1023, %v1015
        %1026 = vrot.lane.b32.xlu0 %v342, 127
        %v1027 = vpop.permute.xlu0 %1026
        %1028 = vrot.lane.b32.xlu0 %v343, 127
        %v1029 = vpop.permute.xlu0 %1028
        %v1030 = vsel %vm1005, %v1027, %v1029
        %v1031 = vsel %vm1005, %v1029, %v1027
        %v1032 = vmul.f32 %v1030, %v1011
        %v1033 = vmul.f32 %v1031, %v1015
        %1034 = vrot.lane.b32.xlu0 %v345, 127
        %v1035 = vpop.permute.xlu0 %1034
        %1036 = vrot.lane.b32.xlu0 %v346, 127
        %v1037 = vpop.permute.xlu0 %1036
        %v1038 = vsel %vm1005, %v1035, %v1037
        %v1039 = vsel %vm1005, %v1037, %v1035
        %v1040 = vmul.f32 %v1038, %v1011
        %v1041 = vmul.f32 %v1039, %v1015
        %s1042 = sld [smem:[#allocation3 + $0x14]]
        %v1043 = vstv %s1042
        %v1044 = vmul.f32 %v1043, %v1016
        %v1045 = vmul.f32 %v1043, %v1017
        %v1046 = vadd.f32 %v981, %v1044
        %v1047 = vadd.f32 %v982, %v1045
        %s1048 = sld [smem:[#allocation3 + $0x38]]
        %v1049 = vstv %s1048
        %v1050 = vmul.f32 %v1049, %v1016
        %v1051 = vmul.f32 %v1049, %v1017
        %v1052 = vadd.f32 %v987, %v1050
        %v1053 = vadd.f32 %v988, %v1051
        %s1054 = sld [smem:[#allocation3 + $0x5c]]
        %v1055 = vstv %s1054
        %v1056 = vmul.f32 %v1055, %v1016
        %v1057 = vmul.f32 %v1055, %v1017
        %v1058 = vadd.f32 %v993, %v1056
        %v1059 = vadd.f32 %v994, %v1057
        %s1060 = sld [smem:[#allocation3 + $0x80]]
        %v1061 = vstv %s1060
        %v1062 = vmul.f32 %v1061, %v1016
        %v1063 = vmul.f32 %v1061, %v1017
        %v1064 = vadd.f32 %v999, %v1062
        %v1065 = vadd.f32 %v1000, %v1063
        %s1066 = sld [smem:[#allocation3 + $0x15]]
        %v1067 = vstv %s1066
        %v1068 = vmul.f32 %v1067, %v1024
        %v1069 = vmul.f32 %v1067, %v1025
        %v1070 = vadd.f32 %v1046, %v1068
        %v1071 = vadd.f32 %v1047, %v1069
        %s1072 = sld [smem:[#allocation3 + $0x39]]
        %v1073 = vstv %s1072
        %v1074 = vmul.f32 %v1073, %v1024
        %v1075 = vmul.f32 %v1073, %v1025
        %v1076 = vadd.f32 %v1052, %v1074
        %v1077 = vadd.f32 %v1053, %v1075
        %s1078 = sld [smem:[#allocation3 + $0x5d]]
        %v1079 = vstv %s1078
        %v1080 = vmul.f32 %v1079, %v1024
        %v1081 = vmul.f32 %v1079, %v1025
        %v1082 = vadd.f32 %v1058, %v1080
        %v1083 = vadd.f32 %v1059, %v1081
        %s1084 = sld [smem:[#allocation3 + $0x81]]
        %v1085 = vstv %s1084
        %v1086 = vmul.f32 %v1085, %v1024
        %v1087 = vmul.f32 %v1085, %v1025
        %v1088 = vadd.f32 %v1064, %v1086
        %v1089 = vadd.f32 %v1065, %v1087
        %s1090 = sld [smem:[#allocation3 + $0x16]]
        %v1091 = vstv %s1090
        %v1092 = vmul.f32 %v1091, %v1032
        %v1093 = vmul.f32 %v1091, %v1033
        %v1094 = vadd.f32 %v1070, %v1092
        %v1095 = vadd.f32 %v1071, %v1093
        %s1096 = sld [smem:[#allocation3 + $0x3a]]
        %v1097 = vstv %s1096
        %v1098 = vmul.f32 %v1097, %v1032
        %v1099 = vmul.f32 %v1097, %v1033
        %v1100 = vadd.f32 %v1076, %v1098
        %v1101 = vadd.f32 %v1077, %v1099
        %s1102 = sld [smem:[#allocation3 + $0x5e]]
        %v1103 = vstv %s1102
        %v1104 = vmul.f32 %v1103, %v1032
        %v1105 = vmul.f32 %v1103, %v1033
        %v1106 = vadd.f32 %v1082, %v1104
        %v1107 = vadd.f32 %v1083, %v1105
        %s1108 = sld [smem:[#allocation3 + $0x82]]
        %v1109 = vstv %s1108
        %v1110 = vmul.f32 %v1109, %v1032
        %v1111 = vmul.f32 %v1109, %v1033
        %v1112 = vadd.f32 %v1088, %v1110
        %v1113 = vadd.f32 %v1089, %v1111
        %s1114 = sld [smem:[#allocation3 + $0x17]]
        %v1115 = vstv %s1114
        %v1116 = vmul.f32 %v1115, %v1040
        %v1117 = vmul.f32 %v1115, %v1041
        %v1118 = vadd.f32 %v1094, %v1116
        %v1119 = vadd.f32 %v1095, %v1117
        %s1120 = sld [smem:[#allocation3 + $0x3b]]
        %v1121 = vstv %s1120
        %v1122 = vmul.f32 %v1121, %v1040
        %v1123 = vmul.f32 %v1121, %v1041
        %v1124 = vadd.f32 %v1100, %v1122
        %v1125 = vadd.f32 %v1101, %v1123
        %s1126 = sld [smem:[#allocation3 + $0x5f]]
        %v1127 = vstv %s1126
        %v1128 = vmul.f32 %v1127, %v1040
        %v1129 = vmul.f32 %v1127, %v1041
        %v1130 = vadd.f32 %v1106, %v1128
        %v1131 = vadd.f32 %v1107, %v1129
        %s1132 = sld [smem:[#allocation3 + $0x83]]
        %v1133 = vstv %s1132
        %v1134 = vmul.f32 %v1133, %v1040
        %v1135 = vmul.f32 %v1133, %v1041
        %v1136 = vadd.f32 %v1112, %v1134
        %v1137 = vadd.f32 %v1113, %v1135
        %1138 = vrot.lane.b32.xlu0 %v336, 113
        %v1139 = vpop.permute.xlu0 %1138
        %1140 = vrot.lane.b32.xlu0 %v337, 113
        %v1141 = vpop.permute.xlu0 %1140
        %vm1142 = vcmp.lt.s32.totalorder %v360, 113
        %v1143 = vsel %vm1142, %v1139, %v1141
        %v1144 = vsel %vm1142, %v1141, %v1139
        %v1145 = vlaneseq
        %v1146 = vshrl.u32 %v1145, 7
        %v1147 = vsub.s32 6, %v1146
        %v1148 = vrot.slane %v332, %v1147
        %v1149 = vlaneseq
        %v1150 = vshrl.u32 %v1149, 7
        %v1151 = vsub.s32 6, %v1150
        %v1152 = vrot.slane %v333, %v1151
        %v1153 = vmul.f32 %v1143, %v1148
        %v1154 = vmul.f32 %v1144, %v1152
        %1155 = vrot.lane.b32.xlu0 %v339, 113
        %v1156 = vpop.permute.xlu0 %1155
        %1157 = vrot.lane.b32.xlu0 %v340, 113
        %v1158 = vpop.permute.xlu0 %1157
        %v1159 = vsel %vm1142, %v1156, %v1158
        %v1160 = vsel %vm1142, %v1158, %v1156
        %v1161 = vmul.f32 %v1159, %v1148
        %v1162 = vmul.f32 %v1160, %v1152
        %1163 = vrot.lane.b32.xlu0 %v342, 113
        %v1164 = vpop.permute.xlu0 %1163
        %1165 = vrot.lane.b32.xlu0 %v343, 113
        %v1166 = vpop.permute.xlu0 %1165
        %v1167 = vsel %vm1142, %v1164, %v1166
        %v1168 = vsel %vm1142, %v1166, %v1164
        %v1169 = vmul.f32 %v1167, %v1148
        %v1170 = vmul.f32 %v1168, %v1152
        %1171 = vrot.lane.b32.xlu0 %v345, 113
        %v1172 = vpop.permute.xlu0 %1171
        %1173 = vrot.lane.b32.xlu0 %v346, 113
        %v1174 = vpop.permute.xlu0 %1173
        %v1175 = vsel %vm1142, %v1172, %v1174
        %v1176 = vsel %vm1142, %v1174, %v1172
        %v1177 = vmul.f32 %v1175, %v1148
        %v1178 = vmul.f32 %v1176, %v1152
        %s1179 = sld [smem:[#allocation3 + $0x18]]
        %v1180 = vstv %s1179
        %v1181 = vmul.f32 %v1180, %v1153
        %v1182 = vmul.f32 %v1180, %v1154
        %v1183 = vadd.f32 %v1118, %v1181
        %v1184 = vadd.f32 %v1119, %v1182
        %s1185 = sld [smem:[#allocation3 + $0x3c]]
        %v1186 = vstv %s1185
        %v1187 = vmul.f32 %v1186, %v1153
        %v1188 = vmul.f32 %v1186, %v1154
        %v1189 = vadd.f32 %v1124, %v1187
        %v1190 = vadd.f32 %v1125, %v1188
        %s1191 = sld [smem:[#allocation3 + $0x60]]
        %v1192 = vstv %s1191
        %v1193 = vmul.f32 %v1192, %v1153
        %v1194 = vmul.f32 %v1192, %v1154
        %v1195 = vadd.f32 %v1130, %v1193
        %v1196 = vadd.f32 %v1131, %v1194
        %s1197 = sld [smem:[#allocation3 + $0x84]]
        %v1198 = vstv %s1197
        %v1199 = vmul.f32 %v1198, %v1153
        %v1200 = vmul.f32 %v1198, %v1154
        %v1201 = vadd.f32 %v1136, %v1199
        %v1202 = vadd.f32 %v1137, %v1200
        %s1203 = sld [smem:[#allocation3 + $0x19]]
        %v1204 = vstv %s1203
        %v1205 = vmul.f32 %v1204, %v1161
        %v1206 = vmul.f32 %v1204, %v1162
        %v1207 = vadd.f32 %v1183, %v1205
        %v1208 = vadd.f32 %v1184, %v1206
        %s1209 = sld [smem:[#allocation3 + $0x3d]]
        %v1210 = vstv %s1209
        %v1211 = vmul.f32 %v1210, %v1161
        %v1212 = vmul.f32 %v1210, %v1162
        %v1213 = vadd.f32 %v1189, %v1211
        %v1214 = vadd.f32 %v1190, %v1212
        %s1215 = sld [smem:[#allocation3 + $0x61]]
        %v1216 = vstv %s1215
        %v1217 = vmul.f32 %v1216, %v1161
        %v1218 = vmul.f32 %v1216, %v1162
        %v1219 = vadd.f32 %v1195, %v1217
        %v1220 = vadd.f32 %v1196, %v1218
        %s1221 = sld [smem:[#allocation3 + $0x85]]
        %v1222 = vstv %s1221
        %v1223 = vmul.f32 %v1222, %v1161
        %v1224 = vmul.f32 %v1222, %v1162
        %v1225 = vadd.f32 %v1201, %v1223
        %v1226 = vadd.f32 %v1202, %v1224
        %s1227 = sld [smem:[#allocation3 + $0x1a]]
        %v1228 = vstv %s1227
        %v1229 = vmul.f32 %v1228, %v1169
        %v1230 = vmul.f32 %v1228, %v1170
        %v1231 = vadd.f32 %v1207, %v1229
        %v1232 = vadd.f32 %v1208, %v1230
        %s1233 = sld [smem:[#allocation3 + $0x3e]]
        %v1234 = vstv %s1233
        %v1235 = vmul.f32 %v1234, %v1169
        %v1236 = vmul.f32 %v1234, %v1170
        %v1237 = vadd.f32 %v1213, %v1235
        %v1238 = vadd.f32 %v1214, %v1236
        %s1239 = sld [smem:[#allocation3 + $0x62]]
        %v1240 = vstv %s1239
        %v1241 = vmul.f32 %v1240, %v1169
        %v1242 = vmul.f32 %v1240, %v1170
        %v1243 = vadd.f32 %v1219, %v1241
        %v1244 = vadd.f32 %v1220, %v1242
        %s1245 = sld [smem:[#allocation3 + $0x86]]
        %v1246 = vstv %s1245
        %v1247 = vmul.f32 %v1246, %v1169
        %v1248 = vmul.f32 %v1246, %v1170
        %v1249 = vadd.f32 %v1225, %v1247
        %v1250 = vadd.f32 %v1226, %v1248
        %s1251 = sld [smem:[#allocation3 + $0x1b]]
        %v1252 = vstv %s1251
        %v1253 = vmul.f32 %v1252, %v1177
        %v1254 = vmul.f32 %v1252, %v1178
        %v1255 = vadd.f32 %v1231, %v1253
        %v1256 = vadd.f32 %v1232, %v1254
        %s1257 = sld [smem:[#allocation3 + $0x3f]]
        %v1258 = vstv %s1257
        %v1259 = vmul.f32 %v1258, %v1177
        %v1260 = vmul.f32 %v1258, %v1178
        %v1261 = vadd.f32 %v1237, %v1259
        %v1262 = vadd.f32 %v1238, %v1260
        %s1263 = sld [smem:[#allocation3 + $0x63]]
        %v1264 = vstv %s1263
        %v1265 = vmul.f32 %v1264, %v1177
        %v1266 = vmul.f32 %v1264, %v1178
        %v1267 = vadd.f32 %v1243, %v1265
        %v1268 = vadd.f32 %v1244, %v1266
        %s1269 = sld [smem:[#allocation3 + $0x87]]
        %v1270 = vstv %s1269
        %v1271 = vmul.f32 %v1270, %v1177
        %v1272 = vmul.f32 %v1270, %v1178
        %v1273 = vadd.f32 %v1249, %v1271
        %v1274 = vadd.f32 %v1250, %v1272
        %1275 = vrot.lane.b32.xlu0 %v336, 112
        %v1276 = vpop.permute.xlu0 %1275
        %1277 = vrot.lane.b32.xlu0 %v337, 112
        %v1278 = vpop.permute.xlu0 %1277
        %vm1279 = vcmp.lt.s32.totalorder %v360, 112
        %v1280 = vsel %vm1279, %v1276, %v1278
        %v1281 = vsel %vm1279, %v1278, %v1276
        %v1282 = vlaneseq
        %v1283 = vshrl.u32 %v1282, 7
        %v1284 = vsub.s32 7, %v1283
        %v1285 = vrot.slane %v332, %v1284
        %v1286 = vlaneseq
        %v1287 = vshrl.u32 %v1286, 7
        %v1288 = vsub.s32 7, %v1287
        %v1289 = vrot.slane %v333, %v1288
        %v1290 = vmul.f32 %v1280, %v1285
        %v1291 = vmul.f32 %v1281, %v1289
        %1292 = vrot.lane.b32.xlu0 %v339, 112
        %v1293 = vpop.permute.xlu0 %1292
        %1294 = vrot.lane.b32.xlu0 %v340, 112
        %v1295 = vpop.permute.xlu0 %1294
        %v1296 = vsel %vm1279, %v1293, %v1295
        %v1297 = vsel %vm1279, %v1295, %v1293
        %v1298 = vmul.f32 %v1296, %v1285
        %v1299 = vmul.f32 %v1297, %v1289
        %1300 = vrot.lane.b32.xlu0 %v342, 112
        %v1301 = vpop.permute.xlu0 %1300
        %1302 = vrot.lane.b32.xlu0 %v343, 112
        %v1303 = vpop.permute.xlu0 %1302
        %v1304 = vsel %vm1279, %v1301, %v1303
        %v1305 = vsel %vm1279, %v1303, %v1301
        %v1306 = vmul.f32 %v1304, %v1285
        %v1307 = vmul.f32 %v1305, %v1289
        %1308 = vrot.lane.b32.xlu0 %v345, 112
        %v1309 = vpop.permute.xlu0 %1308
        %1310 = vrot.lane.b32.xlu0 %v346, 112
        %v1311 = vpop.permute.xlu0 %1310
        %v1312 = vsel %vm1279, %v1309, %v1311
        %v1313 = vsel %vm1279, %v1311, %v1309
        %v1314 = vmul.f32 %v1312, %v1285
        %v1315 = vmul.f32 %v1313, %v1289
        %s1316 = sld [smem:[#allocation3 + $0x1c]]
        %v1317 = vstv %s1316
        %v1318 = vmul.f32 %v1317, %v1290
        %v1319 = vmul.f32 %v1317, %v1291
        %v1320 = vadd.f32 %v1255, %v1318
        %v1321 = vadd.f32 %v1256, %v1319
        %s1322 = sld [smem:[#allocation3 + $0x40]]
        %v1323 = vstv %s1322
        %v1324 = vmul.f32 %v1323, %v1290
        %v1325 = vmul.f32 %v1323, %v1291
        %v1326 = vadd.f32 %v1261, %v1324
        %v1327 = vadd.f32 %v1262, %v1325
        %s1328 = sld [smem:[#allocation3 + $0x64]]
        %v1329 = vstv %s1328
        %v1330 = vmul.f32 %v1329, %v1290
        %v1331 = vmul.f32 %v1329, %v1291
        %v1332 = vadd.f32 %v1267, %v1330
        %v1333 = vadd.f32 %v1268, %v1331
        %s1334 = sld [smem:[#allocation3 + $0x88]]
        %v1335 = vstv %s1334
        %v1336 = vmul.f32 %v1335, %v1290
        %v1337 = vmul.f32 %v1335, %v1291
        %v1338 = vadd.f32 %v1273, %v1336
        %v1339 = vadd.f32 %v1274, %v1337
        %s1340 = sld [smem:[#allocation3 + $0x1d]]
        %v1341 = vstv %s1340
        %v1342 = vmul.f32 %v1341, %v1298
        %v1343 = vmul.f32 %v1341, %v1299
        %v1344 = vadd.f32 %v1320, %v1342
        %v1345 = vadd.f32 %v1321, %v1343
        %s1346 = sld [smem:[#allocation3 + $0x41]]
        %v1347 = vstv %s1346
        %v1348 = vmul.f32 %v1347, %v1298
        %v1349 = vmul.f32 %v1347, %v1299
        %v1350 = vadd.f32 %v1326, %v1348
        %v1351 = vadd.f32 %v1327, %v1349
        %s1352 = sld [smem:[#allocation3 + $0x65]]
        %v1353 = vstv %s1352
        %v1354 = vmul.f32 %v1353, %v1298
        %v1355 = vmul.f32 %v1353, %v1299
        %v1356 = vadd.f32 %v1332, %v1354
        %v1357 = vadd.f32 %v1333, %v1355
        %s1358 = sld [smem:[#allocation3 + $0x89]]
        %v1359 = vstv %s1358
        %v1360 = vmul.f32 %v1359, %v1298
        %v1361 = vmul.f32 %v1359, %v1299
        %v1362 = vadd.f32 %v1338, %v1360
        %v1363 = vadd.f32 %v1339, %v1361
        %s1364 = sld [smem:[#allocation3 + $0x1e]]
        %v1365 = vstv %s1364
        %v1366 = vmul.f32 %v1365, %v1306
        %v1367 = vmul.f32 %v1365, %v1307
        %v1368 = vadd.f32 %v1344, %v1366
        %v1369 = vadd.f32 %v1345, %v1367
        %s1370 = sld [smem:[#allocation3 + $0x42]]
        %v1371 = vstv %s1370
        %v1372 = vmul.f32 %v1371, %v1306
        %v1373 = vmul.f32 %v1371, %v1307
        %v1374 = vadd.f32 %v1350, %v1372
        %v1375 = vadd.f32 %v1351, %v1373
        %s1376 = sld [smem:[#allocation3 + $0x66]]
        %v1377 = vstv %s1376
        %v1378 = vmul.f32 %v1377, %v1306
        %v1379 = vmul.f32 %v1377, %v1307
        %v1380 = vadd.f32 %v1356, %v1378
        %v1381 = vadd.f32 %v1357, %v1379
        %s1382 = sld [smem:[#allocation3 + $0x8a]]
        %v1383 = vstv %s1382
        %v1384 = vmul.f32 %v1383, %v1306
        %v1385 = vmul.f32 %v1383, %v1307
        %v1386 = vadd.f32 %v1362, %v1384
        %v1387 = vadd.f32 %v1363, %v1385
        %s1388 = sld [smem:[#allocation3 + $0x1f]]
        %v1389 = vstv %s1388
        %v1390 = vmul.f32 %v1389, %v1314
        %v1391 = vmul.f32 %v1389, %v1315
        %v1392 = vadd.f32 %v1368, %v1390
        %v1393 = vadd.f32 %v1369, %v1391
        %s1394 = sld [smem:[#allocation3 + $0x43]]
        %v1395 = vstv %s1394
        %v1396 = vmul.f32 %v1395, %v1314
        %v1397 = vmul.f32 %v1395, %v1315
        %v1398 = vadd.f32 %v1374, %v1396
        %v1399 = vadd.f32 %v1375, %v1397
        %s1400 = sld [smem:[#allocation3 + $0x67]]
        %v1401 = vstv %s1400
        %v1402 = vmul.f32 %v1401, %v1314
        %v1403 = vmul.f32 %v1401, %v1315
        %v1404 = vadd.f32 %v1380, %v1402
        %v1405 = vadd.f32 %v1381, %v1403
        %s1406 = sld [smem:[#allocation3 + $0x8b]]
        %v1407 = vstv %s1406
        %v1408 = vmul.f32 %v1407, %v1314
        %v1409 = vmul.f32 %v1407, %v1315
        %v1410 = vadd.f32 %v1386, %v1408
        %v1411 = vadd.f32 %v1387, %v1409
        %1412 = vrot.lane.b32.xlu0 %v336, 111
        %v1413 = vpop.permute.xlu0 %1412
        %1414 = vrot.lane.b32.xlu0 %v337, 111
        %v1415 = vpop.permute.xlu0 %1414
        %vm1416 = vcmp.lt.s32.totalorder %v360, 111
        %v1417 = vsel %vm1416, %v1413, %v1415
        %v1418 = vsel %vm1416, %v1415, %v1413
        %v1419 = vlaneseq
        %v1420 = vshrl.u32 %v1419, 7
        %v1421 = vsub.s32 0, %v1420
        %v1422 = vrot.slane %v334, %v1421
        %v1423 = vlaneseq
        %v1424 = vshrl.u32 %v1423, 7
        %v1425 = vsub.s32 0, %v1424
        %v1426 = vrot.slane %v335, %v1425
        %v1427 = vmul.f32 %v1417, %v1422
        %v1428 = vmul.f32 %v1418, %v1426
        %1429 = vrot.lane.b32.xlu0 %v339, 111
        %v1430 = vpop.permute.xlu0 %1429
        %1431 = vrot.lane.b32.xlu0 %v340, 111
        %v1432 = vpop.permute.xlu0 %1431
        %v1433 = vsel %vm1416, %v1430, %v1432
        %v1434 = vsel %vm1416, %v1432, %v1430
        %v1435 = vmul.f32 %v1433, %v1422
        %v1436 = vmul.f32 %v1434, %v1426
        %1437 = vrot.lane.b32.xlu0 %v342, 111
        %v1438 = vpop.permute.xlu0 %1437
        %1439 = vrot.lane.b32.xlu0 %v343, 111
        %v1440 = vpop.permute.xlu0 %1439
        %v1441 = vsel %vm1416, %v1438, %v1440
        %v1442 = vsel %vm1416, %v1440, %v1438
        %v1443 = vmul.f32 %v1441, %v1422
        %v1444 = vmul.f32 %v1442, %v1426
        %1445 = vrot.lane.b32.xlu0 %v345, 111
        %v1446 = vpop.permute.xlu0 %1445
        %1447 = vrot.lane.b32.xlu0 %v346, 111
        %v1448 = vpop.permute.xlu0 %1447
        %v1449 = vsel %vm1416, %v1446, %v1448
        %v1450 = vsel %vm1416, %v1448, %v1446
        %v1451 = vmul.f32 %v1449, %v1422
        %v1452 = vmul.f32 %v1450, %v1426
        %s1453 = sld [smem:[#allocation3 + $0x20]]
        %v1454 = vstv %s1453
        %v1455 = vmul.f32 %v1454, %v1427
        %v1456 = vmul.f32 %v1454, %v1428
        %v1457 = vadd.f32 %v1392, %v1455
        %v1458 = vadd.f32 %v1393, %v1456
        %s1459 = sld [smem:[#allocation3 + $0x44]]
        %v1460 = vstv %s1459
        %v1461 = vmul.f32 %v1460, %v1427
        %v1462 = vmul.f32 %v1460, %v1428
        %v1463 = vadd.f32 %v1398, %v1461
        %v1464 = vadd.f32 %v1399, %v1462
        %s1465 = sld [smem:[#allocation3 + $0x68]]
        %v1466 = vstv %s1465
        %v1467 = vmul.f32 %v1466, %v1427
        %v1468 = vmul.f32 %v1466, %v1428
        %v1469 = vadd.f32 %v1404, %v1467
        %v1470 = vadd.f32 %v1405, %v1468
        %s1471 = sld [smem:[#allocation3 + $0x8c]]
        %v1472 = vstv %s1471
        %v1473 = vmul.f32 %v1472, %v1427
        %v1474 = vmul.f32 %v1472, %v1428
        %v1475 = vadd.f32 %v1410, %v1473
        %v1476 = vadd.f32 %v1411, %v1474
        %s1477 = sld [smem:[#allocation3 + $0x21]]
        %v1478 = vstv %s1477
        %v1479 = vmul.f32 %v1478, %v1435
        %v1480 = vmul.f32 %v1478, %v1436
        %v1481 = vadd.f32 %v1457, %v1479
        %v1482 = vadd.f32 %v1458, %v1480
        %s1483 = sld [smem:[#allocation3 + $0x45]]
        %v1484 = vstv %s1483
        %v1485 = vmul.f32 %v1484, %v1435
        %v1486 = vmul.f32 %v1484, %v1436
        %v1487 = vadd.f32 %v1463, %v1485
        %v1488 = vadd.f32 %v1464, %v1486
        %s1489 = sld [smem:[#allocation3 + $0x69]]
        %v1490 = vstv %s1489
        %v1491 = vmul.f32 %v1490, %v1435
        %v1492 = vmul.f32 %v1490, %v1436
        %v1493 = vadd.f32 %v1469, %v1491
        %v1494 = vadd.f32 %v1470, %v1492
        %s1495 = sld [smem:[#allocation3 + $0x8d]]
        %v1496 = vstv %s1495
        %v1497 = vmul.f32 %v1496, %v1435
        %v1498 = vmul.f32 %v1496, %v1436
        %v1499 = vadd.f32 %v1475, %v1497
        %v1500 = vadd.f32 %v1476, %v1498
        %s1501 = sld [smem:[#allocation3 + $0x22]]
        %v1502 = vstv %s1501
        %v1503 = vmul.f32 %v1502, %v1443
        %v1504 = vmul.f32 %v1502, %v1444
        %v1505 = vadd.f32 %v1481, %v1503
        %v1506 = vadd.f32 %v1482, %v1504
        %s1507 = sld [smem:[#allocation3 + $0x46]]
        %v1508 = vstv %s1507
        %v1509 = vmul.f32 %v1508, %v1443
        %v1510 = vmul.f32 %v1508, %v1444
        %v1511 = vadd.f32 %v1487, %v1509
        %v1512 = vadd.f32 %v1488, %v1510
        %s1513 = sld [smem:[#allocation3 + $0x6a]]
        %v1514 = vstv %s1513
        %v1515 = vmul.f32 %v1514, %v1443
        %v1516 = vmul.f32 %v1514, %v1444
        %v1517 = vadd.f32 %v1493, %v1515
        %v1518 = vadd.f32 %v1494, %v1516
        %s1519 = sld [smem:[#allocation3 + $0x8e]]
        %v1520 = vstv %s1519
        %v1521 = vmul.f32 %v1520, %v1443
        %v1522 = vmul.f32 %v1520, %v1444
        %v1523 = vadd.f32 %v1499, %v1521
        %v1524 = vadd.f32 %v1500, %v1522
        %s1525 = sld [smem:[#allocation3 + $0x23]]
        %v1526 = vstv %s1525
        %v1527 = vmul.f32 %v1526, %v1451
        %v1528 = vmul.f32 %v1526, %v1452
        %v1529 = vadd.f32 %v1505, %v1527
        %v1530 = vadd.f32 %v1506, %v1528
        %s1531 = sld [smem:[#allocation3 + $0x47]]
        %v1532 = vstv %s1531
        %v1533 = vmul.f32 %v1532, %v1451
        %v1534 = vmul.f32 %v1532, %v1452
        %v1535 = vadd.f32 %v1511, %v1533
        %v1536 = vadd.f32 %v1512, %v1534
        %s1537 = sld [smem:[#allocation3 + $0x6b]]
        %v1538 = vstv %s1537
        %v1539 = vmul.f32 %v1538, %v1451
        %v1540 = vmul.f32 %v1538, %v1452
        %v1541 = vadd.f32 %v1517, %v1539
        %v1542 = vadd.f32 %v1518, %v1540
        %s1543 = sld [smem:[#allocation3 + $0x8f]]
        %v1544 = vstv %s1543
        %v1545 = vmul.f32 %v1544, %v1451
        %v1546 = vmul.f32 %v1544, %v1452
        %v1547 = vadd.f32 %v1523, %v1545
        %v1548 = vadd.f32 %v1524, %v1546
        %v1549 = vmax.f32 %v1529, 0.0
        %v1550 = vmax.f32 %v1530, 0.0
        %v1551 = vmax.f32 %v1535, 0.0
        %v1552 = vmax.f32 %v1536, 0.0
        %v1553 = vmax.f32 %v1541, 0.0
        %v1554 = vmax.f32 %v1542, 0.0
        %v1555 = vmax.f32 %v1547, 0.0
        %v1556 = vmax.f32 %v1548, 0.0
        %s1557 = sld [smem:[#allocation8]]
        %v1558 = vstv %s1557
        %s1559 = sld [smem:[#allocation8 + $0x1]]
        %v1560 = vstv %s1559
        %s1561 = sld [smem:[#allocation8 + $0x2]]
        %v1562 = vstv %s1561
        %s1563 = sld [smem:[#allocation8 + $0x3]]
        %v1564 = vstv %s1563
        %1565 = vrot.lane.b32.xlu0 %v1549, 17
        %v1566 = vpop.permute.xlu0 %1565
        %1567 = vrot.lane.b32.xlu0 %v1550, 17
        %v1568 = vpop.permute.xlu0 %1567
        %v1569 = vsel %vm361, %v1566, %v1568
        %v1570 = vsel %vm361, %v1568, %v1566
        %v1571 = vmul.f32 %v1570, %v367
        %v1572 = vmul.f32 %v1569, %v371
        %1573 = vrot.lane.b32.xlu0 %v1551, 17
        %v1574 = vpop.permute.xlu0 %1573
        %1575 = vrot.lane.b32.xlu0 %v1552, 17
        %v1576 = vpop.permute.xlu0 %1575
        %v1577 = vsel %vm361, %v1574, %v1576
        %v1578 = vsel %vm361, %v1576, %v1574
        %v1579 = vmul.f32 %v1578, %v367
        %v1580 = vmul.f32 %v1577, %v371
        %1581 = vrot.lane.b32.xlu0 %v1553, 17
        %v1582 = vpop.permute.xlu0 %1581
        %1583 = vrot.lane.b32.xlu0 %v1554, 17
        %v1584 = vpop.permute.xlu0 %1583
        %v1585 = vsel %vm361, %v1582, %v1584
        %v1586 = vsel %vm361, %v1584, %v1582
        %v1587 = vmul.f32 %v1586, %v367
        %v1588 = vmul.f32 %v1585, %v371
        %1589 = vrot.lane.b32.xlu0 %v1555, 17
        %v1590 = vpop.permute.xlu0 %1589
        %1591 = vrot.lane.b32.xlu0 %v1556, 17
        %v1592 = vpop.permute.xlu0 %1591
        %v1593 = vsel %vm361, %v1590, %v1592
        %v1594 = vsel %vm361, %v1592, %v1590
        %v1595 = vmul.f32 %v1594, %v367
        %v1596 = vmul.f32 %v1593, %v371
        %s1597 = sld [smem:[#allocation7]]
        %v1598 = vstv %s1597
        %v1599 = vmul.f32 %v1598, %v1571
        %v1600 = vmul.f32 %v1598, %v1572
        %v1601 = vadd.f32 %v1558, %v1599
        %v1602 = vadd.f32 %v1558, %v1600
        %s1603 = sld [smem:[#allocation7 + $0x24]]
        %v1604 = vstv %s1603
        %v1605 = vmul.f32 %v1604, %v1571
        %v1606 = vmul.f32 %v1604, %v1572
        %v1607 = vadd.f32 %v1560, %v1605
        %v1608 = vadd.f32 %v1560, %v1606
        %s1609 = sld [smem:[#allocation7 + $0x48]]
        %v1610 = vstv %s1609
        %v1611 = vmul.f32 %v1610, %v1571
        %v1612 = vmul.f32 %v1610, %v1572
        %v1613 = vadd.f32 %v1562, %v1611
        %v1614 = vadd.f32 %v1562, %v1612
        %s1615 = sld [smem:[#allocation7 + $0x6c]]
        %v1616 = vstv %s1615
        %v1617 = vmul.f32 %v1616, %v1571
        %v1618 = vmul.f32 %v1616, %v1572
        %v1619 = vadd.f32 %v1564, %v1617
        %v1620 = vadd.f32 %v1564, %v1618
        %s1621 = sld [smem:[#allocation7 + $0x1]]
        %v1622 = vstv %s1621
        %v1623 = vmul.f32 %v1622, %v1579
        %v1624 = vmul.f32 %v1622, %v1580
        %v1625 = vadd.f32 %v1601, %v1623
        %v1626 = vadd.f32 %v1602, %v1624
        %s1627 = sld [smem:[#allocation7 + $0x25]]
        %v1628 = vstv %s1627
        %v1629 = vmul.f32 %v1628, %v1579
        %v1630 = vmul.f32 %v1628, %v1580
        %v1631 = vadd.f32 %v1607, %v1629
        %v1632 = vadd.f32 %v1608, %v1630
        %s1633 = sld [smem:[#allocation7 + $0x49]]
        %v1634 = vstv %s1633
        %v1635 = vmul.f32 %v1634, %v1579
        %v1636 = vmul.f32 %v1634, %v1580
        %v1637 = vadd.f32 %v1613, %v1635
        %v1638 = vadd.f32 %v1614, %v1636
        %s1639 = sld [smem:[#allocation7 + $0x6d]]
        %v1640 = vstv %s1639
        %v1641 = vmul.f32 %v1640, %v1579
        %v1642 = vmul.f32 %v1640, %v1580
        %v1643 = vadd.f32 %v1619, %v1641
        %v1644 = vadd.f32 %v1620, %v1642
        %s1645 = sld [smem:[#allocation7 + $0x2]]
        %v1646 = vstv %s1645
        %v1647 = vmul.f32 %v1646, %v1587
        %v1648 = vmul.f32 %v1646, %v1588
        %v1649 = vadd.f32 %v1625, %v1647
        %v1650 = vadd.f32 %v1626, %v1648
        %s1651 = sld [smem:[#allocation7 + $0x26]]
        %v1652 = vstv %s1651
        %v1653 = vmul.f32 %v1652, %v1587
        %v1654 = vmul.f32 %v1652, %v1588
        %v1655 = vadd.f32 %v1631, %v1653
        %v1656 = vadd.f32 %v1632, %v1654
        %s1657 = sld [smem:[#allocation7 + $0x4a]]
        %v1658 = vstv %s1657
        %v1659 = vmul.f32 %v1658, %v1587
        %v1660 = vmul.f32 %v1658, %v1588
        %v1661 = vadd.f32 %v1637, %v1659
        %v1662 = vadd.f32 %v1638, %v1660
        %s1663 = sld [smem:[#allocation7 + $0x6e]]
        %v1664 = vstv %s1663
        %v1665 = vmul.f32 %v1664, %v1587
        %v1666 = vmul.f32 %v1664, %v1588
        %v1667 = vadd.f32 %v1643, %v1665
        %v1668 = vadd.f32 %v1644, %v1666
        %s1669 = sld [smem:[#allocation7 + $0x3]]
        %v1670 = vstv %s1669
        %v1671 = vmul.f32 %v1670, %v1595
        %v1672 = vmul.f32 %v1670, %v1596
        %v1673 = vadd.f32 %v1649, %v1671
        %v1674 = vadd.f32 %v1650, %v1672
        %s1675 = sld [smem:[#allocation7 + $0x27]]
        %v1676 = vstv %s1675
        %v1677 = vmul.f32 %v1676, %v1595
        %v1678 = vmul.f32 %v1676, %v1596
        %v1679 = vadd.f32 %v1655, %v1677
        %v1680 = vadd.f32 %v1656, %v1678
        %s1681 = sld [smem:[#allocation7 + $0x4b]]
        %v1682 = vstv %s1681
        %v1683 = vmul.f32 %v1682, %v1595
        %v1684 = vmul.f32 %v1682, %v1596
        %v1685 = vadd.f32 %v1661, %v1683
        %v1686 = vadd.f32 %v1662, %v1684
        %s1687 = sld [smem:[#allocation7 + $0x6f]]
        %v1688 = vstv %s1687
        %v1689 = vmul.f32 %v1688, %v1595
        %v1690 = vmul.f32 %v1688, %v1596
        %v1691 = vadd.f32 %v1667, %v1689
        %v1692 = vadd.f32 %v1668, %v1690
        %1693 = vrot.lane.b32.xlu0 %v1549, 16
        %v1694 = vpop.permute.xlu0 %1693
        %1695 = vrot.lane.b32.xlu0 %v1550, 16
        %v1696 = vpop.permute.xlu0 %1695
        %v1697 = vsel %vm498, %v1694, %v1696
        %v1698 = vsel %vm498, %v1696, %v1694
        %v1699 = vmul.f32 %v1698, %v504
        %v1700 = vmul.f32 %v1697, %v508
        %1701 = vrot.lane.b32.xlu0 %v1551, 16
        %v1702 = vpop.permute.xlu0 %1701
        %1703 = vrot.lane.b32.xlu0 %v1552, 16
        %v1704 = vpop.permute.xlu0 %1703
        %v1705 = vsel %vm498, %v1702, %v1704
        %v1706 = vsel %vm498, %v1704, %v1702
        %v1707 = vmul.f32 %v1706, %v504
        %v1708 = vmul.f32 %v1705, %v508
        %1709 = vrot.lane.b32.xlu0 %v1553, 16
        %v1710 = vpop.permute.xlu0 %1709
        %1711 = vrot.lane.b32.xlu0 %v1554, 16
        %v1712 = vpop.permute.xlu0 %1711
        %v1713 = vsel %vm498, %v1710, %v1712
        %v1714 = vsel %vm498, %v1712, %v1710
        %v1715 = vmul.f32 %v1714, %v504
        %v1716 = vmul.f32 %v1713, %v508
        %1717 = vrot.lane.b32.xlu0 %v1555, 16
        %v1718 = vpop.permute.xlu0 %1717
        %1719 = vrot.lane.b32.xlu0 %v1556, 16
        %v1720 = vpop.permute.xlu0 %1719
        %v1721 = vsel %vm498, %v1718, %v1720
        %v1722 = vsel %vm498, %v1720, %v1718
        %v1723 = vmul.f32 %v1722, %v504
        %v1724 = vmul.f32 %v1721, %v508
        %s1725 = sld [smem:[#allocation7 + $0x4]]
        %v1726 = vstv %s1725
        %v1727 = vmul.f32 %v1726, %v1699
        %v1728 = vmul.f32 %v1726, %v1700
        %v1729 = vadd.f32 %v1673, %v1727
        %v1730 = vadd.f32 %v1674, %v1728
        %s1731 = sld [smem:[#allocation7 + $0x28]]
        %v1732 = vstv %s1731
        %v1733 = vmul.f32 %v1732, %v1699
        %v1734 = vmul.f32 %v1732, %v1700
        %v1735 = vadd.f32 %v1679, %v1733
        %v1736 = vadd.f32 %v1680, %v1734
        %s1737 = sld [smem:[#allocation7 + $0x4c]]
        %v1738 = vstv %s1737
        %v1739 = vmul.f32 %v1738, %v1699
        %v1740 = vmul.f32 %v1738, %v1700
        %v1741 = vadd.f32 %v1685, %v1739
        %v1742 = vadd.f32 %v1686, %v1740
        %s1743 = sld [smem:[#allocation7 + $0x70]]
        %v1744 = vstv %s1743
        %v1745 = vmul.f32 %v1744, %v1699
        %v1746 = vmul.f32 %v1744, %v1700
        %v1747 = vadd.f32 %v1691, %v1745
        %v1748 = vadd.f32 %v1692, %v1746
        %s1749 = sld [smem:[#allocation7 + $0x5]]
        %v1750 = vstv %s1749
        %v1751 = vmul.f32 %v1750, %v1707
        %v1752 = vmul.f32 %v1750, %v1708
        %v1753 = vadd.f32 %v1729, %v1751
        %v1754 = vadd.f32 %v1730, %v1752
        %s1755 = sld [smem:[#allocation7 + $0x29]]
        %v1756 = vstv %s1755
        %v1757 = vmul.f32 %v1756, %v1707
        %v1758 = vmul.f32 %v1756, %v1708
        %v1759 = vadd.f32 %v1735, %v1757
        %v1760 = vadd.f32 %v1736, %v1758
        %s1761 = sld [smem:[#allocation7 + $0x4d]]
        %v1762 = vstv %s1761
        %v1763 = vmul.f32 %v1762, %v1707
        %v1764 = vmul.f32 %v1762, %v1708
        %v1765 = vadd.f32 %v1741, %v1763
        %v1766 = vadd.f32 %v1742, %v1764
        %s1767 = sld [smem:[#allocation7 + $0x71]]
        %v1768 = vstv %s1767
        %v1769 = vmul.f32 %v1768, %v1707
        %v1770 = vmul.f32 %v1768, %v1708
        %v1771 = vadd.f32 %v1747, %v1769
        %v1772 = vadd.f32 %v1748, %v1770
        %s1773 = sld [smem:[#allocation7 + $0x6]]
        %v1774 = vstv %s1773
        %v1775 = vmul.f32 %v1774, %v1715
        %v1776 = vmul.f32 %v1774, %v1716
        %v1777 = vadd.f32 %v1753, %v1775
        %v1778 = vadd.f32 %v1754, %v1776
        %s1779 = sld [smem:[#allocation7 + $0x2a]]
        %v1780 = vstv %s1779
        %v1781 = vmul.f32 %v1780, %v1715
        %v1782 = vmul.f32 %v1780, %v1716
        %v1783 = vadd.f32 %v1759, %v1781
        %v1784 = vadd.f32 %v1760, %v1782
        %s1785 = sld [smem:[#allocation7 + $0x4e]]
        %v1786 = vstv %s1785
        %v1787 = vmul.f32 %v1786, %v1715
        %v1788 = vmul.f32 %v1786, %v1716
        %v1789 = vadd.f32 %v1765, %v1787
        %v1790 = vadd.f32 %v1766, %v1788
        %s1791 = sld [smem:[#allocation7 + $0x72]]
        %v1792 = vstv %s1791
        %v1793 = vmul.f32 %v1792, %v1715
        %v1794 = vmul.f32 %v1792, %v1716
        %v1795 = vadd.f32 %v1771, %v1793
        %v1796 = vadd.f32 %v1772, %v1794
        %s1797 = sld [smem:[#allocation7 + $0x7]]
        %v1798 = vstv %s1797
        %v1799 = vmul.f32 %v1798, %v1723
        %v1800 = vmul.f32 %v1798, %v1724
        %v1801 = vadd.f32 %v1777, %v1799
        %v1802 = vadd.f32 %v1778, %v1800
        %s1803 = sld [smem:[#allocation7 + $0x2b]]
        %v1804 = vstv %s1803
        %v1805 = vmul.f32 %v1804, %v1723
        %v1806 = vmul.f32 %v1804, %v1724
        %v1807 = vadd.f32 %v1783, %v1805
        %v1808 = vadd.f32 %v1784, %v1806
        %s1809 = sld [smem:[#allocation7 + $0x4f]]
        %v1810 = vstv %s1809
        %v1811 = vmul.f32 %v1810, %v1723
        %v1812 = vmul.f32 %v1810, %v1724
        %v1813 = vadd.f32 %v1789, %v1811
        %v1814 = vadd.f32 %v1790, %v1812
        %s1815 = sld [smem:[#allocation7 + $0x73]]
        %v1816 = vstv %s1815
        %v1817 = vmul.f32 %v1816, %v1723
        %v1818 = vmul.f32 %v1816, %v1724
        %v1819 = vadd.f32 %v1795, %v1817
        %v1820 = vadd.f32 %v1796, %v1818
        %1821 = vrot.lane.b32.xlu0 %v1549, 15
        %v1822 = vpop.permute.xlu0 %1821
        %1823 = vrot.lane.b32.xlu0 %v1550, 15
        %v1824 = vpop.permute.xlu0 %1823
        %v1825 = vsel %vm635, %v1822, %v1824
        %v1826 = vsel %vm635, %v1824, %v1822
        %v1827 = vmul.f32 %v1826, %v641
        %v1828 = vmul.f32 %v1825, %v645
        %1829 = vrot.lane.b32.xlu0 %v1551, 15
        %v1830 = vpop.permute.xlu0 %1829
        %1831 = vrot.lane.b32.xlu0 %v1552, 15
        %v1832 = vpop.permute.xlu0 %1831
        %v1833 = vsel %vm635, %v1830, %v1832
        %v1834 = vsel %vm635, %v1832, %v1830
        %v1835 = vmul.f32 %v1834, %v641
        %v1836 = vmul.f32 %v1833, %v645
        %1837 = vrot.lane.b32.xlu0 %v1553, 15
        %v1838 = vpop.permute.xlu0 %1837
        %1839 = vrot.lane.b32.xlu0 %v1554, 15
        %v1840 = vpop.permute.xlu0 %1839
        %v1841 = vsel %vm635, %v1838, %v1840
        %v1842 = vsel %vm635, %v1840, %v1838
        %v1843 = vmul.f32 %v1842, %v641
        %v1844 = vmul.f32 %v1841, %v645
        %1845 = vrot.lane.b32.xlu0 %v1555, 15
        %v1846 = vpop.permute.xlu0 %1845
        %1847 = vrot.lane.b32.xlu0 %v1556, 15
        %v1848 = vpop.permute.xlu0 %1847
        %v1849 = vsel %vm635, %v1846, %v1848
        %v1850 = vsel %vm635, %v1848, %v1846
        %v1851 = vmul.f32 %v1850, %v641
        %v1852 = vmul.f32 %v1849, %v645
        %s1853 = sld [smem:[#allocation7 + $0x8]]
        %v1854 = vstv %s1853
        %v1855 = vmul.f32 %v1854, %v1827
        %v1856 = vmul.f32 %v1854, %v1828
        %v1857 = vadd.f32 %v1801, %v1855
        %v1858 = vadd.f32 %v1802, %v1856
        %s1859 = sld [smem:[#allocation7 + $0x2c]]
        %v1860 = vstv %s1859
        %v1861 = vmul.f32 %v1860, %v1827
        %v1862 = vmul.f32 %v1860, %v1828
        %v1863 = vadd.f32 %v1807, %v1861
        %v1864 = vadd.f32 %v1808, %v1862
        %s1865 = sld [smem:[#allocation7 + $0x50]]
        %v1866 = vstv %s1865
        %v1867 = vmul.f32 %v1866, %v1827
        %v1868 = vmul.f32 %v1866, %v1828
        %v1869 = vadd.f32 %v1813, %v1867
        %v1870 = vadd.f32 %v1814, %v1868
        %s1871 = sld [smem:[#allocation7 + $0x74]]
        %v1872 = vstv %s1871
        %v1873 = vmul.f32 %v1872, %v1827
        %v1874 = vmul.f32 %v1872, %v1828
        %v1875 = vadd.f32 %v1819, %v1873
        %v1876 = vadd.f32 %v1820, %v1874
        %s1877 = sld [smem:[#allocation7 + $0x9]]
        %v1878 = vstv %s1877
        %v1879 = vmul.f32 %v1878, %v1835
        %v1880 = vmul.f32 %v1878, %v1836
        %v1881 = vadd.f32 %v1857, %v1879
        %v1882 = vadd.f32 %v1858, %v1880
        %s1883 = sld [smem:[#allocation7 + $0x2d]]
        %v1884 = vstv %s1883
        %v1885 = vmul.f32 %v1884, %v1835
        %v1886 = vmul.f32 %v1884, %v1836
        %v1887 = vadd.f32 %v1863, %v1885
        %v1888 = vadd.f32 %v1864, %v1886
        %s1889 = sld [smem:[#allocation7 + $0x51]]
        %v1890 = vstv %s1889
        %v1891 = vmul.f32 %v1890, %v1835
        %v1892 = vmul.f32 %v1890, %v1836
        %v1893 = vadd.f32 %v1869, %v1891
        %v1894 = vadd.f32 %v1870, %v1892
        %s1895 = sld [smem:[#allocation7 + $0x75]]
        %v1896 = vstv %s1895
        %v1897 = vmul.f32 %v1896, %v1835
        %v1898 = vmul.f32 %v1896, %v1836
        %v1899 = vadd.f32 %v1875, %v1897
        %v1900 = vadd.f32 %v1876, %v1898
        %s1901 = sld [smem:[#allocation7 + $0xa]]
        %v1902 = vstv %s1901
        %v1903 = vmul.f32 %v1902, %v1843
        %v1904 = vmul.f32 %v1902, %v1844
        %v1905 = vadd.f32 %v1881, %v1903
        %v1906 = vadd.f32 %v1882, %v1904
        %s1907 = sld [smem:[#allocation7 + $0x2e]]
        %v1908 = vstv %s1907
        %v1909 = vmul.f32 %v1908, %v1843
        %v1910 = vmul.f32 %v1908, %v1844
        %v1911 = vadd.f32 %v1887, %v1909
        %v1912 = vadd.f32 %v1888, %v1910
        %s1913 = sld [smem:[#allocation7 + $0x52]]
        %v1914 = vstv %s1913
        %v1915 = vmul.f32 %v1914, %v1843
        %v1916 = vmul.f32 %v1914, %v1844
        %v1917 = vadd.f32 %v1893, %v1915
        %v1918 = vadd.f32 %v1894, %v1916
        %s1919 = sld [smem:[#allocation7 + $0x76]]
        %v1920 = vstv %s1919
        %v1921 = vmul.f32 %v1920, %v1843
        %v1922 = vmul.f32 %v1920, %v1844
        %v1923 = vadd.f32 %v1899, %v1921
        %v1924 = vadd.f32 %v1900, %v1922
        %s1925 = sld [smem:[#allocation7 + $0xb]]
        %v1926 = vstv %s1925
        %v1927 = vmul.f32 %v1926, %v1851
        %v1928 = vmul.f32 %v1926, %v1852
        %v1929 = vadd.f32 %v1905, %v1927
        %v1930 = vadd.f32 %v1906, %v1928
        %s1931 = sld [smem:[#allocation7 + $0x2f]]
        %v1932 = vstv %s1931
        %v1933 = vmul.f32 %v1932, %v1851
        %v1934 = vmul.f32 %v1932, %v1852
        %v1935 = vadd.f32 %v1911, %v1933
        %v1936 = vadd.f32 %v1912, %v1934
        %s1937 = sld [smem:[#allocation7 + $0x53]]
        %v1938 = vstv %s1937
        %v1939 = vmul.f32 %v1938, %v1851
        %v1940 = vmul.f32 %v1938, %v1852
        %v1941 = vadd.f32 %v1917, %v1939
        %v1942 = vadd.f32 %v1918, %v1940
        %s1943 = sld [smem:[#allocation7 + $0x77]]
        %v1944 = vstv %s1943
        %v1945 = vmul.f32 %v1944, %v1851
        %v1946 = vmul.f32 %v1944, %v1852
        %v1947 = vadd.f32 %v1923, %v1945
        %v1948 = vadd.f32 %v1924, %v1946
        %1949 = vrot.lane.b32.xlu0 %v1549, 1
        %v1950 = vpop.permute.xlu0 %1949
        %1951 = vrot.lane.b32.xlu0 %v1550, 1
        %v1952 = vpop.permute.xlu0 %1951
        %v1953 = vsel %vm772, %v1950, %v1952
        %v1954 = vsel %vm772, %v1952, %v1950
        %v1955 = vmul.f32 %v1954, %v778
        %v1956 = vmul.f32 %v1953, %v782
        %1957 = vrot.lane.b32.xlu0 %v1551, 1
        %v1958 = vpop.permute.xlu0 %1957
        %1959 = vrot.lane.b32.xlu0 %v1552, 1
        %v1960 = vpop.permute.xlu0 %1959
        %v1961 = vsel %vm772, %v1958, %v1960
        %v1962 = vsel %vm772, %v1960, %v1958
        %v1963 = vmul.f32 %v1962, %v778
        %v1964 = vmul.f32 %v1961, %v782
        %1965 = vrot.lane.b32.xlu0 %v1553, 1
        %v1966 = vpop.permute.xlu0 %1965
        %1967 = vrot.lane.b32.xlu0 %v1554, 1
        %v1968 = vpop.permute.xlu0 %1967
        %v1969 = vsel %vm772, %v1966, %v1968
        %v1970 = vsel %vm772, %v1968, %v1966
        %v1971 = vmul.f32 %v1970, %v778
        %v1972 = vmul.f32 %v1969, %v782
        %1973 = vrot.lane.b32.xlu0 %v1555, 1
        %v1974 = vpop.permute.xlu0 %1973
        %1975 = vrot.lane.b32.xlu0 %v1556, 1
        %v1976 = vpop.permute.xlu0 %1975
        %v1977 = vsel %vm772, %v1974, %v1976
        %v1978 = vsel %vm772, %v1976, %v1974
        %v1979 = vmul.f32 %v1978, %v778
        %v1980 = vmul.f32 %v1977, %v782
        %s1981 = sld [smem:[#allocation7 + $0xc]]
        %v1982 = vstv %s1981
        %v1983 = vmul.f32 %v1982, %v1955
        %v1984 = vmul.f32 %v1982, %v1956
        %v1985 = vadd.f32 %v1929, %v1983
        %v1986 = vadd.f32 %v1930, %v1984
        %s1987 = sld [smem:[#allocation7 + $0x30]]
        %v1988 = vstv %s1987
        %v1989 = vmul.f32 %v1988, %v1955
        %v1990 = vmul.f32 %v1988, %v1956
        %v1991 = vadd.f32 %v1935, %v1989
        %v1992 = vadd.f32 %v1936, %v1990
        %s1993 = sld [smem:[#allocation7 + $0x54]]
        %v1994 = vstv %s1993
        %v1995 = vmul.f32 %v1994, %v1955
        %v1996 = vmul.f32 %v1994, %v1956
        %v1997 = vadd.f32 %v1941, %v1995
        %v1998 = vadd.f32 %v1942, %v1996
        %s1999 = sld [smem:[#allocation7 + $0x78]]
        %v2000 = vstv %s1999
        %v2001 = vmul.f32 %v2000, %v1955
        %v2002 = vmul.f32 %v2000, %v1956
        %v2003 = vadd.f32 %v1947, %v2001
        %v2004 = vadd.f32 %v1948, %v2002
        %s2005 = sld [smem:[#allocation7 + $0xd]]
        %v2006 = vstv %s2005
        %v2007 = vmul.f32 %v2006, %v1963
        %v2008 = vmul.f32 %v2006, %v1964
        %v2009 = vadd.f32 %v1985, %v2007
        %v2010 = vadd.f32 %v1986, %v2008
        %s2011 = sld [smem:[#allocation7 + $0x31]]
        %v2012 = vstv %s2011
        %v2013 = vmul.f32 %v2012, %v1963
        %v2014 = vmul.f32 %v2012, %v1964
        %v2015 = vadd.f32 %v1991, %v2013
        %v2016 = vadd.f32 %v1992, %v2014
        %s2017 = sld [smem:[#allocation7 + $0x55]]
        %v2018 = vstv %s2017
        %v2019 = vmul.f32 %v2018, %v1963
        %v2020 = vmul.f32 %v2018, %v1964
        %v2021 = vadd.f32 %v1997, %v2019
        %v2022 = vadd.f32 %v1998, %v2020
        %s2023 = sld [smem:[#allocation7 + $0x79]]
        %v2024 = vstv %s2023
        %v2025 = vmul.f32 %v2024, %v1963
        %v2026 = vmul.f32 %v2024, %v1964
        %v2027 = vadd.f32 %v2003, %v2025
        %v2028 = vadd.f32 %v2004, %v2026
        %s2029 = sld [smem:[#allocation7 + $0xe]]
        %v2030 = vstv %s2029
        %v2031 = vmul.f32 %v2030, %v1971
        %v2032 = vmul.f32 %v2030, %v1972
        %v2033 = vadd.f32 %v2009, %v2031
        %v2034 = vadd.f32 %v2010, %v2032
        %s2035 = sld [smem:[#allocation7 + $0x32]]
        %v2036 = vstv %s2035
        %v2037 = vmul.f32 %v2036, %v1971
        %v2038 = vmul.f32 %v2036, %v1972
        %v2039 = vadd.f32 %v2015, %v2037
        %v2040 = vadd.f32 %v2016, %v2038
        %s2041 = sld [smem:[#allocation7 + $0x56]]
        %v2042 = vstv %s2041
        %v2043 = vmul.f32 %v2042, %v1971
        %v2044 = vmul.f32 %v2042, %v1972
        %v2045 = vadd.f32 %v2021, %v2043
        %v2046 = vadd.f32 %v2022, %v2044
        %s2047 = sld [smem:[#allocation7 + $0x7a]]
        %v2048 = vstv %s2047
        %v2049 = vmul.f32 %v2048, %v1971
        %v2050 = vmul.f32 %v2048, %v1972
        %v2051 = vadd.f32 %v2027, %v2049
        %v2052 = vadd.f32 %v2028, %v2050
        %s2053 = sld [smem:[#allocation7 + $0xf]]
        %v2054 = vstv %s2053
        %v2055 = vmul.f32 %v2054, %v1979
        %v2056 = vmul.f32 %v2054, %v1980
        %v2057 = vadd.f32 %v2033, %v2055
        %v2058 = vadd.f32 %v2034, %v2056
        %s2059 = sld [smem:[#allocation7 + $0x33]]
        %v2060 = vstv %s2059
        %v2061 = vmul.f32 %v2060, %v1979
        %v2062 = vmul.f32 %v2060, %v1980
        %v2063 = vadd.f32 %v2039, %v2061
        %v2064 = vadd.f32 %v2040, %v2062
        %s2065 = sld [smem:[#allocation7 + $0x57]]
        %v2066 = vstv %s2065
        %v2067 = vmul.f32 %v2066, %v1979
        %v2068 = vmul.f32 %v2066, %v1980
        %v2069 = vadd.f32 %v2045, %v2067
        %v2070 = vadd.f32 %v2046, %v2068
        %s2071 = sld [smem:[#allocation7 + $0x7b]]
        %v2072 = vstv %s2071
        %v2073 = vmul.f32 %v2072, %v1979
        %v2074 = vmul.f32 %v2072, %v1980
        %v2075 = vadd.f32 %v2051, %v2073
        %v2076 = vadd.f32 %v2052, %v2074
        %s2077 = sld [smem:[#allocation7 + $0x10]]
        %v2078 = vstv %s2077
        %v2079 = vmul.f32 %v2078, %v1549
        %v2080 = vmul.f32 %v2078, %v1550
        %v2081 = vadd.f32 %v2057, %v2079
        %v2082 = vadd.f32 %v2058, %v2080
        %s2083 = sld [smem:[#allocation7 + $0x34]]
        %v2084 = vstv %s2083
        %v2085 = vmul.f32 %v2084, %v1549
        %v2086 = vmul.f32 %v2084, %v1550
        %v2087 = vadd.f32 %v2063, %v2085
        %v2088 = vadd.f32 %v2064, %v2086
        %s2089 = sld [smem:[#allocation7 + $0x58]]
        %v2090 = vstv %s2089
        %v2091 = vmul.f32 %v2090, %v1549
        %v2092 = vmul.f32 %v2090, %v1550
        %v2093 = vadd.f32 %v2069, %v2091
        %v2094 = vadd.f32 %v2070, %v2092
        %s2095 = sld [smem:[#allocation7 + $0x7c]]
        %v2096 = vstv %s2095
        %v2097 = vmul.f32 %v2096, %v1549
        %v2098 = vmul.f32 %v2096, %v1550
        %v2099 = vadd.f32 %v2075, %v2097
        %v2100 = vadd.f32 %v2076, %v2098
        %s2101 = sld [smem:[#allocation7 + $0x11]]
        %v2102 = vstv %s2101
        %v2103 = vmul.f32 %v2102, %v1551
        %v2104 = vmul.f32 %v2102, %v1552
        %v2105 = vadd.f32 %v2081, %v2103
        %v2106 = vadd.f32 %v2082, %v2104
        %s2107 = sld [smem:[#allocation7 + $0x35]]
        %v2108 = vstv %s2107
        %v2109 = vmul.f32 %v2108, %v1551
        %v2110 = vmul.f32 %v2108, %v1552
        %v2111 = vadd.f32 %v2087, %v2109
        %v2112 = vadd.f32 %v2088, %v2110
        %s2113 = sld [smem:[#allocation7 + $0x59]]
        %v2114 = vstv %s2113
        %v2115 = vmul.f32 %v2114, %v1551
        %v2116 = vmul.f32 %v2114, %v1552
        %v2117 = vadd.f32 %v2093, %v2115
        %v2118 = vadd.f32 %v2094, %v2116
        %s2119 = sld [smem:[#allocation7 + $0x7d]]
        %v2120 = vstv %s2119
        %v2121 = vmul.f32 %v2120, %v1551
        %v2122 = vmul.f32 %v2120, %v1552
        %v2123 = vadd.f32 %v2099, %v2121
        %v2124 = vadd.f32 %v2100, %v2122
        %s2125 = sld [smem:[#allocation7 + $0x12]]
        %v2126 = vstv %s2125
        %v2127 = vmul.f32 %v2126, %v1553
        %v2128 = vmul.f32 %v2126, %v1554
        %v2129 = vadd.f32 %v2105, %v2127
        %v2130 = vadd.f32 %v2106, %v2128
        %s2131 = sld [smem:[#allocation7 + $0x36]]
        %v2132 = vstv %s2131
        %v2133 = vmul.f32 %v2132, %v1553
        %v2134 = vmul.f32 %v2132, %v1554
        %v2135 = vadd.f32 %v2111, %v2133
        %v2136 = vadd.f32 %v2112, %v2134
        %s2137 = sld [smem:[#allocation7 + $0x5a]]
        %v2138 = vstv %s2137
        %v2139 = vmul.f32 %v2138, %v1553
        %v2140 = vmul.f32 %v2138, %v1554
        %v2141 = vadd.f32 %v2117, %v2139
        %v2142 = vadd.f32 %v2118, %v2140
        %s2143 = sld [smem:[#allocation7 + $0x7e]]
        %v2144 = vstv %s2143
        %v2145 = vmul.f32 %v2144, %v1553
        %v2146 = vmul.f32 %v2144, %v1554
        %v2147 = vadd.f32 %v2123, %v2145
        %v2148 = vadd.f32 %v2124, %v2146
        %s2149 = sld [smem:[#allocation7 + $0x13]]
        %v2150 = vstv %s2149
        %v2151 = vmul.f32 %v2150, %v1555
        %v2152 = vmul.f32 %v2150, %v1556
        %v2153 = vadd.f32 %v2129, %v2151
        %v2154 = vadd.f32 %v2130, %v2152
        %s2155 = sld [smem:[#allocation7 + $0x37]]
        %v2156 = vstv %s2155
        %v2157 = vmul.f32 %v2156, %v1555
        %v2158 = vmul.f32 %v2156, %v1556
        %v2159 = vadd.f32 %v2135, %v2157
        %v2160 = vadd.f32 %v2136, %v2158
        %s2161 = sld [smem:[#allocation7 + $0x5b]]
        %v2162 = vstv %s2161
        %v2163 = vmul.f32 %v2162, %v1555
        %v2164 = vmul.f32 %v2162, %v1556
        %v2165 = vadd.f32 %v2141, %v2163
        %v2166 = vadd.f32 %v2142, %v2164
        %s2167 = sld [smem:[#allocation7 + $0x7f]]
        %v2168 = vstv %s2167
        %v2169 = vmul.f32 %v2168, %v1555
        %v2170 = vmul.f32 %v2168, %v1556
        %v2171 = vadd.f32 %v2147, %v2169
        %v2172 = vadd.f32 %v2148, %v2170
        %2173 = vrot.lane.b32.xlu0 %v1549, 127
        %v2174 = vpop.permute.xlu0 %2173
        %2175 = vrot.lane.b32.xlu0 %v1550, 127
        %v2176 = vpop.permute.xlu0 %2175
        %v2177 = vsel %vm1005, %v2174, %v2176
        %v2178 = vsel %vm1005, %v2176, %v2174
        %v2179 = vmul.f32 %v2177, %v1011
        %v2180 = vmul.f32 %v2178, %v1015
        %2181 = vrot.lane.b32.xlu0 %v1551, 127
        %v2182 = vpop.permute.xlu0 %2181
        %2183 = vrot.lane.b32.xlu0 %v1552, 127
        %v2184 = vpop.permute.xlu0 %2183
        %v2185 = vsel %vm1005, %v2182, %v2184
        %v2186 = vsel %vm1005, %v2184, %v2182
        %v2187 = vmul.f32 %v2185, %v1011
        %v2188 = vmul.f32 %v2186, %v1015
        %2189 = vrot.lane.b32.xlu0 %v1553, 127
        %v2190 = vpop.permute.xlu0 %2189
        %2191 = vrot.lane.b32.xlu0 %v1554, 127
        %v2192 = vpop.permute.xlu0 %2191
        %v2193 = vsel %vm1005, %v2190, %v2192
        %v2194 = vsel %vm1005, %v2192, %v2190
        %v2195 = vmul.f32 %v2193, %v1011
        %v2196 = vmul.f32 %v2194, %v1015
        %2197 = vrot.lane.b32.xlu0 %v1555, 127
        %v2198 = vpop.permute.xlu0 %2197
        %2199 = vrot.lane.b32.xlu0 %v1556, 127
        %v2200 = vpop.permute.xlu0 %2199
        %v2201 = vsel %vm1005, %v2198, %v2200
        %v2202 = vsel %vm1005, %v2200, %v2198
        %v2203 = vmul.f32 %v2201, %v1011
        %v2204 = vmul.f32 %v2202, %v1015
        %s2205 = sld [smem:[#allocation7 + $0x14]]
        %v2206 = vstv %s2205
        %v2207 = vmul.f32 %v2206, %v2179
        %v2208 = vmul.f32 %v2206, %v2180
        %v2209 = vadd.f32 %v2153, %v2207
        %v2210 = vadd.f32 %v2154, %v2208
        %s2211 = sld [smem:[#allocation7 + $0x38]]
        %v2212 = vstv %s2211
        %v2213 = vmul.f32 %v2212, %v2179
        %v2214 = vmul.f32 %v2212, %v2180
        %v2215 = vadd.f32 %v2159, %v2213
        %v2216 = vadd.f32 %v2160, %v2214
        %s2217 = sld [smem:[#allocation7 + $0x5c]]
        %v2218 = vstv %s2217
        %v2219 = vmul.f32 %v2218, %v2179
        %v2220 = vmul.f32 %v2218, %v2180
        %v2221 = vadd.f32 %v2165, %v2219
        %v2222 = vadd.f32 %v2166, %v2220
        %s2223 = sld [smem:[#allocation7 + $0x80]]
        %v2224 = vstv %s2223
        %v2225 = vmul.f32 %v2224, %v2179
        %v2226 = vmul.f32 %v2224, %v2180
        %v2227 = vadd.f32 %v2171, %v2225
        %v2228 = vadd.f32 %v2172, %v2226
        %s2229 = sld [smem:[#allocation7 + $0x15]]
        %v2230 = vstv %s2229
        %v2231 = vmul.f32 %v2230, %v2187
        %v2232 = vmul.f32 %v2230, %v2188
        %v2233 = vadd.f32 %v2209, %v2231
        %v2234 = vadd.f32 %v2210, %v2232
        %s2235 = sld [smem:[#allocation7 + $0x39]]
        %v2236 = vstv %s2235
        %v2237 = vmul.f32 %v2236, %v2187
        %v2238 = vmul.f32 %v2236, %v2188
        %v2239 = vadd.f32 %v2215, %v2237
        %v2240 = vadd.f32 %v2216, %v2238
        %s2241 = sld [smem:[#allocation7 + $0x5d]]
        %v2242 = vstv %s2241
        %v2243 = vmul.f32 %v2242, %v2187
        %v2244 = vmul.f32 %v2242, %v2188
        %v2245 = vadd.f32 %v2221, %v2243
        %v2246 = vadd.f32 %v2222, %v2244
        %s2247 = sld [smem:[#allocation7 + $0x81]]
        %v2248 = vstv %s2247
        %v2249 = vmul.f32 %v2248, %v2187
        %v2250 = vmul.f32 %v2248, %v2188
        %v2251 = vadd.f32 %v2227, %v2249
        %v2252 = vadd.f32 %v2228, %v2250
        %s2253 = sld [smem:[#allocation7 + $0x16]]
        %v2254 = vstv %s2253
        %v2255 = vmul.f32 %v2254, %v2195
        %v2256 = vmul.f32 %v2254, %v2196
        %v2257 = vadd.f32 %v2233, %v2255
        %v2258 = vadd.f32 %v2234, %v2256
        %s2259 = sld [smem:[#allocation7 + $0x3a]]
        %v2260 = vstv %s2259
        %v2261 = vmul.f32 %v2260, %v2195
        %v2262 = vmul.f32 %v2260, %v2196
        %v2263 = vadd.f32 %v2239, %v2261
        %v2264 = vadd.f32 %v2240, %v2262
        %s2265 = sld [smem:[#allocation7 + $0x5e]]
        %v2266 = vstv %s2265
        %v2267 = vmul.f32 %v2266, %v2195
        %v2268 = vmul.f32 %v2266, %v2196
        %v2269 = vadd.f32 %v2245, %v2267
        %v2270 = vadd.f32 %v2246, %v2268
        %s2271 = sld [smem:[#allocation7 + $0x82]]
        %v2272 = vstv %s2271
        %v2273 = vmul.f32 %v2272, %v2195
        %v2274 = vmul.f32 %v2272, %v2196
        %v2275 = vadd.f32 %v2251, %v2273
        %v2276 = vadd.f32 %v2252, %v2274
        %s2277 = sld [smem:[#allocation7 + $0x17]]
        %v2278 = vstv %s2277
        %v2279 = vmul.f32 %v2278, %v2203
        %v2280 = vmul.f32 %v2278, %v2204
        %v2281 = vadd.f32 %v2257, %v2279
        %v2282 = vadd.f32 %v2258, %v2280
        %s2283 = sld [smem:[#allocation7 + $0x3b]]
        %v2284 = vstv %s2283
        %v2285 = vmul.f32 %v2284, %v2203
        %v2286 = vmul.f32 %v2284, %v2204
        %v2287 = vadd.f32 %v2263, %v2285
        %v2288 = vadd.f32 %v2264, %v2286
        %s2289 = sld [smem:[#allocation7 + $0x5f]]
        %v2290 = vstv %s2289
        %v2291 = vmul.f32 %v2290, %v2203
        %v2292 = vmul.f32 %v2290, %v2204
        %v2293 = vadd.f32 %v2269, %v2291
        %v2294 = vadd.f32 %v2270, %v2292
        %s2295 = sld [smem:[#allocation7 + $0x83]]
        %v2296 = vstv %s2295
        %v2297 = vmul.f32 %v2296, %v2203
        %v2298 = vmul.f32 %v2296, %v2204
        %v2299 = vadd.f32 %v2275, %v2297
        %v2300 = vadd.f32 %v2276, %v2298
        %2301 = vrot.lane.b32.xlu0 %v1549, 113
        %v2302 = vpop.permute.xlu0 %2301
        %2303 = vrot.lane.b32.xlu0 %v1550, 113
        %v2304 = vpop.permute.xlu0 %2303
        %v2305 = vsel %vm1142, %v2302, %v2304
        %v2306 = vsel %vm1142, %v2304, %v2302
        %v2307 = vmul.f32 %v2305, %v1148
        %v2308 = vmul.f32 %v2306, %v1152
        %2309 = vrot.lane.b32.xlu0 %v1551, 113
        %v2310 = vpop.permute.xlu0 %2309
        %2311 = vrot.lane.b32.xlu0 %v1552, 113
        %v2312 = vpop.permute.xlu0 %2311
        %v2313 = vsel %vm1142, %v2310, %v2312
        %v2314 = vsel %vm1142, %v2312, %v2310
        %v2315 = vmul.f32 %v2313, %v1148
        %v2316 = vmul.f32 %v2314, %v1152
        %2317 = vrot.lane.b32.xlu0 %v1553, 113
        %v2318 = vpop.permute.xlu0 %2317
        %2319 = vrot.lane.b32.xlu0 %v1554, 113
        %v2320 = vpop.permute.xlu0 %2319
        %v2321 = vsel %vm1142, %v2318, %v2320
        %v2322 = vsel %vm1142, %v2320, %v2318
        %v2323 = vmul.f32 %v2321, %v1148
        %v2324 = vmul.f32 %v2322, %v1152
        %2325 = vrot.lane.b32.xlu0 %v1555, 113
        %v2326 = vpop.permute.xlu0 %2325
        %2327 = vrot.lane.b32.xlu0 %v1556, 113
        %v2328 = vpop.permute.xlu0 %2327
        %v2329 = vsel %vm1142, %v2326, %v2328
        %v2330 = vsel %vm1142, %v2328, %v2326
        %v2331 = vmul.f32 %v2329, %v1148
        %v2332 = vmul.f32 %v2330, %v1152
        %s2333 = sld [smem:[#allocation7 + $0x18]]
        %v2334 = vstv %s2333
        %v2335 = vmul.f32 %v2334, %v2307
        %v2336 = vmul.f32 %v2334, %v2308
        %v2337 = vadd.f32 %v2281, %v2335
        %v2338 = vadd.f32 %v2282, %v2336
        %s2339 = sld [smem:[#allocation7 + $0x3c]]
        %v2340 = vstv %s2339
        %v2341 = vmul.f32 %v2340, %v2307
        %v2342 = vmul.f32 %v2340, %v2308
        %v2343 = vadd.f32 %v2287, %v2341
        %v2344 = vadd.f32 %v2288, %v2342
        %s2345 = sld [smem:[#allocation7 + $0x60]]
        %v2346 = vstv %s2345
        %v2347 = vmul.f32 %v2346, %v2307
        %v2348 = vmul.f32 %v2346, %v2308
        %v2349 = vadd.f32 %v2293, %v2347
        %v2350 = vadd.f32 %v2294, %v2348
        %s2351 = sld [smem:[#allocation7 + $0x84]]
        %v2352 = vstv %s2351
        %v2353 = vmul.f32 %v2352, %v2307
        %v2354 = vmul.f32 %v2352, %v2308
        %v2355 = vadd.f32 %v2299, %v2353
        %v2356 = vadd.f32 %v2300, %v2354
        %s2357 = sld [smem:[#allocation7 + $0x19]]
        %v2358 = vstv %s2357
        %v2359 = vmul.f32 %v2358, %v2315
        %v2360 = vmul.f32 %v2358, %v2316
        %v2361 = vadd.f32 %v2337, %v2359
        %v2362 = vadd.f32 %v2338, %v2360
        %s2363 = sld [smem:[#allocation7 + $0x3d]]
        %v2364 = vstv %s2363
        %v2365 = vmul.f32 %v2364, %v2315
        %v2366 = vmul.f32 %v2364, %v2316
        %v2367 = vadd.f32 %v2343, %v2365
        %v2368 = vadd.f32 %v2344, %v2366
        %s2369 = sld [smem:[#allocation7 + $0x61]]
        %v2370 = vstv %s2369
        %v2371 = vmul.f32 %v2370, %v2315
        %v2372 = vmul.f32 %v2370, %v2316
        %v2373 = vadd.f32 %v2349, %v2371
        %v2374 = vadd.f32 %v2350, %v2372
        %s2375 = sld [smem:[#allocation7 + $0x85]]
        %v2376 = vstv %s2375
        %v2377 = vmul.f32 %v2376, %v2315
        %v2378 = vmul.f32 %v2376, %v2316
        %v2379 = vadd.f32 %v2355, %v2377
        %v2380 = vadd.f32 %v2356, %v2378
        %s2381 = sld [smem:[#allocation7 + $0x1a]]
        %v2382 = vstv %s2381
        %v2383 = vmul.f32 %v2382, %v2323
        %v2384 = vmul.f32 %v2382, %v2324
        %v2385 = vadd.f32 %v2361, %v2383
        %v2386 = vadd.f32 %v2362, %v2384
        %s2387 = sld [smem:[#allocation7 + $0x3e]]
        %v2388 = vstv %s2387
        %v2389 = vmul.f32 %v2388, %v2323
        %v2390 = vmul.f32 %v2388, %v2324
        %v2391 = vadd.f32 %v2367, %v2389
        %v2392 = vadd.f32 %v2368, %v2390
        %s2393 = sld [smem:[#allocation7 + $0x62]]
        %v2394 = vstv %s2393
        %v2395 = vmul.f32 %v2394, %v2323
        %v2396 = vmul.f32 %v2394, %v2324
        %v2397 = vadd.f32 %v2373, %v2395
        %v2398 = vadd.f32 %v2374, %v2396
        %s2399 = sld [smem:[#allocation7 + $0x86]]
        %v2400 = vstv %s2399
        %v2401 = vmul.f32 %v2400, %v2323
        %v2402 = vmul.f32 %v2400, %v2324
        %v2403 = vadd.f32 %v2379, %v2401
        %v2404 = vadd.f32 %v2380, %v2402
        %s2405 = sld [smem:[#allocation7 + $0x1b]]
        %v2406 = vstv %s2405
        %v2407 = vmul.f32 %v2406, %v2331
        %v2408 = vmul.f32 %v2406, %v2332
        %v2409 = vadd.f32 %v2385, %v2407
        %v2410 = vadd.f32 %v2386, %v2408
        %s2411 = sld [smem:[#allocation7 + $0x3f]]
        %v2412 = vstv %s2411
        %v2413 = vmul.f32 %v2412, %v2331
        %v2414 = vmul.f32 %v2412, %v2332
        %v2415 = vadd.f32 %v2391, %v2413
        %v2416 = vadd.f32 %v2392, %v2414
        %s2417 = sld [smem:[#allocation7 + $0x63]]
        %v2418 = vstv %s2417
        %v2419 = vmul.f32 %v2418, %v2331
        %v2420 = vmul.f32 %v2418, %v2332
        %v2421 = vadd.f32 %v2397, %v2419
        %v2422 = vadd.f32 %v2398, %v2420
        %s2423 = sld [smem:[#allocation7 + $0x87]]
        %v2424 = vstv %s2423
        %v2425 = vmul.f32 %v2424, %v2331
        %v2426 = vmul.f32 %v2424, %v2332
        %v2427 = vadd.f32 %v2403, %v2425
        %v2428 = vadd.f32 %v2404, %v2426
        %2429 = vrot.lane.b32.xlu0 %v1549, 112
        %v2430 = vpop.permute.xlu0 %2429
        %2431 = vrot.lane.b32.xlu0 %v1550, 112
        %v2432 = vpop.permute.xlu0 %2431
        %v2433 = vsel %vm1279, %v2430, %v2432
        %v2434 = vsel %vm1279, %v2432, %v2430
        %v2435 = vmul.f32 %v2433, %v1285
        %v2436 = vmul.f32 %v2434, %v1289
        %2437 = vrot.lane.b32.xlu0 %v1551, 112
        %v2438 = vpop.permute.xlu0 %2437
        %2439 = vrot.lane.b32.xlu0 %v1552, 112
        %v2440 = vpop.permute.xlu0 %2439
        %v2441 = vsel %vm1279, %v2438, %v2440
        %v2442 = vsel %vm1279, %v2440, %v2438
        %v2443 = vmul.f32 %v2441, %v1285
        %v2444 = vmul.f32 %v2442, %v1289
        %2445 = vrot.lane.b32.xlu0 %v1553, 112
        %v2446 = vpop.permute.xlu0 %2445
        %2447 = vrot.lane.b32.xlu0 %v1554, 112
        %v2448 = vpop.permute.xlu0 %2447
        %v2449 = vsel %vm1279, %v2446, %v2448
        %v2450 = vsel %vm1279, %v2448, %v2446
        %v2451 = vmul.f32 %v2449, %v1285
        %v2452 = vmul.f32 %v2450, %v1289
        %2453 = vrot.lane.b32.xlu0 %v1555, 112
        %v2454 = vpop.permute.xlu0 %2453
        %2455 = vrot.lane.b32.xlu0 %v1556, 112
        %v2456 = vpop.permute.xlu0 %2455
        %v2457 = vsel %vm1279, %v2454, %v2456
        %v2458 = vsel %vm1279, %v2456, %v2454
        %v2459 = vmul.f32 %v2457, %v1285
        %v2460 = vmul.f32 %v2458, %v1289
        %s2461 = sld [smem:[#allocation7 + $0x1c]]
        %v2462 = vstv %s2461
        %v2463 = vmul.f32 %v2462, %v2435
        %v2464 = vmul.f32 %v2462, %v2436
        %v2465 = vadd.f32 %v2409, %v2463
        %v2466 = vadd.f32 %v2410, %v2464
        %s2467 = sld [smem:[#allocation7 + $0x40]]
        %v2468 = vstv %s2467
        %v2469 = vmul.f32 %v2468, %v2435
        %v2470 = vmul.f32 %v2468, %v2436
        %v2471 = vadd.f32 %v2415, %v2469
        %v2472 = vadd.f32 %v2416, %v2470
        %s2473 = sld [smem:[#allocation7 + $0x64]]
        %v2474 = vstv %s2473
        %v2475 = vmul.f32 %v2474, %v2435
        %v2476 = vmul.f32 %v2474, %v2436
        %v2477 = vadd.f32 %v2421, %v2475
        %v2478 = vadd.f32 %v2422, %v2476
        %s2479 = sld [smem:[#allocation7 + $0x88]]
        %v2480 = vstv %s2479
        %v2481 = vmul.f32 %v2480, %v2435
        %v2482 = vmul.f32 %v2480, %v2436
        %v2483 = vadd.f32 %v2427, %v2481
        %v2484 = vadd.f32 %v2428, %v2482
        %s2485 = sld [smem:[#allocation7 + $0x1d]]
        %v2486 = vstv %s2485
        %v2487 = vmul.f32 %v2486, %v2443
        %v2488 = vmul.f32 %v2486, %v2444
        %v2489 = vadd.f32 %v2465, %v2487
        %v2490 = vadd.f32 %v2466, %v2488
        %s2491 = sld [smem:[#allocation7 + $0x41]]
        %v2492 = vstv %s2491
        %v2493 = vmul.f32 %v2492, %v2443
        %v2494 = vmul.f32 %v2492, %v2444
        %v2495 = vadd.f32 %v2471, %v2493
        %v2496 = vadd.f32 %v2472, %v2494
        %s2497 = sld [smem:[#allocation7 + $0x65]]
        %v2498 = vstv %s2497
        %v2499 = vmul.f32 %v2498, %v2443
        %v2500 = vmul.f32 %v2498, %v2444
        %v2501 = vadd.f32 %v2477, %v2499
        %v2502 = vadd.f32 %v2478, %v2500
        %s2503 = sld [smem:[#allocation7 + $0x89]]
        %v2504 = vstv %s2503
        %v2505 = vmul.f32 %v2504, %v2443
        %v2506 = vmul.f32 %v2504, %v2444
        %v2507 = vadd.f32 %v2483, %v2505
        %v2508 = vadd.f32 %v2484, %v2506
        %s2509 = sld [smem:[#allocation7 + $0x1e]]
        %v2510 = vstv %s2509
        %v2511 = vmul.f32 %v2510, %v2451
        %v2512 = vmul.f32 %v2510, %v2452
        %v2513 = vadd.f32 %v2489, %v2511
        %v2514 = vadd.f32 %v2490, %v2512
        %s2515 = sld [smem:[#allocation7 + $0x42]]
        %v2516 = vstv %s2515
        %v2517 = vmul.f32 %v2516, %v2451
        %v2518 = vmul.f32 %v2516, %v2452
        %v2519 = vadd.f32 %v2495, %v2517
        %v2520 = vadd.f32 %v2496, %v2518
        %s2521 = sld [smem:[#allocation7 + $0x66]]
        %v2522 = vstv %s2521
        %v2523 = vmul.f32 %v2522, %v2451
        %v2524 = vmul.f32 %v2522, %v2452
        %v2525 = vadd.f32 %v2501, %v2523
        %v2526 = vadd.f32 %v2502, %v2524
        %s2527 = sld [smem:[#allocation7 + $0x8a]]
        %v2528 = vstv %s2527
        %v2529 = vmul.f32 %v2528, %v2451
        %v2530 = vmul.f32 %v2528, %v2452
        %v2531 = vadd.f32 %v2507, %v2529
        %v2532 = vadd.f32 %v2508, %v2530
        %s2533 = sld [smem:[#allocation7 + $0x1f]]
        %v2534 = vstv %s2533
        %v2535 = vmul.f32 %v2534, %v2459
        %v2536 = vmul.f32 %v2534, %v2460
        %v2537 = vadd.f32 %v2513, %v2535
        %v2538 = vadd.f32 %v2514, %v2536
        %s2539 = sld [smem:[#allocation7 + $0x43]]
        %v2540 = vstv %s2539
        %v2541 = vmul.f32 %v2540, %v2459
        %v2542 = vmul.f32 %v2540, %v2460
        %v2543 = vadd.f32 %v2519, %v2541
        %v2544 = vadd.f32 %v2520, %v2542
        %s2545 = sld [smem:[#allocation7 + $0x67]]
        %v2546 = vstv %s2545
        %v2547 = vmul.f32 %v2546, %v2459
        %v2548 = vmul.f32 %v2546, %v2460
        %v2549 = vadd.f32 %v2525, %v2547
        %v2550 = vadd.f32 %v2526, %v2548
        %s2551 = sld [smem:[#allocation7 + $0x8b]]
        %v2552 = vstv %s2551
        %v2553 = vmul.f32 %v2552, %v2459
        %v2554 = vmul.f32 %v2552, %v2460
        %v2555 = vadd.f32 %v2531, %v2553
        %v2556 = vadd.f32 %v2532, %v2554
        %2557 = vrot.lane.b32.xlu0 %v1549, 111
        %v2558 = vpop.permute.xlu0 %2557
        %2559 = vrot.lane.b32.xlu0 %v1550, 111
        %v2560 = vpop.permute.xlu0 %2559
        %v2561 = vsel %vm1416, %v2558, %v2560
        %v2562 = vsel %vm1416, %v2560, %v2558
        %v2563 = vmul.f32 %v2561, %v1422
        %v2564 = vmul.f32 %v2562, %v1426
        %2565 = vrot.lane.b32.xlu0 %v1551, 111
        %v2566 = vpop.permute.xlu0 %2565
        %2567 = vrot.lane.b32.xlu0 %v1552, 111
        %v2568 = vpop.permute.xlu0 %2567
        %v2569 = vsel %vm1416, %v2566, %v2568
        %v2570 = vsel %vm1416, %v2568, %v2566
        %v2571 = vmul.f32 %v2569, %v1422
        %v2572 = vmul.f32 %v2570, %v1426
        %2573 = vrot.lane.b32.xlu0 %v1553, 111
        %v2574 = vpop.permute.xlu0 %2573
        %2575 = vrot.lane.b32.xlu0 %v1554, 111
        %v2576 = vpop.permute.xlu0 %2575
        %v2577 = vsel %vm1416, %v2574, %v2576
        %v2578 = vsel %vm1416, %v2576, %v2574
        %v2579 = vmul.f32 %v2577, %v1422
        %v2580 = vmul.f32 %v2578, %v1426
        %2581 = vrot.lane.b32.xlu0 %v1555, 111
        %v2582 = vpop.permute.xlu0 %2581
        %2583 = vrot.lane.b32.xlu0 %v1556, 111
        %v2584 = vpop.permute.xlu0 %2583
        %v2585 = vsel %vm1416, %v2582, %v2584
        %v2586 = vsel %vm1416, %v2584, %v2582
        %v2587 = vmul.f32 %v2585, %v1422
        %v2588 = vmul.f32 %v2586, %v1426
        %s2589 = sld [smem:[#allocation7 + $0x20]]
        %v2590 = vstv %s2589
        %v2591 = vmul.f32 %v2590, %v2563
        %v2592 = vmul.f32 %v2590, %v2564
        %v2593 = vadd.f32 %v2537, %v2591
        %v2594 = vadd.f32 %v2538, %v2592
        %s2595 = sld [smem:[#allocation7 + $0x44]]
        %v2596 = vstv %s2595
        %v2597 = vmul.f32 %v2596, %v2563
        %v2598 = vmul.f32 %v2596, %v2564
        %v2599 = vadd.f32 %v2543, %v2597
        %v2600 = vadd.f32 %v2544, %v2598
        %s2601 = sld [smem:[#allocation7 + $0x68]]
        %v2602 = vstv %s2601
        %v2603 = vmul.f32 %v2602, %v2563
        %v2604 = vmul.f32 %v2602, %v2564
        %v2605 = vadd.f32 %v2549, %v2603
        %v2606 = vadd.f32 %v2550, %v2604
        %s2607 = sld [smem:[#allocation7 + $0x8c]]
        %v2608 = vstv %s2607
        %v2609 = vmul.f32 %v2608, %v2563
        %v2610 = vmul.f32 %v2608, %v2564
        %v2611 = vadd.f32 %v2555, %v2609
        %v2612 = vadd.f32 %v2556, %v2610
        %s2613 = sld [smem:[#allocation7 + $0x21]]
        %v2614 = vstv %s2613
        %v2615 = vmul.f32 %v2614, %v2571
        %v2616 = vmul.f32 %v2614, %v2572
        %v2617 = vadd.f32 %v2593, %v2615
        %v2618 = vadd.f32 %v2594, %v2616
        %s2619 = sld [smem:[#allocation7 + $0x45]]
        %v2620 = vstv %s2619
        %v2621 = vmul.f32 %v2620, %v2571
        %v2622 = vmul.f32 %v2620, %v2572
        %v2623 = vadd.f32 %v2599, %v2621
        %v2624 = vadd.f32 %v2600, %v2622
        %s2625 = sld [smem:[#allocation7 + $0x69]]
        %v2626 = vstv %s2625
        %v2627 = vmul.f32 %v2626, %v2571
        %v2628 = vmul.f32 %v2626, %v2572
        %v2629 = vadd.f32 %v2605, %v2627
        %v2630 = vadd.f32 %v2606, %v2628
        %s2631 = sld [smem:[#allocation7 + $0x8d]]
        %v2632 = vstv %s2631
        %v2633 = vmul.f32 %v2632, %v2571
        %v2634 = vmul.f32 %v2632, %v2572
        %v2635 = vadd.f32 %v2611, %v2633
        %v2636 = vadd.f32 %v2612, %v2634
        %s2637 = sld [smem:[#allocation7 + $0x22]]
        %v2638 = vstv %s2637
        %v2639 = vmul.f32 %v2638, %v2579
        %v2640 = vmul.f32 %v2638, %v2580
        %v2641 = vadd.f32 %v2617, %v2639
        %v2642 = vadd.f32 %v2618, %v2640
        %s2643 = sld [smem:[#allocation7 + $0x46]]
        %v2644 = vstv %s2643
        %v2645 = vmul.f32 %v2644, %v2579
        %v2646 = vmul.f32 %v2644, %v2580
        %v2647 = vadd.f32 %v2623, %v2645
        %v2648 = vadd.f32 %v2624, %v2646
        %s2649 = sld [smem:[#allocation7 + $0x6a]]
        %v2650 = vstv %s2649
        %v2651 = vmul.f32 %v2650, %v2579
        %v2652 = vmul.f32 %v2650, %v2580
        %v2653 = vadd.f32 %v2629, %v2651
        %v2654 = vadd.f32 %v2630, %v2652
        %s2655 = sld [smem:[#allocation7 + $0x8e]]
        %v2656 = vstv %s2655
        %v2657 = vmul.f32 %v2656, %v2579
        %v2658 = vmul.f32 %v2656, %v2580
        %v2659 = vadd.f32 %v2635, %v2657
        %v2660 = vadd.f32 %v2636, %v2658
        %s2661 = sld [smem:[#allocation7 + $0x23]]
        %v2662 = vstv %s2661
        %v2663 = vmul.f32 %v2662, %v2587
        %v2664 = vmul.f32 %v2662, %v2588
        %v2665 = vadd.f32 %v2641, %v2663
        %v2666 = vadd.f32 %v2642, %v2664
        %s2667 = sld [smem:[#allocation7 + $0x47]]
        %v2668 = vstv %s2667
        %v2669 = vmul.f32 %v2668, %v2587
        %v2670 = vmul.f32 %v2668, %v2588
        %v2671 = vadd.f32 %v2647, %v2669
        %v2672 = vadd.f32 %v2648, %v2670
        %s2673 = sld [smem:[#allocation7 + $0x6b]]
        %v2674 = vstv %s2673
        %v2675 = vmul.f32 %v2674, %v2587
        %v2676 = vmul.f32 %v2674, %v2588
        %v2677 = vadd.f32 %v2653, %v2675
        %v2678 = vadd.f32 %v2654, %v2676
        %s2679 = sld [smem:[#allocation7 + $0x8f]]
        %v2680 = vstv %s2679
        %v2681 = vmul.f32 %v2680, %v2587
        %v2682 = vmul.f32 %v2680, %v2588
        %v2683 = vadd.f32 %v2659, %v2681
        %v2684 = vadd.f32 %v2660, %v2682
        %v2685 = vadd.f32 %v2665, %v336
        %v2686 = vadd.f32 %v2666, %v337
        %v2687 = vmax.f32 %v2685, 0.0
        %v2688 = vmax.f32 %v2686, 0.0
        %2689 = vst [vmem:[%s331] sm:$0xff] %v2687
        %2690 = vst [vmem:[%s331 + $0x8] sm:$0xff] %v2688
        %v2691 = vadd.f32 %v2671, %v339
        %v2692 = vadd.f32 %v2672, %v340
        %v2693 = vmax.f32 %v2691, 0.0
        %v2694 = vmax.f32 %v2692, 0.0
        %s2695 = scalar_lea.vmem %s331, 16 [#allocation10]
        %2696 = vst [vmem:[%s2695] sm:$0xff] %v2693
        %2697 = vst [vmem:[%s2695 + $0x8] sm:$0xff] %v2694
        %v2698 = vadd.f32 %v2677, %v342
        %v2699 = vadd.f32 %v2678, %v343
        %v2700 = vmax.f32 %v2698, 0.0
        %v2701 = vmax.f32 %v2699, 0.0
        %s2702 = scalar_lea.vmem %s331, 32 [#allocation10]
        %2703 = vst [vmem:[%s2702] sm:$0xff] %v2700
        %2704 = vst [vmem:[%s2702 + $0x8] sm:$0xff] %v2701
        %v2705 = vadd.f32 %v2683, %v345
        %v2706 = vadd.f32 %v2684, %v346
        %v2707 = vmax.f32 %v2705, 0.0
        %v2708 = vmax.f32 %v2706, 0.0
        %s2709 = scalar_lea.vmem %s331, 48 [#allocation10]
        %2710 = vst [vmem:[%s2709] sm:$0xff] %v2707
        %2711 = vst [vmem:[%s2709 + $0x8] sm:$0xff] %v2708
        %s2712 = sand.u32 %s159, 1
        %s2713 = sand.u32 %s159, 1
        %s2714 = smul.addr %s2713, 64
        %s2715 = scalar_lea.vmem [#allocation10], %s2714
        // Predicated region
        $region84: #{basic_block_forward.1} parent=62 // pred_check
          %p2716 = pneg %p169
        $region85: #{basic_block_forward.1} parent=62 // pred_check_branch
          %2718 = sbr.rel (%p2716) target = $region87
        $region86: #{basic_block_forward.1} parent=62 // pred_region
          %s2719 = smul.addr %s20, 2
          %s2720 = smul.addr %s2719, 8
          %s2721 = scalar_lea.vmem %s6, %s2720
          // Predicated region
          $region88: #{basic_block_forward.1} parent=86 // pred_check
            _
          $region89: #{basic_block_forward.1} parent=86 // pred_check_branch
            %2723 = sbr.rel (0) target = $region91
          $region90: #{basic_block_forward.1} parent=86 // pred_region
            // Predicated region
            $region92: #{basic_block_forward.1} parent=90 // pred_check
              _
            $region93: #{basic_block_forward.1} parent=90 // pred_check_branch
              %2725 = sbr.rel (0) target = $region95
            $region94: #{basic_block_forward.1} parent=90 // pred_region
              loop: start=0, step=1, limit=1
              $region96: #{basic_block_forward.1} parent=94 // loop_pre_header
                _
              $region97: #{basic_block_forward.1} parent=94 // loop_header
                %s2727 = sphi 0, %s2731
                %p2728 = scmp.ge.s32.totalorder %s2727, 1
                %s2732 = sphi %s2715, %s2715
                %s2733 = sphi %s2721, %s2721
              $region98: #{basic_block_forward.1} parent=94 // loop_header_branch
                %2730 = sbr.rel (%p2728) target = $region102
              $region99: #{basic_block_forward.1} parent=94 // loop_body
                %v2734 = vld [vmem:[%s2732] sm:$0xff]
                %2735 = vst [vmem:[%s2733] sm:$0xff] %v2734
                %v2736 = vld [vmem:[%s2732 + $0x8] sm:$0xff]
                %2737 = vst [vmem:[%s2733 + $0x8] sm:$0xff] %v2736
                %v2738 = vld [vmem:[%s2732 + $0x10] sm:$0xff]
                %2739 = vst [vmem:[%s2733 + $0x20] sm:$0xff] %v2738
                %v2740 = vld [vmem:[%s2732 + $0x18] sm:$0xff]
                %2741 = vst [vmem:[%s2733 + $0x28] sm:$0xff] %v2740
                %v2742 = vld [vmem:[%s2732 + $0x20] sm:$0xff]
                %2743 = vst [vmem:[%s2733 + $0x40] sm:$0xff] %v2742
                %v2744 = vld [vmem:[%s2732 + $0x28] sm:$0xff]
                %2745 = vst [vmem:[%s2733 + $0x48] sm:$0xff] %v2744
                %v2746 = vld [vmem:[%s2732 + $0x30] sm:$0xff]
                %2747 = vst [vmem:[%s2733 + $0x60] sm:$0xff] %v2746
                %v2748 = vld [vmem:[%s2732 + $0x38] sm:$0xff]
                %2749 = vst [vmem:[%s2733 + $0x68] sm:$0xff] %v2748
              $region100: #{basic_block_forward.1} parent=94 // loop_footer
                %s2731 = sadd.s32 1, %s2727
              $region101: #{basic_block_forward.1} parent=94 // loop_footer_branch
                %2726 = sbr.rel target = $region97
              $region102: #{basic_block_forward.1} parent=94 // loop_exit
                _
            $region95: #{basic_block_forward.1} parent=90 // pred_fallthru
              _
            // Predicated region
            $region103: #{basic_block_forward.1} parent=90 // pred_check
              _
            $region104: #{basic_block_forward.1} parent=90 // pred_check_branch
              %2751 = sbr.rel target = $region106
            $region105: #{basic_block_forward.1} parent=90 // pred_region
              _
            $region106: #{basic_block_forward.1} parent=90 // pred_fallthru
              _
          $region91: #{basic_block_forward.1} parent=86 // pred_fallthru
            _
          %2752 = vnop
        $region87: #{basic_block_forward.1} parent=62 // pred_fallthru
          _
      $region63: #{basic_block_forward.1} parent=5 // pred_fallthru
        _
      %p2753 = scmp.le.s32.totalorder 2, %s15
      // Predicated region
      $region107: #{basic_block_forward.1} parent=5 // pred_check
        %p2754 = pneg %p2753
      $region108: #{basic_block_forward.1} parent=5 // pred_check_branch
        %2756 = sbr.rel (%p2754) target = $region110
      $region109: #{basic_block_forward.1} parent=5 // pred_region
        %s2757 = ssub.s32 %s15, 2
        // Predicated region
        $region111: #{basic_block_forward.1} parent=109 // pred_check
          %p2758 = pneg %p175
        $region112: #{basic_block_forward.1} parent=109 // pred_check_branch
          %2760 = sbr.rel (%p2758) target = $region114
        $region113: #{basic_block_forward.1} parent=109 // pred_region
          %s2761 = sand.u32 %s160, 1
          %s2762 = sand.u32 %s160, 1
          %s2763 = smul.addr %s2762, 64
          %s2764 = scalar_lea.vmem [#allocation10], %s2763
        $region114: #{basic_block_forward.1} parent=109 // pred_fallthru
          _
      $region110: #{basic_block_forward.1} parent=5 // pred_fallthru
        _
    $region6: #{basic_block_forward.1} parent=1 // loop_footer
      %s19 = sadd.s32 1, %s15
    $region7: #{basic_block_forward.1} parent=1 // loop_footer_branch
      %14 = sbr.rel target = $region3
    $region8: #{basic_block_forward.1} parent=1 // loop_exit
      _
    %2765 = vsyncpa [#allocation4], 1
    %s2766 = scalar_lea.sflag [#allocation4], 1
    %2767 = vsyncpa %s2766, 1
    %2768 = vsyncpa [#allocation6], 1
    %2769 = vsyncpa [#allocation9], 1

</llo_original>
